<compile_context>
chip_gen: v5e
topology: v5e:2x2
jax: 0.10.0
libtpu: 0.0.40
codegen_flags: <defaults>
</compile_context>

<pallas_src>
import functools

import jax
import jax.numpy as jnp
from jax.experimental import pallas as pl
from jax.experimental.pallas import tpu as pltpu

K = 5        # all three convs: 5x5 kernel, stride 1, no padding ("valid")
PAD = K - 1  # lane tail so every static im2col slice stays in-bounds


def _conv_layer(src_ref, w_ref, b_ref, p_ref, Ho, W):
    """One valid KxK conv as a single deep MXU matmul (channel-major).

    src_ref : (Cin, >= (Ho+K-1)*W + K-1) bf16 ref; spatial flattened with row
              stride W (only the first W_valid lanes of each row are real).
    w_ref   : (Cout, K*K*Cin) bf16 ref; column order (kh, kw, cin).
    b_ref   : (Cout, 1) f32 ref.
    p_ref   : (K*K*Cin, Ho*W) bf16 VMEM scratch (transposed patch matrix).
    Returns (Cout, Ho*W) f32 = W @ P^T + b.  Columns whose ow >= W_valid hold
    garbage; they never feed valid columns downstream.
    """
    Cin = src_ref.shape[0]
    M = Ho * W
    for kh in range(K):
        for kw in range(K):
            r0 = (kh * K + kw) * Cin
            off = kh * W + kw
            # Pure lane-offset slice of the flat activation -> contiguous,
            # sublane-aligned block store into the patch matrix (no relayout).
            p_ref[r0:r0 + Cin, :] = src_ref[:, off:off + M]
    # Single deep matmul: lane (N) dim = Ho*W output pixels, f32 accumulation.
    y = jnp.dot(w_ref[...], p_ref[...], preferred_element_type=jnp.float32)
    return y + b_ref[...]


def _model_kernel(x_ref, w1_ref, b1_ref, w2_ref, b2_ref, w3_ref, b3_ref,
                  o_ref, p1_ref, a1_ref, p2_ref, a2_ref, p3_ref,
                  *, W, H1, H2, H3):
    # conv1 -> ReLU -> a1 (bf16, row stride W, valid width W-4)
    y1 = _conv_layer(x_ref, w1_ref, b1_ref, p1_ref, H1, W)
    a1_ref[:, :H1 * W] = jnp.maximum(y1, 0.0).astype(a1_ref.dtype)
    a1_ref[:, H1 * W:] = jnp.zeros(
        (a1_ref.shape[0], a1_ref.shape[1] - H1 * W), a1_ref.dtype)

    # conv2 -> ReLU -> a2
    y2 = _conv_layer(a1_ref, w2_ref, b2_ref, p2_ref, H2, W)
    a2_ref[:, :H2 * W] = jnp.maximum(y2, 0.0).astype(a2_ref.dtype)
    a2_ref[:, H2 * W:] = jnp.zeros(
        (a2_ref.shape[0], a2_ref.shape[1] - H2 * W), a2_ref.dtype)

    # conv3 -> sigmoid (f32 epilogue); wrapper discards the garbage columns.
    y3 = _conv_layer(a2_ref, w3_ref, b3_ref, p3_ref, H3, W)
    o_ref[...] = jax.nn.sigmoid(y3)


def model_forward(x_nchw, params):
    """Forward pass matching the PyTorch module. x_nchw: (N, 64, H, W) f32."""
    w1, b1, w2, b2, w3, b3 = params      # HWIO weights, (Cout,) biases
    N, C0, H, W = x_nchw.shape
    C1, C2, C3 = w1.shape[-1], w2.shape[-1], w3.shape[-1]
    H1, W1 = H - K + 1, W - K + 1
    H2, W2 = H1 - K + 1, W1 - K + 1
    H3, W3 = H2 - K + 1, W2 - K + 1
    HWp = H * W + PAD

    # bf16 input, spatial flattened with row stride W, +PAD tail lanes so the
    # last static im2col slice of conv1 stays in bounds.
    x_flat = jnp.pad(x_nchw.astype(jnp.bfloat16).reshape(N, C0, H * W),
                     ((0, 0), (0, 0), (0, PAD)))

    # Trace-time weight prep: HWIO -> (Cout, K*K*Cin) bf16, column order
    # (kh, kw, cin).  (PyTorch OIHW weights: permute (2,3,1,0) to HWIO first.)
    def prep_w(w):
        cout = w.shape[-1]
        return jnp.transpose(w, (3, 0, 1, 2)).reshape(cout, -1).astype(jnp.bfloat16)

    w1m, w2m, w3m = prep_w(w1), prep_w(w2), prep_w(w3)
    b1c, b2c, b3c = (b.reshape(-1, 1) for b in (b1, b2, b3))

    flops = 2 * N * (H1 * W * K * K * C0 * C1
                     + H2 * W * K * K * C1 * C2
                     + H3 * W * K * K * C2 * C3)
    bytes_accessed = (x_flat.size * 2
                      + (w1m.size + w2m.size + w3m.size) * 2
                      + (b1.size + b2.size + b3.size) * 4
                      + N * C3 * H3 * W * 4)

    kernel = functools.partial(_model_kernel, W=W, H1=H1, H2=H2, H3=H3)

    out_flat = pl.pallas_call(
        kernel,
        out_shape=jax.ShapeDtypeStruct((N, C3, H3 * W), jnp.float32),
        grid_spec=pltpu.PrefetchScalarGridSpec(
            num_scalar_prefetch=0,
            grid=(N,),
            in_specs=[
                pl.BlockSpec((None, C0, HWp), lambda n: (n, 0, 0)),
                pl.BlockSpec((C1, K * K * C0), lambda n: (0, 0)),
                pl.BlockSpec((C1, 1), lambda n: (0, 0)),
                pl.BlockSpec((C2, K * K * C1), lambda n: (0, 0)),
                pl.BlockSpec((C2, 1), lambda n: (0, 0)),
                pl.BlockSpec((C3, K * K * C2), lambda n: (0, 0)),
                pl.BlockSpec((C3, 1), lambda n: (0, 0)),
            ],
            out_specs=pl.BlockSpec((None, C3, H3 * W), lambda n: (n, 0, 0)),
            scratch_shapes=[
                pltpu.VMEM((K * K * C0, H1 * W), jnp.bfloat16),   # patch 1
                pltpu.VMEM((C1, H1 * W + PAD), jnp.bfloat16),     # act 1
                pltpu.VMEM((K * K * C1, H2 * W), jnp.bfloat16),   # patch 2
                pltpu.VMEM((C2, H2 * W + PAD), jnp.bfloat16),     # act 2
                pltpu.VMEM((K * K * C2, H3 * W), jnp.bfloat16),   # patch 3
            ],
        ),
        compiler_params=pltpu.CompilerParams(
            dimension_semantics=("parallel",)),      # megacore on multi-TC
        cost_estimate=pl.CostEstimate(
            flops=flops,
            transcendentals=N * C3 * H3 * W,
            bytes_accessed=bytes_accessed),
    )(x_flat, w1m, b1c, w2m, b2c, w3m, b3c)

    # Drop the strip-mine garbage columns (ow >= W3); result is NCHW already.
    return out_flat.reshape(N, C3, H3, W)[:, :, :, :W3]


def init_params(key):
    """Deterministic PyTorch-style (kaiming-uniform-ish) init, HWIO layout."""
    def conv_init(k, cin, cout):
        k_w, k_b = jax.random.split(k)
        fan_in = cin * K * K
        bound = 1.0 / (fan_in ** 0.5)
        w = jax.random.uniform(k_w, (K, K, cin, cout), jnp.float32, -bound, bound)
        b = jax.random.uniform(k_b, (cout,), jnp.float32, -bound, bound)
        return w, b

    k1, k2, k3 = jax.random.split(key, 3)
    w1, b1 = conv_init(k1, 64, 32)
    w2, b2 = conv_init(k2, 32, 16)
    w3, b3 = conv_init(k3, 16, 16)
    return (w1, b1, w2, b2, w3, b3)


def ref_forward(x_nchw, params):
    """Pure-JAX f32 reference (lax conv) for correctness check."""
    w1, b1, w2, b2, w3, b3 = params
    dn = ("NHWC", "HWIO", "NHWC")
    y = jnp.transpose(x_nchw, (0, 2, 3, 1))
    y = jax.lax.conv_general_dilated(y, w1, (1, 1), "VALID",
                                     dimension_numbers=dn) + b1
    y = jnp.maximum(y, 0.0)
    y = jax.lax.conv_general_dilated(y, w2, (1, 1), "VALID",
                                     dimension_numbers=dn) + b2
    y = jnp.maximum(y, 0.0)
    y = jax.lax.conv_general_dilated(y, w3, (1, 1), "VALID",
                                     dimension_numbers=dn) + b3
    y = jax.nn.sigmoid(y)
    return jnp.transpose(y, (0, 3, 1, 2))


if __name__ == "__main__":
    key = jax.random.PRNGKey(0)
    k_x, k_p = jax.random.split(key)

    # Small shapes consistent with the module (spec uses NCHW (4, 64, 32, 32);
    # conv1 fixes channels=64): batch=2, channels=64, spatial=16.
    x = jax.random.normal(k_x, (2, 64, 16, 16), dtype=jnp.float32)
    params = init_params(k_p)

    out = jax.block_until_ready(jax.jit(model_forward)(x, params))
    ref = jax.block_until_ready(ref_forward(x, params))

    assert out.shape == (2, 16, 4, 4), out.shape
    # bf16 MXU operands vs f32 reference -> loosened tolerance.
    assert jnp.allclose(out, ref, rtol=2e-2, atol=2e-2), (
        "mismatch vs JAX reference: max abs err "
        f"{float(jnp.max(jnp.abs(out - ref)))}")

    print("KERNEL_OK")
</pallas_src>

<mosaic_0001>
module attributes {stable_mosaic.version = 11 : i64} {
  func.func @_model_kernel(%arg0: i32, %arg1: memref<1x64x260xbf16, #tpu.memory_space<vmem>>, %arg2: memref<32x1600xbf16, #tpu.memory_space<vmem>>, %arg3: memref<32x1xf32, #tpu.memory_space<vmem>>, %arg4: memref<16x800xbf16, #tpu.memory_space<vmem>>, %arg5: memref<16x1xf32, #tpu.memory_space<vmem>>, %arg6: memref<16x400xbf16, #tpu.memory_space<vmem>>, %arg7: memref<16x1xf32, #tpu.memory_space<vmem>>, %arg8: memref<1x16x64xf32, #tpu.memory_space<vmem>>, %arg9: memref<1600x192xbf16, #tpu.memory_space<vmem>>, %arg10: memref<32x196xbf16, #tpu.memory_space<vmem>>, %arg11: memref<800x128xbf16, #tpu.memory_space<vmem>>, %arg12: memref<16x132xbf16, #tpu.memory_space<vmem>>, %arg13: memref<400x64xbf16, #tpu.memory_space<vmem>>) attributes {dimension_semantics = [#tpu.dimension_semantics<parallel>], iteration_bounds = array<i64: 2>, scalar_prefetch = 0 : i64, scratch_operands = 5 : i64, tpu.core_type = #tpu.core_type<tc>, window_params = [{transform_indices = @transform_0, window_bounds = array<i64: 1, 64, 260>}, {pipeline_mode = #tpu.pipeline_mode<synchronous>, transform_indices = @transform_1, window_bounds = array<i64: 32, 1600>}, {pipeline_mode = #tpu.pipeline_mode<synchronous>, transform_indices = @transform_2, window_bounds = array<i64: 32, 1>}, {pipeline_mode = #tpu.pipeline_mode<synchronous>, transform_indices = @transform_3, window_bounds = array<i64: 16, 800>}, {pipeline_mode = #tpu.pipeline_mode<synchronous>, transform_indices = @transform_4, window_bounds = array<i64: 16, 1>}, {pipeline_mode = #tpu.pipeline_mode<synchronous>, transform_indices = @transform_5, window_bounds = array<i64: 16, 400>}, {pipeline_mode = #tpu.pipeline_mode<synchronous>, transform_indices = @transform_6, window_bounds = array<i64: 16, 1>}, {transform_indices = @transform_7, window_bounds = array<i64: 1, 16, 64>}]} {
    %c0 = arith.constant 0 : index
    %c0_0 = arith.constant 0 : index
    %c0_1 = arith.constant 0 : index
    %0 = vector.load %arg1[%c0, %c0_0, %c0_1] : memref<1x64x260xbf16, #tpu.memory_space<vmem>>, vector<1x64x192xbf16>
    %1 = vector.shape_cast %0 : vector<1x64x192xbf16> to vector<64x192xbf16>
    %c0_2 = arith.constant 0 : index
    %c0_3 = arith.constant 0 : index
    %2 = vector.load %arg9[%c0_2, %c0_3] : memref<1600x192xbf16, #tpu.memory_space<vmem>>, vector<64x192xbf16>
    tpu.vector_store %arg9[%c0_2, %c0_3], %1 {strides = array<i32>} : memref<1600x192xbf16, #tpu.memory_space<vmem>>, vector<64x192xbf16>,
    %c0_4 = arith.constant 0 : index
    %c0_5 = arith.constant 0 : index
    %c1 = arith.constant 1 : index
    %3 = vector.load %arg1[%c0_4, %c0_5, %c1] : memref<1x64x260xbf16, #tpu.memory_space<vmem>>, vector<1x64x192xbf16>
    %4 = vector.shape_cast %3 : vector<1x64x192xbf16> to vector<64x192xbf16>
    %c64 = arith.constant 64 : index
    %c0_6 = arith.constant 0 : index
    %5 = vector.load %arg9[%c64, %c0_6] : memref<1600x192xbf16, #tpu.memory_space<vmem>>, vector<64x192xbf16>
    tpu.vector_store %arg9[%c64, %c0_6], %4 {strides = array<i32>} : memref<1600x192xbf16, #tpu.memory_space<vmem>>, vector<64x192xbf16>,
    %c0_7 = arith.constant 0 : index
    %c0_8 = arith.constant 0 : index
    %c2 = arith.constant 2 : index
    %6 = vector.load %arg1[%c0_7, %c0_8, %c2] : memref<1x64x260xbf16, #tpu.memory_space<vmem>>, vector<1x64x192xbf16>
    %7 = vector.shape_cast %6 : vector<1x64x192xbf16> to vector<64x192xbf16>
    %c128 = arith.constant 128 : index
    %c0_9 = arith.constant 0 : index
    %8 = vector.load %arg9[%c128, %c0_9] : memref<1600x192xbf16, #tpu.memory_space<vmem>>, vector<64x192xbf16>
    tpu.vector_store %arg9[%c128, %c0_9], %7 {strides = array<i32>} : memref<1600x192xbf16, #tpu.memory_space<vmem>>, vector<64x192xbf16>,
    %c0_10 = arith.constant 0 : index
    %c0_11 = arith.constant 0 : index
    %c3 = arith.constant 3 : index
    %9 = vector.load %arg1[%c0_10, %c0_11, %c3] : memref<1x64x260xbf16, #tpu.memory_space<vmem>>, vector<1x64x192xbf16>
    %10 = vector.shape_cast %9 : vector<1x64x192xbf16> to vector<64x192xbf16>
    %c192 = arith.constant 192 : index
    %c0_12 = arith.constant 0 : index
    %11 = vector.load %arg9[%c192, %c0_12] : memref<1600x192xbf16, #tpu.memory_space<vmem>>, vector<64x192xbf16>
    tpu.vector_store %arg9[%c192, %c0_12], %10 {strides = array<i32>} : memref<1600x192xbf16, #tpu.memory_space<vmem>>, vector<64x192xbf16>,
    %c0_13 = arith.constant 0 : index
    %c0_14 = arith.constant 0 : index
    %c4 = arith.constant 4 : index
    %12 = vector.load %arg1[%c0_13, %c0_14, %c4] : memref<1x64x260xbf16, #tpu.memory_space<vmem>>, vector<1x64x192xbf16>
    %13 = vector.shape_cast %12 : vector<1x64x192xbf16> to vector<64x192xbf16>
    %c256 = arith.constant 256 : index
    %c0_15 = arith.constant 0 : index
    %14 = vector.load %arg9[%c256, %c0_15] : memref<1600x192xbf16, #tpu.memory_space<vmem>>, vector<64x192xbf16>
    tpu.vector_store %arg9[%c256, %c0_15], %13 {strides = array<i32>} : memref<1600x192xbf16, #tpu.memory_space<vmem>>, vector<64x192xbf16>,
    %c0_16 = arith.constant 0 : index
    %c0_17 = arith.constant 0 : index
    %c16 = arith.constant 16 : index
    %15 = vector.load %arg1[%c0_16, %c0_17, %c16] : memref<1x64x260xbf16, #tpu.memory_space<vmem>>, vector<1x64x192xbf16>
    %16 = vector.shape_cast %15 : vector<1x64x192xbf16> to vector<64x192xbf16>
    %c320 = arith.constant 320 : index
    %c0_18 = arith.constant 0 : index
    %17 = vector.load %arg9[%c320, %c0_18] : memref<1600x192xbf16, #tpu.memory_space<vmem>>, vector<64x192xbf16>
    tpu.vector_store %arg9[%c320, %c0_18], %16 {strides = array<i32>} : memref<1600x192xbf16, #tpu.memory_space<vmem>>, vector<64x192xbf16>,
    %c0_19 = arith.constant 0 : index
    %c0_20 = arith.constant 0 : index
    %c17 = arith.constant 17 : index
    %18 = vector.load %arg1[%c0_19, %c0_20, %c17] : memref<1x64x260xbf16, #tpu.memory_space<vmem>>, vector<1x64x192xbf16>
    %19 = vector.shape_cast %18 : vector<1x64x192xbf16> to vector<64x192xbf16>
    %c384 = arith.constant 384 : index
    %c0_21 = arith.constant 0 : index
    %20 = vector.load %arg9[%c384, %c0_21] : memref<1600x192xbf16, #tpu.memory_space<vmem>>, vector<64x192xbf16>
    tpu.vector_store %arg9[%c384, %c0_21], %19 {strides = array<i32>} : memref<1600x192xbf16, #tpu.memory_space<vmem>>, vector<64x192xbf16>,
    %c0_22 = arith.constant 0 : index
    %c0_23 = arith.constant 0 : index
    %c18 = arith.constant 18 : index
    %21 = vector.load %arg1[%c0_22, %c0_23, %c18] : memref<1x64x260xbf16, #tpu.memory_space<vmem>>, vector<1x64x192xbf16>
    %22 = vector.shape_cast %21 : vector<1x64x192xbf16> to vector<64x192xbf16>
    %c448 = arith.constant 448 : index
    %c0_24 = arith.constant 0 : index
    %23 = vector.load %arg9[%c448, %c0_24] : memref<1600x192xbf16, #tpu.memory_space<vmem>>, vector<64x192xbf16>
    tpu.vector_store %arg9[%c448, %c0_24], %22 {strides = array<i32>} : memref<1600x192xbf16, #tpu.memory_space<vmem>>, vector<64x192xbf16>,
    %c0_25 = arith.constant 0 : index
    %c0_26 = arith.constant 0 : index
    %c19 = arith.constant 19 : index
    %24 = vector.load %arg1[%c0_25, %c0_26, %c19] : memref<1x64x260xbf16, #tpu.memory_space<vmem>>, vector<1x64x192xbf16>
    %25 = vector.shape_cast %24 : vector<1x64x192xbf16> to vector<64x192xbf16>
    %c512 = arith.constant 512 : index
    %c0_27 = arith.constant 0 : index
    %26 = vector.load %arg9[%c512, %c0_27] : memref<1600x192xbf16, #tpu.memory_space<vmem>>, vector<64x192xbf16>
    tpu.vector_store %arg9[%c512, %c0_27], %25 {strides = array<i32>} : memref<1600x192xbf16, #tpu.memory_space<vmem>>, vector<64x192xbf16>,
    %c0_28 = arith.constant 0 : index
    %c0_29 = arith.constant 0 : index
    %c20 = arith.constant 20 : index
    %27 = vector.load %arg1[%c0_28, %c0_29, %c20] : memref<1x64x260xbf16, #tpu.memory_space<vmem>>, vector<1x64x192xbf16>
    %28 = vector.shape_cast %27 : vector<1x64x192xbf16> to vector<64x192xbf16>
    %c576 = arith.constant 576 : index
    %c0_30 = arith.constant 0 : index
    %29 = vector.load %arg9[%c576, %c0_30] : memref<1600x192xbf16, #tpu.memory_space<vmem>>, vector<64x192xbf16>
    tpu.vector_store %arg9[%c576, %c0_30], %28 {strides = array<i32>} : memref<1600x192xbf16, #tpu.memory_space<vmem>>, vector<64x192xbf16>,
    %c0_31 = arith.constant 0 : index
    %c0_32 = arith.constant 0 : index
    %c32 = arith.constant 32 : index
    %30 = vector.load %arg1[%c0_31, %c0_32, %c32] : memref<1x64x260xbf16, #tpu.memory_space<vmem>>, vector<1x64x192xbf16>
    %31 = vector.shape_cast %30 : vector<1x64x192xbf16> to vector<64x192xbf16>
    %c640 = arith.constant 640 : index
    %c0_33 = arith.constant 0 : index
    %32 = vector.load %arg9[%c640, %c0_33] : memref<1600x192xbf16, #tpu.memory_space<vmem>>, vector<64x192xbf16>
    tpu.vector_store %arg9[%c640, %c0_33], %31 {strides = array<i32>} : memref<1600x192xbf16, #tpu.memory_space<vmem>>, vector<64x192xbf16>,
    %c0_34 = arith.constant 0 : index
    %c0_35 = arith.constant 0 : index
    %c33 = arith.constant 33 : index
    %33 = vector.load %arg1[%c0_34, %c0_35, %c33] : memref<1x64x260xbf16, #tpu.memory_space<vmem>>, vector<1x64x192xbf16>
    %34 = vector.shape_cast %33 : vector<1x64x192xbf16> to vector<64x192xbf16>
    %c704 = arith.constant 704 : index
    %c0_36 = arith.constant 0 : index
    %35 = vector.load %arg9[%c704, %c0_36] : memref<1600x192xbf16, #tpu.memory_space<vmem>>, vector<64x192xbf16>
    tpu.vector_store %arg9[%c704, %c0_36], %34 {strides = array<i32>} : memref<1600x192xbf16, #tpu.memory_space<vmem>>, vector<64x192xbf16>,
    %c0_37 = arith.constant 0 : index
    %c0_38 = arith.constant 0 : index
    %c34 = arith.constant 34 : index
    %36 = vector.load %arg1[%c0_37, %c0_38, %c34] : memref<1x64x260xbf16, #tpu.memory_space<vmem>>, vector<1x64x192xbf16>
    %37 = vector.shape_cast %36 : vector<1x64x192xbf16> to vector<64x192xbf16>
    %c768 = arith.constant 768 : index
    %c0_39 = arith.constant 0 : index
    %38 = vector.load %arg9[%c768, %c0_39] : memref<1600x192xbf16, #tpu.memory_space<vmem>>, vector<64x192xbf16>
    tpu.vector_store %arg9[%c768, %c0_39], %37 {strides = array<i32>} : memref<1600x192xbf16, #tpu.memory_space<vmem>>, vector<64x192xbf16>,
    %c0_40 = arith.constant 0 : index
    %c0_41 = arith.constant 0 : index
    %c35 = arith.constant 35 : index
    %39 = vector.load %arg1[%c0_40, %c0_41, %c35] : memref<1x64x260xbf16, #tpu.memory_space<vmem>>, vector<1x64x192xbf16>
    %40 = vector.shape_cast %39 : vector<1x64x192xbf16> to vector<64x192xbf16>
    %c832 = arith.constant 832 : index
    %c0_42 = arith.constant 0 : index
    %41 = vector.load %arg9[%c832, %c0_42] : memref<1600x192xbf16, #tpu.memory_space<vmem>>, vector<64x192xbf16>
    tpu.vector_store %arg9[%c832, %c0_42], %40 {strides = array<i32>} : memref<1600x192xbf16, #tpu.memory_space<vmem>>, vector<64x192xbf16>,
    %c0_43 = arith.constant 0 : index
    %c0_44 = arith.constant 0 : index
    %c36 = arith.constant 36 : index
    %42 = vector.load %arg1[%c0_43, %c0_44, %c36] : memref<1x64x260xbf16, #tpu.memory_space<vmem>>, vector<1x64x192xbf16>
    %43 = vector.shape_cast %42 : vector<1x64x192xbf16> to vector<64x192xbf16>
    %c896 = arith.constant 896 : index
    %c0_45 = arith.constant 0 : index
    %44 = vector.load %arg9[%c896, %c0_45] : memref<1600x192xbf16, #tpu.memory_space<vmem>>, vector<64x192xbf16>
    tpu.vector_store %arg9[%c896, %c0_45], %43 {strides = array<i32>} : memref<1600x192xbf16, #tpu.memory_space<vmem>>, vector<64x192xbf16>,
    %c0_46 = arith.constant 0 : index
    %c0_47 = arith.constant 0 : index
    %c48 = arith.constant 48 : index
    %45 = vector.load %arg1[%c0_46, %c0_47, %c48] : memref<1x64x260xbf16, #tpu.memory_space<vmem>>, vector<1x64x192xbf16>
    %46 = vector.shape_cast %45 : vector<1x64x192xbf16> to vector<64x192xbf16>
    %c960 = arith.constant 960 : index
    %c0_48 = arith.constant 0 : index
    %47 = vector.load %arg9[%c960, %c0_48] : memref<1600x192xbf16, #tpu.memory_space<vmem>>, vector<64x192xbf16>
    tpu.vector_store %arg9[%c960, %c0_48], %46 {strides = array<i32>} : memref<1600x192xbf16, #tpu.memory_space<vmem>>, vector<64x192xbf16>,
    %c0_49 = arith.constant 0 : index
    %c0_50 = arith.constant 0 : index
    %c49 = arith.constant 49 : index
    %48 = vector.load %arg1[%c0_49, %c0_50, %c49] : memref<1x64x260xbf16, #tpu.memory_space<vmem>>, vector<1x64x192xbf16>
    %49 = vector.shape_cast %48 : vector<1x64x192xbf16> to vector<64x192xbf16>
    %c1024 = arith.constant 1024 : index
    %c0_51 = arith.constant 0 : index
    %50 = vector.load %arg9[%c1024, %c0_51] : memref<1600x192xbf16, #tpu.memory_space<vmem>>, vector<64x192xbf16>
    tpu.vector_store %arg9[%c1024, %c0_51], %49 {strides = array<i32>} : memref<1600x192xbf16, #tpu.memory_space<vmem>>, vector<64x192xbf16>,
    %c0_52 = arith.constant 0 : index
    %c0_53 = arith.constant 0 : index
    %c50 = arith.constant 50 : index
    %51 = vector.load %arg1[%c0_52, %c0_53, %c50] : memref<1x64x260xbf16, #tpu.memory_space<vmem>>, vector<1x64x192xbf16>
    %52 = vector.shape_cast %51 : vector<1x64x192xbf16> to vector<64x192xbf16>
    %c1088 = arith.constant 1088 : index
    %c0_54 = arith.constant 0 : index
    %53 = vector.load %arg9[%c1088, %c0_54] : memref<1600x192xbf16, #tpu.memory_space<vmem>>, vector<64x192xbf16>
    tpu.vector_store %arg9[%c1088, %c0_54], %52 {strides = array<i32>} : memref<1600x192xbf16, #tpu.memory_space<vmem>>, vector<64x192xbf16>,
    %c0_55 = arith.constant 0 : index
    %c0_56 = arith.constant 0 : index
    %c51 = arith.constant 51 : index
    %54 = vector.load %arg1[%c0_55, %c0_56, %c51] : memref<1x64x260xbf16, #tpu.memory_space<vmem>>, vector<1x64x192xbf16>
    %55 = vector.shape_cast %54 : vector<1x64x192xbf16> to vector<64x192xbf16>
    %c1152 = arith.constant 1152 : index
    %c0_57 = arith.constant 0 : index
    %56 = vector.load %arg9[%c1152, %c0_57] : memref<1600x192xbf16, #tpu.memory_space<vmem>>, vector<64x192xbf16>
    tpu.vector_store %arg9[%c1152, %c0_57], %55 {strides = array<i32>} : memref<1600x192xbf16, #tpu.memory_space<vmem>>, vector<64x192xbf16>,
    %c0_58 = arith.constant 0 : index
    %c0_59 = arith.constant 0 : index
    %c52 = arith.constant 52 : index
    %57 = vector.load %arg1[%c0_58, %c0_59, %c52] : memref<1x64x260xbf16, #tpu.memory_space<vmem>>, vector<1x64x192xbf16>
    %58 = vector.shape_cast %57 : vector<1x64x192xbf16> to vector<64x192xbf16>
    %c1216 = arith.constant 1216 : index
    %c0_60 = arith.constant 0 : index
    %59 = vector.load %arg9[%c1216, %c0_60] : memref<1600x192xbf16, #tpu.memory_space<vmem>>, vector<64x192xbf16>
    tpu.vector_store %arg9[%c1216, %c0_60], %58 {strides = array<i32>} : memref<1600x192xbf16, #tpu.memory_space<vmem>>, vector<64x192xbf16>,
    %c0_61 = arith.constant 0 : index
    %c0_62 = arith.constant 0 : index
    %c64_63 = arith.constant 64 : index
    %60 = vector.load %arg1[%c0_61, %c0_62, %c64_63] : memref<1x64x260xbf16, #tpu.memory_space<vmem>>, vector<1x64x192xbf16>
    %61 = vector.shape_cast %60 : vector<1x64x192xbf16> to vector<64x192xbf16>
    %c1280 = arith.constant 1280 : index
    %c0_64 = arith.constant 0 : index
    %62 = vector.load %arg9[%c1280, %c0_64] : memref<1600x192xbf16, #tpu.memory_space<vmem>>, vector<64x192xbf16>
    tpu.vector_store %arg9[%c1280, %c0_64], %61 {strides = array<i32>} : memref<1600x192xbf16, #tpu.memory_space<vmem>>, vector<64x192xbf16>,
    %c0_65 = arith.constant 0 : index
    %c0_66 = arith.constant 0 : index
    %c65 = arith.constant 65 : index
    %63 = vector.load %arg1[%c0_65, %c0_66, %c65] : memref<1x64x260xbf16, #tpu.memory_space<vmem>>, vector<1x64x192xbf16>
    %64 = vector.shape_cast %63 : vector<1x64x192xbf16> to vector<64x192xbf16>
    %c1344 = arith.constant 1344 : index
    %c0_67 = arith.constant 0 : index
    %65 = vector.load %arg9[%c1344, %c0_67] : memref<1600x192xbf16, #tpu.memory_space<vmem>>, vector<64x192xbf16>
    tpu.vector_store %arg9[%c1344, %c0_67], %64 {strides = array<i32>} : memref<1600x192xbf16, #tpu.memory_space<vmem>>, vector<64x192xbf16>,
    %c0_68 = arith.constant 0 : index
    %c0_69 = arith.constant 0 : index
    %c66 = arith.constant 66 : index
    %66 = vector.load %arg1[%c0_68, %c0_69, %c66] : memref<1x64x260xbf16, #tpu.memory_space<vmem>>, vector<1x64x192xbf16>
    %67 = vector.shape_cast %66 : vector<1x64x192xbf16> to vector<64x192xbf16>
    %c1408 = arith.constant 1408 : index
    %c0_70 = arith.constant 0 : index
    %68 = vector.load %arg9[%c1408, %c0_70] : memref<1600x192xbf16, #tpu.memory_space<vmem>>, vector<64x192xbf16>
    tpu.vector_store %arg9[%c1408, %c0_70], %67 {strides = array<i32>} : memref<1600x192xbf16, #tpu.memory_space<vmem>>, vector<64x192xbf16>,
    %c0_71 = arith.constant 0 : index
    %c0_72 = arith.constant 0 : index
    %c67 = arith.constant 67 : index
    %69 = vector.load %arg1[%c0_71, %c0_72, %c67] : memref<1x64x260xbf16, #tpu.memory_space<vmem>>, vector<1x64x192xbf16>
    %70 = vector.shape_cast %69 : vector<1x64x192xbf16> to vector<64x192xbf16>
    %c1472 = arith.constant 1472 : index
    %c0_73 = arith.constant 0 : index
    %71 = vector.load %arg9[%c1472, %c0_73] : memref<1600x192xbf16, #tpu.memory_space<vmem>>, vector<64x192xbf16>
    tpu.vector_store %arg9[%c1472, %c0_73], %70 {strides = array<i32>} : memref<1600x192xbf16, #tpu.memory_space<vmem>>, vector<64x192xbf16>,
    %c0_74 = arith.constant 0 : index
    %c0_75 = arith.constant 0 : index
    %c68 = arith.constant 68 : index
    %72 = vector.load %arg1[%c0_74, %c0_75, %c68] : memref<1x64x260xbf16, #tpu.memory_space<vmem>>, vector<1x64x192xbf16>
    %73 = vector.shape_cast %72 : vector<1x64x192xbf16> to vector<64x192xbf16>
    %c1536 = arith.constant 1536 : index
    %c0_76 = arith.constant 0 : index
    %74 = vector.load %arg9[%c1536, %c0_76] : memref<1600x192xbf16, #tpu.memory_space<vmem>>, vector<64x192xbf16>
    tpu.vector_store %arg9[%c1536, %c0_76], %73 {strides = array<i32>} : memref<1600x192xbf16, #tpu.memory_space<vmem>>, vector<64x192xbf16>,
    %c0_77 = arith.constant 0 : index
    %c0_78 = arith.constant 0 : index
    %75 = vector.load %arg2[%c0_77, %c0_78] : memref<32x1600xbf16, #tpu.memory_space<vmem>>, vector<32x1600xbf16>
    %c0_79 = arith.constant 0 : index
    %c0_80 = arith.constant 0 : index
    %76 = vector.load %arg9[%c0_79, %c0_80] : memref<1600x192xbf16, #tpu.memory_space<vmem>>, vector<1600x192xbf16>
    %cst = arith.constant dense<0.000000e+00> : vector<32x192xf32>
    %77 = tpu.matmul %75, %76, %cst {dimension_numbers = #tpu.dot_dimension_numbers<[1], [0], [0], [1], [0, 0, 1, 1], [], []>} : vector<32x1600xbf16>, vector<1600x192xbf16>, vector<32x192xf32> -> vector<32x192xf32>
    %c0_81 = arith.constant 0 : index
    %c0_82 = arith.constant 0 : index
    %78 = vector.load %arg3[%c0_81, %c0_82] : memref<32x1xf32, #tpu.memory_space<vmem>>, vector<32x1xf32>
    %79 = vector.broadcast %78 : vector<32x1xf32> to vector<32x192xf32>
    %80 = arith.addf %77, %79 : vector<32x192xf32>
    %cst_83 = arith.constant 0.000000e+00 : f32
    %81 = vector.broadcast %cst_83 : f32 to vector<32x192xf32>
    %82 = arith.maximumf %80, %81 : vector<32x192xf32>
    %83 = arith.truncf %82 : vector<32x192xf32> to vector<32x192xbf16>
    %c0_84 = arith.constant 0 : index
    %c0_85 = arith.constant 0 : index
    %84 = vector.load %arg10[%c0_84, %c0_85] : memref<32x196xbf16, #tpu.memory_space<vmem>>, vector<32x192xbf16>
    tpu.vector_store %arg10[%c0_84, %c0_85], %83 {strides = array<i32>} : memref<32x196xbf16, #tpu.memory_space<vmem>>, vector<32x192xbf16>,
    %cst_86 = arith.constant 0.000000e+00 : bf16
    %85 = vector.broadcast %cst_86 : bf16 to vector<32x4xbf16>
    %c0_87 = arith.constant 0 : index
    %c192_88 = arith.constant 192 : index
    %86 = vector.load %arg10[%c0_87, %c192_88] : memref<32x196xbf16, #tpu.memory_space<vmem>>, vector<32x4xbf16>
    tpu.vector_store %arg10[%c0_87, %c192_88], %85 {strides = array<i32>} : memref<32x196xbf16, #tpu.memory_space<vmem>>, vector<32x4xbf16>,
    %c0_89 = arith.constant 0 : index
    %c0_90 = arith.constant 0 : index
    %87 = vector.load %arg10[%c0_89, %c0_90] : memref<32x196xbf16, #tpu.memory_space<vmem>>, vector<32x128xbf16>
    %c0_91 = arith.constant 0 : index
    %c0_92 = arith.constant 0 : index
    %88 = vector.load %arg11[%c0_91, %c0_92] : memref<800x128xbf16, #tpu.memory_space<vmem>>, vector<32x128xbf16>
    tpu.vector_store %arg11[%c0_91, %c0_92], %87 {strides = array<i32>} : memref<800x128xbf16, #tpu.memory_space<vmem>>, vector<32x128xbf16>,
    %c0_93 = arith.constant 0 : index
    %c1_94 = arith.constant 1 : index
    %89 = vector.load %arg10[%c0_93, %c1_94] : memref<32x196xbf16, #tpu.memory_space<vmem>>, vector<32x128xbf16>
    %c32_95 = arith.constant 32 : index
    %c0_96 = arith.constant 0 : index
    %90 = vector.load %arg11[%c32_95, %c0_96] : memref<800x128xbf16, #tpu.memory_space<vmem>>, vector<32x128xbf16>
    tpu.vector_store %arg11[%c32_95, %c0_96], %89 {strides = array<i32>} : memref<800x128xbf16, #tpu.memory_space<vmem>>, vector<32x128xbf16>,
    %c0_97 = arith.constant 0 : index
    %c2_98 = arith.constant 2 : index
    %91 = vector.load %arg10[%c0_97, %c2_98] : memref<32x196xbf16, #tpu.memory_space<vmem>>, vector<32x128xbf16>
    %c64_99 = arith.constant 64 : index
    %c0_100 = arith.constant 0 : index
    %92 = vector.load %arg11[%c64_99, %c0_100] : memref<800x128xbf16, #tpu.memory_space<vmem>>, vector<32x128xbf16>
    tpu.vector_store %arg11[%c64_99, %c0_100], %91 {strides = array<i32>} : memref<800x128xbf16, #tpu.memory_space<vmem>>, vector<32x128xbf16>,
    %c0_101 = arith.constant 0 : index
    %c3_102 = arith.constant 3 : index
    %93 = vector.load %arg10[%c0_101, %c3_102] : memref<32x196xbf16, #tpu.memory_space<vmem>>, vector<32x128xbf16>
    %c96 = arith.constant 96 : index
    %c0_103 = arith.constant 0 : index
    %94 = vector.load %arg11[%c96, %c0_103] : memref<800x128xbf16, #tpu.memory_space<vmem>>, vector<32x128xbf16>
    tpu.vector_store %arg11[%c96, %c0_103], %93 {strides = array<i32>} : memref<800x128xbf16, #tpu.memory_space<vmem>>, vector<32x128xbf16>,
    %c0_104 = arith.constant 0 : index
    %c4_105 = arith.constant 4 : index
    %95 = vector.load %arg10[%c0_104, %c4_105] : memref<32x196xbf16, #tpu.memory_space<vmem>>, vector<32x128xbf16>
    %c128_106 = arith.constant 128 : index
    %c0_107 = arith.constant 0 : index
    %96 = vector.load %arg11[%c128_106, %c0_107] : memref<800x128xbf16, #tpu.memory_space<vmem>>, vector<32x128xbf16>
    tpu.vector_store %arg11[%c128_106, %c0_107], %95 {strides = array<i32>} : memref<800x128xbf16, #tpu.memory_space<vmem>>, vector<32x128xbf16>,
    %c0_108 = arith.constant 0 : index
    %c16_109 = arith.constant 16 : index
    %97 = vector.load %arg10[%c0_108, %c16_109] : memref<32x196xbf16, #tpu.memory_space<vmem>>, vector<32x128xbf16>
    %c160 = arith.constant 160 : index
    %c0_110 = arith.constant 0 : index
    %98 = vector.load %arg11[%c160, %c0_110] : memref<800x128xbf16, #tpu.memory_space<vmem>>, vector<32x128xbf16>
    tpu.vector_store %arg11[%c160, %c0_110], %97 {strides = array<i32>} : memref<800x128xbf16, #tpu.memory_space<vmem>>, vector<32x128xbf16>,
    %c0_111 = arith.constant 0 : index
    %c17_112 = arith.constant 17 : index
    %99 = vector.load %arg10[%c0_111, %c17_112] : memref<32x196xbf16, #tpu.memory_space<vmem>>, vector<32x128xbf16>
    %c192_113 = arith.constant 192 : index
    %c0_114 = arith.constant 0 : index
    %100 = vector.load %arg11[%c192_113, %c0_114] : memref<800x128xbf16, #tpu.memory_space<vmem>>, vector<32x128xbf16>
    tpu.vector_store %arg11[%c192_113, %c0_114], %99 {strides = array<i32>} : memref<800x128xbf16, #tpu.memory_space<vmem>>, vector<32x128xbf16>,
    %c0_115 = arith.constant 0 : index
    %c18_116 = arith.constant 18 : index
    %101 = vector.load %arg10[%c0_115, %c18_116] : memref<32x196xbf16, #tpu.memory_space<vmem>>, vector<32x128xbf16>
    %c224 = arith.constant 224 : index
    %c0_117 = arith.constant 0 : index
    %102 = vector.load %arg11[%c224, %c0_117] : memref<800x128xbf16, #tpu.memory_space<vmem>>, vector<32x128xbf16>
    tpu.vector_store %arg11[%c224, %c0_117], %101 {strides = array<i32>} : memref<800x128xbf16, #tpu.memory_space<vmem>>, vector<32x128xbf16>,
    %c0_118 = arith.constant 0 : index
    %c19_119 = arith.constant 19 : index
    %103 = vector.load %arg10[%c0_118, %c19_119] : memref<32x196xbf16, #tpu.memory_space<vmem>>, vector<32x128xbf16>
    %c256_120 = arith.constant 256 : index
    %c0_121 = arith.constant 0 : index
    %104 = vector.load %arg11[%c256_120, %c0_121] : memref<800x128xbf16, #tpu.memory_space<vmem>>, vector<32x128xbf16>
    tpu.vector_store %arg11[%c256_120, %c0_121], %103 {strides = array<i32>} : memref<800x128xbf16, #tpu.memory_space<vmem>>, vector<32x128xbf16>,
    %c0_122 = arith.constant 0 : index
    %c20_123 = arith.constant 20 : index
    %105 = vector.load %arg10[%c0_122, %c20_123] : memref<32x196xbf16, #tpu.memory_space<vmem>>, vector<32x128xbf16>
    %c288 = arith.constant 288 : index
    %c0_124 = arith.constant 0 : index
    %106 = vector.load %arg11[%c288, %c0_124] : memref<800x128xbf16, #tpu.memory_space<vmem>>, vector<32x128xbf16>
    tpu.vector_store %arg11[%c288, %c0_124], %105 {strides = array<i32>} : memref<800x128xbf16, #tpu.memory_space<vmem>>, vector<32x128xbf16>,
    %c0_125 = arith.constant 0 : index
    %c32_126 = arith.constant 32 : index
    %107 = vector.load %arg10[%c0_125, %c32_126] : memref<32x196xbf16, #tpu.memory_space<vmem>>, vector<32x128xbf16>
    %c320_127 = arith.constant 320 : index
    %c0_128 = arith.constant 0 : index
    %108 = vector.load %arg11[%c320_127, %c0_128] : memref<800x128xbf16, #tpu.memory_space<vmem>>, vector<32x128xbf16>
    tpu.vector_store %arg11[%c320_127, %c0_128], %107 {strides = array<i32>} : memref<800x128xbf16, #tpu.memory_space<vmem>>, vector<32x128xbf16>,
    %c0_129 = arith.constant 0 : index
    %c33_130 = arith.constant 33 : index
    %109 = vector.load %arg10[%c0_129, %c33_130] : memref<32x196xbf16, #tpu.memory_space<vmem>>, vector<32x128xbf16>
    %c352 = arith.constant 352 : index
    %c0_131 = arith.constant 0 : index
    %110 = vector.load %arg11[%c352, %c0_131] : memref<800x128xbf16, #tpu.memory_space<vmem>>, vector<32x128xbf16>
    tpu.vector_store %arg11[%c352, %c0_131], %109 {strides = array<i32>} : memref<800x128xbf16, #tpu.memory_space<vmem>>, vector<32x128xbf16>,
    %c0_132 = arith.constant 0 : index
    %c34_133 = arith.constant 34 : index
    %111 = vector.load %arg10[%c0_132, %c34_133] : memref<32x196xbf16, #tpu.memory_space<vmem>>, vector<32x128xbf16>
    %c384_134 = arith.constant 384 : index
    %c0_135 = arith.constant 0 : index
    %112 = vector.load %arg11[%c384_134, %c0_135] : memref<800x128xbf16, #tpu.memory_space<vmem>>, vector<32x128xbf16>
    tpu.vector_store %arg11[%c384_134, %c0_135], %111 {strides = array<i32>} : memref<800x128xbf16, #tpu.memory_space<vmem>>, vector<32x128xbf16>,
    %c0_136 = arith.constant 0 : index
    %c35_137 = arith.constant 35 : index
    %113 = vector.load %arg10[%c0_136, %c35_137] : memref<32x196xbf16, #tpu.memory_space<vmem>>, vector<32x128xbf16>
    %c416 = arith.constant 416 : index
    %c0_138 = arith.constant 0 : index
    %114 = vector.load %arg11[%c416, %c0_138] : memref<800x128xbf16, #tpu.memory_space<vmem>>, vector<32x128xbf16>
    tpu.vector_store %arg11[%c416, %c0_138], %113 {strides = array<i32>} : memref<800x128xbf16, #tpu.memory_space<vmem>>, vector<32x128xbf16>,
    %c0_139 = arith.constant 0 : index
    %c36_140 = arith.constant 36 : index
    %115 = vector.load %arg10[%c0_139, %c36_140] : memref<32x196xbf16, #tpu.memory_space<vmem>>, vector<32x128xbf16>
    %c448_141 = arith.constant 448 : index
    %c0_142 = arith.constant 0 : index
    %116 = vector.load %arg11[%c448_141, %c0_142] : memref<800x128xbf16, #tpu.memory_space<vmem>>, vector<32x128xbf16>
    tpu.vector_store %arg11[%c448_141, %c0_142], %115 {strides = array<i32>} : memref<800x128xbf16, #tpu.memory_space<vmem>>, vector<32x128xbf16>,
    %c0_143 = arith.constant 0 : index
    %c48_144 = arith.constant 48 : index
    %117 = vector.load %arg10[%c0_143, %c48_144] : memref<32x196xbf16, #tpu.memory_space<vmem>>, vector<32x128xbf16>
    %c480 = arith.constant 480 : index
    %c0_145 = arith.constant 0 : index
    %118 = vector.load %arg11[%c480, %c0_145] : memref<800x128xbf16, #tpu.memory_space<vmem>>, vector<32x128xbf16>
    tpu.vector_store %arg11[%c480, %c0_145], %117 {strides = array<i32>} : memref<800x128xbf16, #tpu.memory_space<vmem>>, vector<32x128xbf16>,
    %c0_146 = arith.constant 0 : index
    %c49_147 = arith.constant 49 : index
    %119 = vector.load %arg10[%c0_146, %c49_147] : memref<32x196xbf16, #tpu.memory_space<vmem>>, vector<32x128xbf16>
    %c512_148 = arith.constant 512 : index
    %c0_149 = arith.constant 0 : index
    %120 = vector.load %arg11[%c512_148, %c0_149] : memref<800x128xbf16, #tpu.memory_space<vmem>>, vector<32x128xbf16>
    tpu.vector_store %arg11[%c512_148, %c0_149], %119 {strides = array<i32>} : memref<800x128xbf16, #tpu.memory_space<vmem>>, vector<32x128xbf16>,
    %c0_150 = arith.constant 0 : index
    %c50_151 = arith.constant 50 : index
    %121 = vector.load %arg10[%c0_150, %c50_151] : memref<32x196xbf16, #tpu.memory_space<vmem>>, vector<32x128xbf16>
    %c544 = arith.constant 544 : index
    %c0_152 = arith.constant 0 : index
    %122 = vector.load %arg11[%c544, %c0_152] : memref<800x128xbf16, #tpu.memory_space<vmem>>, vector<32x128xbf16>
    tpu.vector_store %arg11[%c544, %c0_152], %121 {strides = array<i32>} : memref<800x128xbf16, #tpu.memory_space<vmem>>, vector<32x128xbf16>,
    %c0_153 = arith.constant 0 : index
    %c51_154 = arith.constant 51 : index
    %123 = vector.load %arg10[%c0_153, %c51_154] : memref<32x196xbf16, #tpu.memory_space<vmem>>, vector<32x128xbf16>
    %c576_155 = arith.constant 576 : index
    %c0_156 = arith.constant 0 : index
    %124 = vector.load %arg11[%c576_155, %c0_156] : memref<800x128xbf16, #tpu.memory_space<vmem>>, vector<32x128xbf16>
    tpu.vector_store %arg11[%c576_155, %c0_156], %123 {strides = array<i32>} : memref<800x128xbf16, #tpu.memory_space<vmem>>, vector<32x128xbf16>,
    %c0_157 = arith.constant 0 : index
    %c52_158 = arith.constant 52 : index
    %125 = vector.load %arg10[%c0_157, %c52_158] : memref<32x196xbf16, #tpu.memory_space<vmem>>, vector<32x128xbf16>
    %c608 = arith.constant 608 : index
    %c0_159 = arith.constant 0 : index
    %126 = vector.load %arg11[%c608, %c0_159] : memref<800x128xbf16, #tpu.memory_space<vmem>>, vector<32x128xbf16>
    tpu.vector_store %arg11[%c608, %c0_159], %125 {strides = array<i32>} : memref<800x128xbf16, #tpu.memory_space<vmem>>, vector<32x128xbf16>,
    %c0_160 = arith.constant 0 : index
    %c64_161 = arith.constant 64 : index
    %127 = vector.load %arg10[%c0_160, %c64_161] : memref<32x196xbf16, #tpu.memory_space<vmem>>, vector<32x128xbf16>
    %c640_162 = arith.constant 640 : index
    %c0_163 = arith.constant 0 : index
    %128 = vector.load %arg11[%c640_162, %c0_163] : memref<800x128xbf16, #tpu.memory_space<vmem>>, vector<32x128xbf16>
    tpu.vector_store %arg11[%c640_162, %c0_163], %127 {strides = array<i32>} : memref<800x128xbf16, #tpu.memory_space<vmem>>, vector<32x128xbf16>,
    %c0_164 = arith.constant 0 : index
    %c65_165 = arith.constant 65 : index
    %129 = vector.load %arg10[%c0_164, %c65_165] : memref<32x196xbf16, #tpu.memory_space<vmem>>, vector<32x128xbf16>
    %c672 = arith.constant 672 : index
    %c0_166 = arith.constant 0 : index
    %130 = vector.load %arg11[%c672, %c0_166] : memref<800x128xbf16, #tpu.memory_space<vmem>>, vector<32x128xbf16>
    tpu.vector_store %arg11[%c672, %c0_166], %129 {strides = array<i32>} : memref<800x128xbf16, #tpu.memory_space<vmem>>, vector<32x128xbf16>,
    %c0_167 = arith.constant 0 : index
    %c66_168 = arith.constant 66 : index
    %131 = vector.load %arg10[%c0_167, %c66_168] : memref<32x196xbf16, #tpu.memory_space<vmem>>, vector<32x128xbf16>
    %c704_169 = arith.constant 704 : index
    %c0_170 = arith.constant 0 : index
    %132 = vector.load %arg11[%c704_169, %c0_170] : memref<800x128xbf16, #tpu.memory_space<vmem>>, vector<32x128xbf16>
    tpu.vector_store %arg11[%c704_169, %c0_170], %131 {strides = array<i32>} : memref<800x128xbf16, #tpu.memory_space<vmem>>, vector<32x128xbf16>,
    %c0_171 = arith.constant 0 : index
    %c67_172 = arith.constant 67 : index
    %133 = vector.load %arg10[%c0_171, %c67_172] : memref<32x196xbf16, #tpu.memory_space<vmem>>, vector<32x128xbf16>
    %c736 = arith.constant 736 : index
    %c0_173 = arith.constant 0 : index
    %134 = vector.load %arg11[%c736, %c0_173] : memref<800x128xbf16, #tpu.memory_space<vmem>>, vector<32x128xbf16>
    tpu.vector_store %arg11[%c736, %c0_173], %133 {strides = array<i32>} : memref<800x128xbf16, #tpu.memory_space<vmem>>, vector<32x128xbf16>,
    %c0_174 = arith.constant 0 : index
    %c68_175 = arith.constant 68 : index
    %135 = vector.load %arg10[%c0_174, %c68_175] : memref<32x196xbf16, #tpu.memory_space<vmem>>, vector<32x128xbf16>
    %c768_176 = arith.constant 768 : index
    %c0_177 = arith.constant 0 : index
    %136 = vector.load %arg11[%c768_176, %c0_177] : memref<800x128xbf16, #tpu.memory_space<vmem>>, vector<32x128xbf16>
    tpu.vector_store %arg11[%c768_176, %c0_177], %135 {strides = array<i32>} : memref<800x128xbf16, #tpu.memory_space<vmem>>, vector<32x128xbf16>,
    %c0_178 = arith.constant 0 : index
    %c0_179 = arith.constant 0 : index
    %137 = vector.load %arg4[%c0_178, %c0_179] : memref<16x800xbf16, #tpu.memory_space<vmem>>, vector<16x800xbf16>
    %c0_180 = arith.constant 0 : index
    %c0_181 = arith.constant 0 : index
    %138 = vector.load %arg11[%c0_180, %c0_181] : memref<800x128xbf16, #tpu.memory_space<vmem>>, vector<800x128xbf16>
    %cst_182 = arith.constant dense<0.000000e+00> : vector<16x128xf32>
    %139 = tpu.matmul %137, %138, %cst_182 {dimension_numbers = #tpu.dot_dimension_numbers<[1], [0], [0], [1], [0, 0, 1, 1], [], []>} : vector<16x800xbf16>, vector<800x128xbf16>, vector<16x128xf32> -> vector<16x128xf32>
    %c0_183 = arith.constant 0 : index
    %c0_184 = arith.constant 0 : index
    %140 = vector.load %arg5[%c0_183, %c0_184] : memref<16x1xf32, #tpu.memory_space<vmem>>, vector<16x1xf32>
    %141 = vector.broadcast %140 : vector<16x1xf32> to vector<16x128xf32>
    %142 = arith.addf %139, %141 : vector<16x128xf32>
    %cst_185 = arith.constant 0.000000e+00 : f32
    %143 = vector.broadcast %cst_185 : f32 to vector<16x128xf32>
    %144 = arith.maximumf %142, %143 : vector<16x128xf32>
    %145 = arith.truncf %144 : vector<16x128xf32> to vector<16x128xbf16>
    %c0_186 = arith.constant 0 : index
    %c0_187 = arith.constant 0 : index
    %146 = vector.load %arg12[%c0_186, %c0_187] : memref<16x132xbf16, #tpu.memory_space<vmem>>, vector<16x128xbf16>
    tpu.vector_store %arg12[%c0_186, %c0_187], %145 {strides = array<i32>} : memref<16x132xbf16, #tpu.memory_space<vmem>>, vector<16x128xbf16>,
    %cst_188 = arith.constant 0.000000e+00 : bf16
    %147 = vector.broadcast %cst_188 : bf16 to vector<16x4xbf16>
    %c0_189 = arith.constant 0 : index
    %c128_190 = arith.constant 128 : index
    %148 = vector.load %arg12[%c0_189, %c128_190] : memref<16x132xbf16, #tpu.memory_space<vmem>>, vector<16x4xbf16>
    tpu.vector_store %arg12[%c0_189, %c128_190], %147 {strides = array<i32>} : memref<16x132xbf16, #tpu.memory_space<vmem>>, vector<16x4xbf16>,
    %c0_191 = arith.constant 0 : index
    %c0_192 = arith.constant 0 : index
    %149 = vector.load %arg12[%c0_191, %c0_192] : memref<16x132xbf16, #tpu.memory_space<vmem>>, vector<16x64xbf16>
    %c0_193 = arith.constant 0 : index
    %c0_194 = arith.constant 0 : index
    %150 = vector.load %arg13[%c0_193, %c0_194] : memref<400x64xbf16, #tpu.memory_space<vmem>>, vector<16x64xbf16>
    tpu.vector_store %arg13[%c0_193, %c0_194], %149 {strides = array<i32>} : memref<400x64xbf16, #tpu.memory_space<vmem>>, vector<16x64xbf16>,
    %c0_195 = arith.constant 0 : index
    %c1_196 = arith.constant 1 : index
    %151 = vector.load %arg12[%c0_195, %c1_196] : memref<16x132xbf16, #tpu.memory_space<vmem>>, vector<16x64xbf16>
    %c16_197 = arith.constant 16 : index
    %c0_198 = arith.constant 0 : index
    %152 = vector.load %arg13[%c16_197, %c0_198] : memref<400x64xbf16, #tpu.memory_space<vmem>>, vector<16x64xbf16>
    tpu.vector_store %arg13[%c16_197, %c0_198], %151 {strides = array<i32>} : memref<400x64xbf16, #tpu.memory_space<vmem>>, vector<16x64xbf16>,
    %c0_199 = arith.constant 0 : index
    %c2_200 = arith.constant 2 : index
    %153 = vector.load %arg12[%c0_199, %c2_200] : memref<16x132xbf16, #tpu.memory_space<vmem>>, vector<16x64xbf16>
    %c32_201 = arith.constant 32 : index
    %c0_202 = arith.constant 0 : index
    %154 = vector.load %arg13[%c32_201, %c0_202] : memref<400x64xbf16, #tpu.memory_space<vmem>>, vector<16x64xbf16>
    tpu.vector_store %arg13[%c32_201, %c0_202], %153 {strides = array<i32>} : memref<400x64xbf16, #tpu.memory_space<vmem>>, vector<16x64xbf16>,
    %c0_203 = arith.constant 0 : index
    %c3_204 = arith.constant 3 : index
    %155 = vector.load %arg12[%c0_203, %c3_204] : memref<16x132xbf16, #tpu.memory_space<vmem>>, vector<16x64xbf16>
    %c48_205 = arith.constant 48 : index
    %c0_206 = arith.constant 0 : index
    %156 = vector.load %arg13[%c48_205, %c0_206] : memref<400x64xbf16, #tpu.memory_space<vmem>>, vector<16x64xbf16>
    tpu.vector_store %arg13[%c48_205, %c0_206], %155 {strides = array<i32>} : memref<400x64xbf16, #tpu.memory_space<vmem>>, vector<16x64xbf16>,
    %c0_207 = arith.constant 0 : index
    %c4_208 = arith.constant 4 : index
    %157 = vector.load %arg12[%c0_207, %c4_208] : memref<16x132xbf16, #tpu.memory_space<vmem>>, vector<16x64xbf16>
    %c64_209 = arith.constant 64 : index
    %c0_210 = arith.constant 0 : index
    %158 = vector.load %arg13[%c64_209, %c0_210] : memref<400x64xbf16, #tpu.memory_space<vmem>>, vector<16x64xbf16>
    tpu.vector_store %arg13[%c64_209, %c0_210], %157 {strides = array<i32>} : memref<400x64xbf16, #tpu.memory_space<vmem>>, vector<16x64xbf16>,
    %c0_211 = arith.constant 0 : index
    %c16_212 = arith.constant 16 : index
    %159 = vector.load %arg12[%c0_211, %c16_212] : memref<16x132xbf16, #tpu.memory_space<vmem>>, vector<16x64xbf16>
    %c80 = arith.constant 80 : index
    %c0_213 = arith.constant 0 : index
    %160 = vector.load %arg13[%c80, %c0_213] : memref<400x64xbf16, #tpu.memory_space<vmem>>, vector<16x64xbf16>
    tpu.vector_store %arg13[%c80, %c0_213], %159 {strides = array<i32>} : memref<400x64xbf16, #tpu.memory_space<vmem>>, vector<16x64xbf16>,
    %c0_214 = arith.constant 0 : index
    %c17_215 = arith.constant 17 : index
    %161 = vector.load %arg12[%c0_214, %c17_215] : memref<16x132xbf16, #tpu.memory_space<vmem>>, vector<16x64xbf16>
    %c96_216 = arith.constant 96 : index
    %c0_217 = arith.constant 0 : index
    %162 = vector.load %arg13[%c96_216, %c0_217] : memref<400x64xbf16, #tpu.memory_space<vmem>>, vector<16x64xbf16>
    tpu.vector_store %arg13[%c96_216, %c0_217], %161 {strides = array<i32>} : memref<400x64xbf16, #tpu.memory_space<vmem>>, vector<16x64xbf16>,
    %c0_218 = arith.constant 0 : index
    %c18_219 = arith.constant 18 : index
    %163 = vector.load %arg12[%c0_218, %c18_219] : memref<16x132xbf16, #tpu.memory_space<vmem>>, vector<16x64xbf16>
    %c112 = arith.constant 112 : index
    %c0_220 = arith.constant 0 : index
    %164 = vector.load %arg13[%c112, %c0_220] : memref<400x64xbf16, #tpu.memory_space<vmem>>, vector<16x64xbf16>
    tpu.vector_store %arg13[%c112, %c0_220], %163 {strides = array<i32>} : memref<400x64xbf16, #tpu.memory_space<vmem>>, vector<16x64xbf16>,
    %c0_221 = arith.constant 0 : index
    %c19_222 = arith.constant 19 : index
    %165 = vector.load %arg12[%c0_221, %c19_222] : memref<16x132xbf16, #tpu.memory_space<vmem>>, vector<16x64xbf16>
    %c128_223 = arith.constant 128 : index
    %c0_224 = arith.constant 0 : index
    %166 = vector.load %arg13[%c128_223, %c0_224] : memref<400x64xbf16, #tpu.memory_space<vmem>>, vector<16x64xbf16>
    tpu.vector_store %arg13[%c128_223, %c0_224], %165 {strides = array<i32>} : memref<400x64xbf16, #tpu.memory_space<vmem>>, vector<16x64xbf16>,
    %c0_225 = arith.constant 0 : index
    %c20_226 = arith.constant 20 : index
    %167 = vector.load %arg12[%c0_225, %c20_226] : memref<16x132xbf16, #tpu.memory_space<vmem>>, vector<16x64xbf16>
    %c144 = arith.constant 144 : index
    %c0_227 = arith.constant 0 : index
    %168 = vector.load %arg13[%c144, %c0_227] : memref<400x64xbf16, #tpu.memory_space<vmem>>, vector<16x64xbf16>
    tpu.vector_store %arg13[%c144, %c0_227], %167 {strides = array<i32>} : memref<400x64xbf16, #tpu.memory_space<vmem>>, vector<16x64xbf16>,
    %c0_228 = arith.constant 0 : index
    %c32_229 = arith.constant 32 : index
    %169 = vector.load %arg12[%c0_228, %c32_229] : memref<16x132xbf16, #tpu.memory_space<vmem>>, vector<16x64xbf16>
    %c160_230 = arith.constant 160 : index
    %c0_231 = arith.constant 0 : index
    %170 = vector.load %arg13[%c160_230, %c0_231] : memref<400x64xbf16, #tpu.memory_space<vmem>>, vector<16x64xbf16>
    tpu.vector_store %arg13[%c160_230, %c0_231], %169 {strides = array<i32>} : memref<400x64xbf16, #tpu.memory_space<vmem>>, vector<16x64xbf16>,
    %c0_232 = arith.constant 0 : index
    %c33_233 = arith.constant 33 : index
    %171 = vector.load %arg12[%c0_232, %c33_233] : memref<16x132xbf16, #tpu.memory_space<vmem>>, vector<16x64xbf16>
    %c176 = arith.constant 176 : index
    %c0_234 = arith.constant 0 : index
    %172 = vector.load %arg13[%c176, %c0_234] : memref<400x64xbf16, #tpu.memory_space<vmem>>, vector<16x64xbf16>
    tpu.vector_store %arg13[%c176, %c0_234], %171 {strides = array<i32>} : memref<400x64xbf16, #tpu.memory_space<vmem>>, vector<16x64xbf16>,
    %c0_235 = arith.constant 0 : index
    %c34_236 = arith.constant 34 : index
    %173 = vector.load %arg12[%c0_235, %c34_236] : memref<16x132xbf16, #tpu.memory_space<vmem>>, vector<16x64xbf16>
    %c192_237 = arith.constant 192 : index
    %c0_238 = arith.constant 0 : index
    %174 = vector.load %arg13[%c192_237, %c0_238] : memref<400x64xbf16, #tpu.memory_space<vmem>>, vector<16x64xbf16>
    tpu.vector_store %arg13[%c192_237, %c0_238], %173 {strides = array<i32>} : memref<400x64xbf16, #tpu.memory_space<vmem>>, vector<16x64xbf16>,
    %c0_239 = arith.constant 0 : index
    %c35_240 = arith.constant 35 : index
    %175 = vector.load %arg12[%c0_239, %c35_240] : memref<16x132xbf16, #tpu.memory_space<vmem>>, vector<16x64xbf16>
    %c208 = arith.constant 208 : index
    %c0_241 = arith.constant 0 : index
    %176 = vector.load %arg13[%c208, %c0_241] : memref<400x64xbf16, #tpu.memory_space<vmem>>, vector<16x64xbf16>
    tpu.vector_store %arg13[%c208, %c0_241], %175 {strides = array<i32>} : memref<400x64xbf16, #tpu.memory_space<vmem>>, vector<16x64xbf16>,
    %c0_242 = arith.constant 0 : index
    %c36_243 = arith.constant 36 : index
    %177 = vector.load %arg12[%c0_242, %c36_243] : memref<16x132xbf16, #tpu.memory_space<vmem>>, vector<16x64xbf16>
    %c224_244 = arith.constant 224 : index
    %c0_245 = arith.constant 0 : index
    %178 = vector.load %arg13[%c224_244, %c0_245] : memref<400x64xbf16, #tpu.memory_space<vmem>>, vector<16x64xbf16>
    tpu.vector_store %arg13[%c224_244, %c0_245], %177 {strides = array<i32>} : memref<400x64xbf16, #tpu.memory_space<vmem>>, vector<16x64xbf16>,
    %c0_246 = arith.constant 0 : index
    %c48_247 = arith.constant 48 : index
    %179 = vector.load %arg12[%c0_246, %c48_247] : memref<16x132xbf16, #tpu.memory_space<vmem>>, vector<16x64xbf16>
    %c240 = arith.constant 240 : index
    %c0_248 = arith.constant 0 : index
    %180 = vector.load %arg13[%c240, %c0_248] : memref<400x64xbf16, #tpu.memory_space<vmem>>, vector<16x64xbf16>
    tpu.vector_store %arg13[%c240, %c0_248], %179 {strides = array<i32>} : memref<400x64xbf16, #tpu.memory_space<vmem>>, vector<16x64xbf16>,
    %c0_249 = arith.constant 0 : index
    %c49_250 = arith.constant 49 : index
    %181 = vector.load %arg12[%c0_249, %c49_250] : memref<16x132xbf16, #tpu.memory_space<vmem>>, vector<16x64xbf16>
    %c256_251 = arith.constant 256 : index
    %c0_252 = arith.constant 0 : index
    %182 = vector.load %arg13[%c256_251, %c0_252] : memref<400x64xbf16, #tpu.memory_space<vmem>>, vector<16x64xbf16>
    tpu.vector_store %arg13[%c256_251, %c0_252], %181 {strides = array<i32>} : memref<400x64xbf16, #tpu.memory_space<vmem>>, vector<16x64xbf16>,
    %c0_253 = arith.constant 0 : index
    %c50_254 = arith.constant 50 : index
    %183 = vector.load %arg12[%c0_253, %c50_254] : memref<16x132xbf16, #tpu.memory_space<vmem>>, vector<16x64xbf16>
    %c272 = arith.constant 272 : index
    %c0_255 = arith.constant 0 : index
    %184 = vector.load %arg13[%c272, %c0_255] : memref<400x64xbf16, #tpu.memory_space<vmem>>, vector<16x64xbf16>
    tpu.vector_store %arg13[%c272, %c0_255], %183 {strides = array<i32>} : memref<400x64xbf16, #tpu.memory_space<vmem>>, vector<16x64xbf16>,
    %c0_256 = arith.constant 0 : index
    %c51_257 = arith.constant 51 : index
    %185 = vector.load %arg12[%c0_256, %c51_257] : memref<16x132xbf16, #tpu.memory_space<vmem>>, vector<16x64xbf16>
    %c288_258 = arith.constant 288 : index
    %c0_259 = arith.constant 0 : index
    %186 = vector.load %arg13[%c288_258, %c0_259] : memref<400x64xbf16, #tpu.memory_space<vmem>>, vector<16x64xbf16>
    tpu.vector_store %arg13[%c288_258, %c0_259], %185 {strides = array<i32>} : memref<400x64xbf16, #tpu.memory_space<vmem>>, vector<16x64xbf16>,
    %c0_260 = arith.constant 0 : index
    %c52_261 = arith.constant 52 : index
    %187 = vector.load %arg12[%c0_260, %c52_261] : memref<16x132xbf16, #tpu.memory_space<vmem>>, vector<16x64xbf16>
    %c304 = arith.constant 304 : index
    %c0_262 = arith.constant 0 : index
    %188 = vector.load %arg13[%c304, %c0_262] : memref<400x64xbf16, #tpu.memory_space<vmem>>, vector<16x64xbf16>
    tpu.vector_store %arg13[%c304, %c0_262], %187 {strides = array<i32>} : memref<400x64xbf16, #tpu.memory_space<vmem>>, vector<16x64xbf16>,
    %c0_263 = arith.constant 0 : index
    %c64_264 = arith.constant 64 : index
    %189 = vector.load %arg12[%c0_263, %c64_264] : memref<16x132xbf16, #tpu.memory_space<vmem>>, vector<16x64xbf16>
    %c320_265 = arith.constant 320 : index
    %c0_266 = arith.constant 0 : index
    %190 = vector.load %arg13[%c320_265, %c0_266] : memref<400x64xbf16, #tpu.memory_space<vmem>>, vector<16x64xbf16>
    tpu.vector_store %arg13[%c320_265, %c0_266], %189 {strides = array<i32>} : memref<400x64xbf16, #tpu.memory_space<vmem>>, vector<16x64xbf16>,
    %c0_267 = arith.constant 0 : index
    %c65_268 = arith.constant 65 : index
    %191 = vector.load %arg12[%c0_267, %c65_268] : memref<16x132xbf16, #tpu.memory_space<vmem>>, vector<16x64xbf16>
    %c336 = arith.constant 336 : index
    %c0_269 = arith.constant 0 : index
    %192 = vector.load %arg13[%c336, %c0_269] : memref<400x64xbf16, #tpu.memory_space<vmem>>, vector<16x64xbf16>
    tpu.vector_store %arg13[%c336, %c0_269], %191 {strides = array<i32>} : memref<400x64xbf16, #tpu.memory_space<vmem>>, vector<16x64xbf16>,
    %c0_270 = arith.constant 0 : index
    %c66_271 = arith.constant 66 : index
    %193 = vector.load %arg12[%c0_270, %c66_271] : memref<16x132xbf16, #tpu.memory_space<vmem>>, vector<16x64xbf16>
    %c352_272 = arith.constant 352 : index
    %c0_273 = arith.constant 0 : index
    %194 = vector.load %arg13[%c352_272, %c0_273] : memref<400x64xbf16, #tpu.memory_space<vmem>>, vector<16x64xbf16>
    tpu.vector_store %arg13[%c352_272, %c0_273], %193 {strides = array<i32>} : memref<400x64xbf16, #tpu.memory_space<vmem>>, vector<16x64xbf16>,
    %c0_274 = arith.constant 0 : index
    %c67_275 = arith.constant 67 : index
    %195 = vector.load %arg12[%c0_274, %c67_275] : memref<16x132xbf16, #tpu.memory_space<vmem>>, vector<16x64xbf16>
    %c368 = arith.constant 368 : index
    %c0_276 = arith.constant 0 : index
    %196 = vector.load %arg13[%c368, %c0_276] : memref<400x64xbf16, #tpu.memory_space<vmem>>, vector<16x64xbf16>
    tpu.vector_store %arg13[%c368, %c0_276], %195 {strides = array<i32>} : memref<400x64xbf16, #tpu.memory_space<vmem>>, vector<16x64xbf16>,
    %c0_277 = arith.constant 0 : index
    %c68_278 = arith.constant 68 : index
    %197 = vector.load %arg12[%c0_277, %c68_278] : memref<16x132xbf16, #tpu.memory_space<vmem>>, vector<16x64xbf16>
    %c384_279 = arith.constant 384 : index
    %c0_280 = arith.constant 0 : index
    %198 = vector.load %arg13[%c384_279, %c0_280] : memref<400x64xbf16, #tpu.memory_space<vmem>>, vector<16x64xbf16>
    tpu.vector_store %arg13[%c384_279, %c0_280], %197 {strides = array<i32>} : memref<400x64xbf16, #tpu.memory_space<vmem>>, vector<16x64xbf16>,
    %c0_281 = arith.constant 0 : index
    %c0_282 = arith.constant 0 : index
    %199 = vector.load %arg6[%c0_281, %c0_282] : memref<16x400xbf16, #tpu.memory_space<vmem>>, vector<16x400xbf16>
    %c0_283 = arith.constant 0 : index
    %c0_284 = arith.constant 0 : index
    %200 = vector.load %arg13[%c0_283, %c0_284] : memref<400x64xbf16, #tpu.memory_space<vmem>>, vector<400x64xbf16>
    %cst_285 = arith.constant dense<0.000000e+00> : vector<16x64xf32>
    %201 = tpu.matmul %199, %200, %cst_285 {dimension_numbers = #tpu.dot_dimension_numbers<[1], [0], [0], [1], [0, 0, 1, 1], [], []>} : vector<16x400xbf16>, vector<400x64xbf16>, vector<16x64xf32> -> vector<16x64xf32>
    %c0_286 = arith.constant 0 : index
    %c0_287 = arith.constant 0 : index
    %202 = vector.load %arg7[%c0_286, %c0_287] : memref<16x1xf32, #tpu.memory_space<vmem>>, vector<16x1xf32>
    %203 = vector.broadcast %202 : vector<16x1xf32> to vector<16x64xf32>
    %204 = arith.addf %201, %203 : vector<16x64xf32>
    %205 = arith.negf %204 : vector<16x64xf32>
    %206 = math.exp %205 : vector<16x64xf32>
    %cst_288 = arith.constant 1.000000e+00 : f32
    %207 = vector.broadcast %cst_288 : f32 to vector<16x64xf32>
    %208 = arith.addf %207, %206 : vector<16x64xf32>
    %209 = arith.divf %207, %208 : vector<16x64xf32>
    %c0_289 = arith.constant 0 : index
    %c0_290 = arith.constant 0 : index
    %c0_291 = arith.constant 0 : index
    %210 = vector.load %arg8[%c0_289, %c0_290, %c0_291] : memref<1x16x64xf32, #tpu.memory_space<vmem>>, vector<1x16x64xf32>
    %211 = vector.shape_cast %210 : vector<1x16x64xf32> to vector<16x64xf32>
    %212 = vector.shape_cast %209 : vector<16x64xf32> to vector<1x16x64xf32>
    tpu.vector_store %arg8[%c0_289, %c0_290, %c0_291], %212 {strides = array<i32>} : memref<1x16x64xf32, #tpu.memory_space<vmem>>, vector<1x16x64xf32>,
    return
  }
  func.func @transform_0(%arg0: i32) -> (i32, i32, i32) {
    %c0_i32 = arith.constant 0 : i32
    %c0_i32_0 = arith.constant 0 : i32
    %c0_i32_1 = arith.constant 0 : i32
    return %arg0, %c0_i32, %c0_i32_0 : i32, i32, i32
  }
  func.func @transform_1(%arg0: i32) -> (i32, i32) {
    %c0_i32 = arith.constant 0 : i32
    %c0_i32_0 = arith.constant 0 : i32
    %c0_i32_1 = arith.constant 0 : i32
    return %c0_i32, %c0_i32_0 : i32, i32
  }
  func.func @transform_2(%arg0: i32) -> (i32, i32) {
    %c0_i32 = arith.constant 0 : i32
    %c0_i32_0 = arith.constant 0 : i32
    %c0_i32_1 = arith.constant 0 : i32
    return %c0_i32, %c0_i32_0 : i32, i32
  }
  func.func @transform_3(%arg0: i32) -> (i32, i32) {
    %c0_i32 = arith.constant 0 : i32
    %c0_i32_0 = arith.constant 0 : i32
    %c0_i32_1 = arith.constant 0 : i32
    return %c0_i32, %c0_i32_0 : i32, i32
  }
  func.func @transform_4(%arg0: i32) -> (i32, i32) {
    %c0_i32 = arith.constant 0 : i32
    %c0_i32_0 = arith.constant 0 : i32
    %c0_i32_1 = arith.constant 0 : i32
    return %c0_i32, %c0_i32_0 : i32, i32
  }
  func.func @transform_5(%arg0: i32) -> (i32, i32) {
    %c0_i32 = arith.constant 0 : i32
    %c0_i32_0 = arith.constant 0 : i32
    %c0_i32_1 = arith.constant 0 : i32
    return %c0_i32, %c0_i32_0 : i32, i32
  }
  func.func @transform_6(%arg0: i32) -> (i32, i32) {
    %c0_i32 = arith.constant 0 : i32
    %c0_i32_0 = arith.constant 0 : i32
    %c0_i32_1 = arith.constant 0 : i32
    return %c0_i32, %c0_i32_0 : i32, i32
  }
  func.func @transform_7(%arg0: i32) -> (i32, i32, i32) {
    %c0_i32 = arith.constant 0 : i32
    %c0_i32_0 = arith.constant 0 : i32
    %c0_i32_1 = arith.constant 0 : i32
    return %arg0, %c0_i32, %c0_i32_0 : i32, i32, i32
  }
}

</mosaic_0001>

<llo_original>
// kernel: model_forward.1
$region0: #{model_forward.1}
  #allocation0 [shape = 'u32[]', space=smem, size = 0x4, offset = 0x4, fixed_abs, tag = 'smem constant byte address 0x4 - core index']
  #allocation1 [shape = 'u32[72,128]{1,0:T(1,128)}', space=vmem, size = 0x9000, scoped, tag = 'internal scratch']
  #allocation2 [shape = 'bf16[1600,192]{1,0:T(8,128)(2,1)}', space=vmem, size = 0xc8000, scoped, tag = 'scratch operand']
  #allocation3 [shape = 'bf16[32,196]{1,0:T(8,128)(2,1)}', space=vmem, size = 0x4000, scoped, tag = 'scratch operand']
  #allocation4 [shape = 'bf16[800,128]{1,0:T(8,128)(2,1)}', space=vmem, size = 0x32000, scoped, tag = 'scratch operand']
  #allocation5 [shape = 'bf16[16,132]{1,0:T(8,128)(2,1)}', space=vmem, size = 0x2000, scoped, tag = 'scratch operand']
  #allocation6 [shape = 'bf16[400,64]{1,0:T(8,128)(2,1)}', space=vmem, size = 0x19000, scoped, tag = 'scratch operand']
  %s0 = inlined_call_operand.vmem [shape: bf16[2,64,260], index: 0, kind: input, shape index: {}]
  %s1 = inlined_call_operand.vmem [shape: bf16[32,1600], index: 1, kind: input, shape index: {}]
  %s2 = inlined_call_operand.vmem [shape: f32[32,1], index: 2, kind: input, shape index: {}]
  %s3 = inlined_call_operand.vmem [shape: bf16[16,800], index: 3, kind: input, shape index: {}]
  %s4 = inlined_call_operand.vmem [shape: f32[16,1], index: 4, kind: input, shape index: {}]
  %s5 = inlined_call_operand.vmem [shape: bf16[16,400], index: 5, kind: input, shape index: {}]
  %s6 = inlined_call_operand.vmem [shape: f32[16,1], index: 6, kind: input, shape index: {}]
  %s7 = inlined_call_operand.vmem [shape: f32[2,16,64], index: 7, kind: output, shape index: {}]
  %s8 = sld [smem:[#allocation0]]
  $region61: #{model_forward.1} parent=0
    _
  %s10 = ssub.s32 1, %s8
  %s11 = scalar_select 0, %s10, %s8
  loop: start=0, step=1, limit=4
  $region2: #{model_forward.1} parent=0 // loop_pre_header
    _
  $region3: #{model_forward.1} parent=0 // loop_header
    %s13 = sphi 0, %s17
    %p14 = scmp.ge.s32.totalorder %s13, 4
    %s23 = sphi 0, %s25
    %s26 = sphi 0, %s23
    %s27 = sphi 0, %s26
    %s43 = sphi 0, %s27
    %s47 = sphi 0, %s47
    %s49 = sphi 0, %s47
    %s50 = sphi 0, %s49
    %s64 = sphi 0, %s50
    %s68 = sphi 0, %s68
    %s70 = sphi 0, %s68
    %s71 = sphi 0, %s70
    %s85 = sphi 0, %s71
    %s89 = sphi 0, %s89
    %s91 = sphi 0, %s89
    %s92 = sphi 0, %s91
    %s106 = sphi 0, %s92
    %s110 = sphi 0, %s110
    %s112 = sphi 0, %s110
    %s113 = sphi 0, %s112
    %s127 = sphi 0, %s113
    %s131 = sphi 0, %s131
    %s133 = sphi 0, %s131
    %s134 = sphi 0, %s133
    %s148 = sphi 0, %s134
    %s152 = sphi 0, %s152
    %s154 = sphi 0, %s152
    %s155 = sphi 0, %s154
    %s169 = sphi 0, %s155
    %s175 = sphi 0, %s177
    %s178 = sphi 0, %s175
    %s179 = sphi 0, %s178
    %s195 = sphi 0, %s179
  $region4: #{model_forward.1} parent=0 // loop_header_branch
    %16 = sbr.rel (%p14) target = $region8
  $region5: #{model_forward.1} parent=0 // loop_body
    %s18 = ssub.s32 %s13, 1
    %s19 = ssub.s32 %s13, 2
    %s20 = sadd.s32 %s13, 1
    %s21 = ssub.s32 %s13, %s20
    %p22 = scmp.eq.s32.totalorder %s21, 0
    %s24 = sadd.s32 %s23, 1
    %s25 = scalar_select %p22, %s23, %s24
    %p28 = pneg %p22
    %p29 = scmp.eq.s32.totalorder %s13, 1
    %p30 = por %p28, %p29
    %p31 = scmp.ne.s32.totalorder %s23, %s26
    %p32 = scmp.eq.s32.totalorder %s13, 0
    %p33 = por %p31, %p32
    %p34 = scmp.ne.s32.totalorder %s23, %s26
    %p35 = scmp.eq.s32.totalorder %s18, 1
    %p36 = por %p34, %p35
    %p37 = scmp.ne.s32.totalorder %s26, %s27
    %p38 = scmp.eq.s32.totalorder %s18, 0
    %p39 = por %p37, %p38
    %p40 = scmp.ne.s32.totalorder %s26, %s27
    %p41 = scmp.eq.s32.totalorder %s19, 1
    %p42 = por %p40, %p41
    %p44 = scmp.ne.s32.totalorder %s27, %s43
    %p45 = scmp.eq.s32.totalorder %s19, 0
    %p46 = por %p44, %p45
    %s48 = sadd.s32 %s47, 1
    %p51 = scmp.eq.s32.totalorder %s13, 1
    %p52 = scmp.ne.s32.totalorder %s47, %s49
    %p53 = scmp.eq.s32.totalorder %s13, 0
    %p54 = por %p52, %p53
    %p55 = scmp.ne.s32.totalorder %s47, %s49
    %p56 = scmp.eq.s32.totalorder %s18, 1
    %p57 = por %p55, %p56
    %p58 = scmp.ne.s32.totalorder %s49, %s50
    %p59 = scmp.eq.s32.totalorder %s18, 0
    %p60 = por %p58, %p59
    %p61 = scmp.ne.s32.totalorder %s49, %s50
    %p62 = scmp.eq.s32.totalorder %s19, 1
    %p63 = por %p61, %p62
    %p65 = scmp.ne.s32.totalorder %s50, %s64
    %p66 = scmp.eq.s32.totalorder %s19, 0
    %p67 = por %p65, %p66
    %s69 = sadd.s32 %s68, 1
    %p72 = scmp.eq.s32.totalorder %s13, 1
    %p73 = scmp.ne.s32.totalorder %s68, %s70
    %p74 = scmp.eq.s32.totalorder %s13, 0
    %p75 = por %p73, %p74
    %p76 = scmp.ne.s32.totalorder %s68, %s70
    %p77 = scmp.eq.s32.totalorder %s18, 1
    %p78 = por %p76, %p77
    %p79 = scmp.ne.s32.totalorder %s70, %s71
    %p80 = scmp.eq.s32.totalorder %s18, 0
    %p81 = por %p79, %p80
    %p82 = scmp.ne.s32.totalorder %s70, %s71
    %p83 = scmp.eq.s32.totalorder %s19, 1
    %p84 = por %p82, %p83
    %p86 = scmp.ne.s32.totalorder %s71, %s85
    %p87 = scmp.eq.s32.totalorder %s19, 0
    %p88 = por %p86, %p87
    %s90 = sadd.s32 %s89, 1
    %p93 = scmp.eq.s32.totalorder %s13, 1
    %p94 = scmp.ne.s32.totalorder %s89, %s91
    %p95 = scmp.eq.s32.totalorder %s13, 0
    %p96 = por %p94, %p95
    %p97 = scmp.ne.s32.totalorder %s89, %s91
    %p98 = scmp.eq.s32.totalorder %s18, 1
    %p99 = por %p97, %p98
    %p100 = scmp.ne.s32.totalorder %s91, %s92
    %p101 = scmp.eq.s32.totalorder %s18, 0
    %p102 = por %p100, %p101
    %p103 = scmp.ne.s32.totalorder %s91, %s92
    %p104 = scmp.eq.s32.totalorder %s19, 1
    %p105 = por %p103, %p104
    %p107 = scmp.ne.s32.totalorder %s92, %s106
    %p108 = scmp.eq.s32.totalorder %s19, 0
    %p109 = por %p107, %p108
    %s111 = sadd.s32 %s110, 1
    %p114 = scmp.eq.s32.totalorder %s13, 1
    %p115 = scmp.ne.s32.totalorder %s110, %s112
    %p116 = scmp.eq.s32.totalorder %s13, 0
    %p117 = por %p115, %p116
    %p118 = scmp.ne.s32.totalorder %s110, %s112
    %p119 = scmp.eq.s32.totalorder %s18, 1
    %p120 = por %p118, %p119
    %p121 = scmp.ne.s32.totalorder %s112, %s113
    %p122 = scmp.eq.s32.totalorder %s18, 0
    %p123 = por %p121, %p122
    %p124 = scmp.ne.s32.totalorder %s112, %s113
    %p125 = scmp.eq.s32.totalorder %s19, 1
    %p126 = por %p124, %p125
    %p128 = scmp.ne.s32.totalorder %s113, %s127
    %p129 = scmp.eq.s32.totalorder %s19, 0
    %p130 = por %p128, %p129
    %s132 = sadd.s32 %s131, 1
    %p135 = scmp.eq.s32.totalorder %s13, 1
    %p136 = scmp.ne.s32.totalorder %s131, %s133
    %p137 = scmp.eq.s32.totalorder %s13, 0
    %p138 = por %p136, %p137
    %p139 = scmp.ne.s32.totalorder %s131, %s133
    %p140 = scmp.eq.s32.totalorder %s18, 1
    %p141 = por %p139, %p140
    %p142 = scmp.ne.s32.totalorder %s133, %s134
    %p143 = scmp.eq.s32.totalorder %s18, 0
    %p144 = por %p142, %p143
    %p145 = scmp.ne.s32.totalorder %s133, %s134
    %p146 = scmp.eq.s32.totalorder %s19, 1
    %p147 = por %p145, %p146
    %p149 = scmp.ne.s32.totalorder %s134, %s148
    %p150 = scmp.eq.s32.totalorder %s19, 0
    %p151 = por %p149, %p150
    %s153 = sadd.s32 %s152, 1
    %p156 = scmp.eq.s32.totalorder %s13, 1
    %p157 = scmp.ne.s32.totalorder %s152, %s154
    %p158 = scmp.eq.s32.totalorder %s13, 0
    %p159 = por %p157, %p158
    %p160 = scmp.ne.s32.totalorder %s152, %s154
    %p161 = scmp.eq.s32.totalorder %s18, 1
    %p162 = por %p160, %p161
    %p163 = scmp.ne.s32.totalorder %s154, %s155
    %p164 = scmp.eq.s32.totalorder %s18, 0
    %p165 = por %p163, %p164
    %p166 = scmp.ne.s32.totalorder %s154, %s155
    %p167 = scmp.eq.s32.totalorder %s19, 1
    %p168 = por %p166, %p167
    %p170 = scmp.ne.s32.totalorder %s155, %s169
    %p171 = scmp.eq.s32.totalorder %s19, 0
    %p172 = por %p170, %p171
    %s173 = ssub.s32 %s13, %s20
    %p174 = scmp.eq.s32.totalorder %s173, 0
    %s176 = sadd.s32 %s175, 1
    %s177 = scalar_select %p174, %s175, %s176
    %p180 = pneg %p174
    %p181 = scmp.eq.s32.totalorder %s13, 1
    %p182 = por %p180, %p181
    %p183 = scmp.ne.s32.totalorder %s175, %s178
    %p184 = scmp.eq.s32.totalorder %s13, 0
    %p185 = por %p183, %p184
    %p186 = scmp.ne.s32.totalorder %s175, %s178
    %p187 = scmp.eq.s32.totalorder %s18, 1
    %p188 = por %p186, %p187
    %p189 = scmp.ne.s32.totalorder %s178, %s179
    %p190 = scmp.eq.s32.totalorder %s18, 0
    %p191 = por %p189, %p190
    %p192 = scmp.ne.s32.totalorder %s178, %s179
    %p193 = scmp.eq.s32.totalorder %s19, 1
    %p194 = por %p192, %p193
    %p196 = scmp.ne.s32.totalorder %s179, %s195
    %p197 = scmp.eq.s32.totalorder %s19, 0
    %p198 = por %p196, %p197
    %p199 = scmp.le.s32.totalorder 1, %s13
    %p200 = scmp.lt.s32.totalorder %s13, 3
    %p201 = pnand %p199, %p200
    %p202 = pneg %p201
    // Predicated region
    $region9: #{model_forward.1} parent=5 // pred_check
      _
    $region10: #{model_forward.1} parent=5 // pred_check_branch
      %204 = sbr.rel (%p201) target = $region12
    $region11: #{model_forward.1} parent=5 // pred_region
      %s205 = ssub.s32 %s13, 1
      // Predicated region
      $region13: #{model_forward.1} parent=11 // pred_check
        %p206 = pneg %p60
      $region14: #{model_forward.1} parent=11 // pred_check_branch
        %208 = sbr.rel (%p206) target = $region16
      $region15: #{model_forward.1} parent=11 // pred_region
        _
      $region16: #{model_forward.1} parent=11 // pred_fallthru
        _
      // Predicated region
      $region17: #{model_forward.1} parent=11 // pred_check
        %p209 = pneg %p81
      $region18: #{model_forward.1} parent=11 // pred_check_branch
        %211 = sbr.rel (%p209) target = $region20
      $region19: #{model_forward.1} parent=11 // pred_region
        _
      $region20: #{model_forward.1} parent=11 // pred_fallthru
        _
      // Predicated region
      $region21: #{model_forward.1} parent=11 // pred_check
        %p212 = pneg %p102
      $region22: #{model_forward.1} parent=11 // pred_check_branch
        %214 = sbr.rel (%p212) target = $region24
      $region23: #{model_forward.1} parent=11 // pred_region
        _
      $region24: #{model_forward.1} parent=11 // pred_fallthru
        _
      // Predicated region
      $region25: #{model_forward.1} parent=11 // pred_check
        %p215 = pneg %p123
      $region26: #{model_forward.1} parent=11 // pred_check_branch
        %217 = sbr.rel (%p215) target = $region28
      $region27: #{model_forward.1} parent=11 // pred_region
        _
      $region28: #{model_forward.1} parent=11 // pred_fallthru
        _
      // Predicated region
      $region29: #{model_forward.1} parent=11 // pred_check
        %p218 = pneg %p144
      $region30: #{model_forward.1} parent=11 // pred_check_branch
        %220 = sbr.rel (%p218) target = $region32
      $region31: #{model_forward.1} parent=11 // pred_region
        _
      $region32: #{model_forward.1} parent=11 // pred_fallthru
        _
      // Predicated region
      $region33: #{model_forward.1} parent=11 // pred_check
        %p221 = pneg %p165
      $region34: #{model_forward.1} parent=11 // pred_check_branch
        %223 = sbr.rel (%p221) target = $region36
      $region35: #{model_forward.1} parent=11 // pred_region
        _
      $region36: #{model_forward.1} parent=11 // pred_fallthru
        _
    $region12: #{model_forward.1} parent=5 // pred_fallthru
      _
    %p224 = scmp.lt.s32.totalorder %s13, 2
    // Predicated region
    $region37: #{model_forward.1} parent=5 // pred_check
      %p225 = pneg %p224
    $region38: #{model_forward.1} parent=5 // pred_check_branch
      %227 = sbr.rel (%p225) target = $region40
    $region39: #{model_forward.1} parent=5 // pred_region
      // Predicated region
      $region41: #{model_forward.1} parent=39 // pred_check
        %p228 = pneg %p33
      $region42: #{model_forward.1} parent=39 // pred_check_branch
        %230 = sbr.rel (%p228) target = $region44
      $region43: #{model_forward.1} parent=39 // pred_region
        %p231 = scmp.lt.s32.totalorder %s13, 1
        %s232 = scalar_select %p231, %s13, 1
        %s233 = smul.addr %s232, 24
        %s234 = smul.addr %s233, 4
        %s235 = scalar_lea.vmem %s0, %s234
      $region44: #{model_forward.1} parent=39 // pred_fallthru
        _
    $region40: #{model_forward.1} parent=5 // pred_fallthru
      _
    %p236 = scmp.le.s32.totalorder 1, %s13
    %p237 = scmp.lt.s32.totalorder %s13, 3
    %p238 = pnand %p236, %p237
    %p239 = pneg %p238
    // Predicated region
    $region45: #{model_forward.1} parent=5 // pred_check
      _
    $region46: #{model_forward.1} parent=5 // pred_check_branch
      %241 = sbr.rel (%p238) target = $region48
    $region47: #{model_forward.1} parent=5 // pred_region
      %s242 = ssub.s32 %s13, 1
      %p243 = scmp.lt.s32.totalorder %s18, 1
      %s244 = scalar_select %p243, %s18, 1
      %s245 = smul.addr %s244, 24
      %s246 = smul.addr %s245, 4
      %s247 = scalar_lea.vmem %s0, %s246
      %p248 = pneg %p39
      %p249 = pneg %p36
      %p250 = pneg %p60
      %p251 = pneg %p57
      %p252 = pneg %p81
      %p253 = pneg %p78
      %p254 = pneg %p102
      %p255 = pneg %p99
      %p256 = pneg %p123
      %p257 = pneg %p120
      %p258 = pneg %p144
      %p259 = pneg %p141
      %p260 = pneg %p165
      %p261 = pneg %p162
      %p262 = pneg %p191
      %p263 = pneg %p188
      %p264 = scmp.lt.s32.totalorder %s18, 1
      %s265 = scalar_select %p264, %s18, 1
      %s266 = smul.addr %s265, 2
      %s267 = smul.addr %s266, 8
      %s268 = scalar_lea.vmem %s7, %s267
      %p269 = scmp.lt.s32.totalorder %s18, 1
      %s270 = scalar_select %p269, %s18, 1
      %s271 = smul.addr %s270, 24
      %s272 = smul.addr %s271, 4
      %s273 = scalar_lea.vmem %s0, %s272
      %p274 = scmp.lt.s32.totalorder %s18, 1
      %s275 = scalar_select %p274, %s18, 1
      %s276 = smul.addr %s275, 2
      %s277 = smul.addr %s276, 8
      %s278 = scalar_lea.vmem %s7, %s277
      %v280 = vld [vmem:[%s273] sm:$0xff]
      %v281 = vld [vmem:[%s273 + $0xc] sm:$0xff]
      %v282 = vld [vmem:[%s273 + $0x18] sm:$0xff]
      %v283 = vld [vmem:[%s273 + $0x24] sm:$0xff]
      %v284 = vld [vmem:[%s273 + $0x30] sm:$0xff]
      %v285 = vld [vmem:[%s273 + $0x3c] sm:$0xff]
      %v286 = vld [vmem:[%s273 + $0x48] sm:$0xff]
      %v287 = vld [vmem:[%s273 + $0x54] sm:$0xff]
      %vm288 = vcmask 1043456
      %vm289 = vcmask 523268
      %vm290 = vmor %vm289, %vm288
      %291 = vst.msk [vmem:[#allocation2] sm:$0xff] %vm290, %v280
      %292 = vst.msk [vmem:[#allocation2 + $0x8] sm:$0xff] %vm290, %v281
      %293 = vst.msk [vmem:[#allocation2 + $0x10] sm:$0xff] %vm290, %v282
      %294 = vst.msk [vmem:[#allocation2 + $0x18] sm:$0xff] %vm290, %v283
      %295 = vst.msk [vmem:[#allocation2 + $0x20] sm:$0xff] %vm290, %v284
      %296 = vst.msk [vmem:[#allocation2 + $0x28] sm:$0xff] %vm290, %v285
      %297 = vst.msk [vmem:[#allocation2 + $0x30] sm:$0xff] %vm290, %v286
      %298 = vst.msk [vmem:[#allocation2 + $0x38] sm:$0xff] %vm290, %v287
      %v299 = vld [vmem:[%s273] sm:$0xff]
      %v300 = vld [vmem:[%s273 + $0xc] sm:$0xff]
      %v301 = vld [vmem:[%s273 + $0x18] sm:$0xff]
      %v302 = vld [vmem:[%s273 + $0x24] sm:$0xff]
      %v303 = vld [vmem:[%s273 + $0x30] sm:$0xff]
      %v304 = vld [vmem:[%s273 + $0x3c] sm:$0xff]
      %v305 = vld [vmem:[%s273 + $0x48] sm:$0xff]
      %v306 = vld [vmem:[%s273 + $0x54] sm:$0xff]
      %315 = vrot.lane.b32.xlu0 %v299, 127
      %v316 = vpop.permute.xlu0 %315
      %317 = vrot.lane.b32.xlu0 %v300, 127
      %v318 = vpop.permute.xlu0 %317
      %319 = vrot.lane.b32.xlu0 %v301, 127
      %v320 = vpop.permute.xlu0 %319
      %321 = vrot.lane.b32.xlu0 %v302, 127
      %v322 = vpop.permute.xlu0 %321
      %323 = vrot.lane.b32.xlu0 %v303, 127
      %v324 = vpop.permute.xlu0 %323
      %325 = vrot.lane.b32.xlu0 %v304, 127
      %v326 = vpop.permute.xlu0 %325
      %327 = vrot.lane.b32.xlu0 %v305, 127
      %v328 = vpop.permute.xlu0 %327
      %329 = vrot.lane.b32.xlu0 %v306, 127
      %v330 = vpop.permute.xlu0 %329
      %v331 = vrot.slane %v316, 4
      %v332 = vrot.slane %v318, 4
      %v333 = vrot.slane %v320, 4
      %v334 = vrot.slane %v322, 4
      %v335 = vrot.slane %v324, 4
      %v336 = vrot.slane %v326, 4
      %v337 = vrot.slane %v328, 4
      %v338 = vrot.slane %v330, 4
      %vm339 = vcmask 1039360
      %v340 = vsel %vm339, %v316, %v331
      %v341 = vsel %vm339, %v318, %v332
      %v342 = vsel %vm339, %v320, %v333
      %v343 = vsel %vm339, %v322, %v334
      %v344 = vsel %vm339, %v324, %v335
      %v345 = vsel %vm339, %v326, %v336
      %v346 = vsel %vm339, %v328, %v337
      %v347 = vsel %vm339, %v330, %v338
      %356 = vst.msk [vmem:[#allocation2 + $0x40] sm:$0xff] %vm290, %v340
      %357 = vst.msk [vmem:[#allocation2 + $0x48] sm:$0xff] %vm290, %v341
      %358 = vst.msk [vmem:[#allocation2 + $0x50] sm:$0xff] %vm290, %v342
      %359 = vst.msk [vmem:[#allocation2 + $0x58] sm:$0xff] %vm290, %v343
      %360 = vst.msk [vmem:[#allocation2 + $0x60] sm:$0xff] %vm290, %v344
      %361 = vst.msk [vmem:[#allocation2 + $0x68] sm:$0xff] %vm290, %v345
      %362 = vst.msk [vmem:[#allocation2 + $0x70] sm:$0xff] %vm290, %v346
      %363 = vst.msk [vmem:[#allocation2 + $0x78] sm:$0xff] %vm290, %v347
      %v364 = vld [vmem:[%s273] sm:$0xff]
      %v365 = vld [vmem:[%s273 + $0xc] sm:$0xff]
      %v366 = vld [vmem:[%s273 + $0x18] sm:$0xff]
      %v367 = vld [vmem:[%s273 + $0x24] sm:$0xff]
      %v368 = vld [vmem:[%s273 + $0x30] sm:$0xff]
      %v369 = vld [vmem:[%s273 + $0x3c] sm:$0xff]
      %v370 = vld [vmem:[%s273 + $0x48] sm:$0xff]
      %v371 = vld [vmem:[%s273 + $0x54] sm:$0xff]
      %380 = vrot.lane.b32.xlu0 %v364, 126
      %v381 = vpop.permute.xlu0 %380
      %382 = vrot.lane.b32.xlu0 %v365, 126
      %v383 = vpop.permute.xlu0 %382
      %384 = vrot.lane.b32.xlu0 %v366, 126
      %v385 = vpop.permute.xlu0 %384
      %386 = vrot.lane.b32.xlu0 %v367, 126
      %v387 = vpop.permute.xlu0 %386
      %388 = vrot.lane.b32.xlu0 %v368, 126
      %v389 = vpop.permute.xlu0 %388
      %390 = vrot.lane.b32.xlu0 %v369, 126
      %v391 = vpop.permute.xlu0 %390
      %392 = vrot.lane.b32.xlu0 %v370, 126
      %v393 = vpop.permute.xlu0 %392
      %394 = vrot.lane.b32.xlu0 %v371, 126
      %v395 = vpop.permute.xlu0 %394
      %v396 = vrot.slane %v381, 4
      %v397 = vrot.slane %v383, 4
      %v398 = vrot.slane %v385, 4
      %v399 = vrot.slane %v387, 4
      %v400 = vrot.slane %v389, 4
      %v401 = vrot.slane %v391, 4
      %v402 = vrot.slane %v393, 4
      %v403 = vrot.slane %v395, 4
      %vm404 = vcmask 1031168
      %v405 = vsel %vm404, %v381, %v396
      %v406 = vsel %vm404, %v383, %v397
      %v407 = vsel %vm404, %v385, %v398
      %v408 = vsel %vm404, %v387, %v399
      %v409 = vsel %vm404, %v389, %v400
      %v410 = vsel %vm404, %v391, %v401
      %v411 = vsel %vm404, %v393, %v402
      %v412 = vsel %vm404, %v395, %v403
      %421 = vst.msk [vmem:[#allocation2 + $0x80] sm:$0xff] %vm290, %v405
      %422 = vst.msk [vmem:[#allocation2 + $0x88] sm:$0xff] %vm290, %v406
      %423 = vst.msk [vmem:[#allocation2 + $0x90] sm:$0xff] %vm290, %v407
      %424 = vst.msk [vmem:[#allocation2 + $0x98] sm:$0xff] %vm290, %v408
      %425 = vst.msk [vmem:[#allocation2 + $0xa0] sm:$0xff] %vm290, %v409
      %426 = vst.msk [vmem:[#allocation2 + $0xa8] sm:$0xff] %vm290, %v410
      %427 = vst.msk [vmem:[#allocation2 + $0xb0] sm:$0xff] %vm290, %v411
      %428 = vst.msk [vmem:[#allocation2 + $0xb8] sm:$0xff] %vm290, %v412
      %v429 = vld [vmem:[%s273] sm:$0xff]
      %v430 = vld [vmem:[%s273 + $0xc] sm:$0xff]
      %v431 = vld [vmem:[%s273 + $0x18] sm:$0xff]
      %v432 = vld [vmem:[%s273 + $0x24] sm:$0xff]
      %v433 = vld [vmem:[%s273 + $0x30] sm:$0xff]
      %v434 = vld [vmem:[%s273 + $0x3c] sm:$0xff]
      %v435 = vld [vmem:[%s273 + $0x48] sm:$0xff]
      %v436 = vld [vmem:[%s273 + $0x54] sm:$0xff]
      %445 = vrot.lane.b32.xlu0 %v429, 125
      %v446 = vpop.permute.xlu0 %445
      %447 = vrot.lane.b32.xlu0 %v430, 125
      %v448 = vpop.permute.xlu0 %447
      %449 = vrot.lane.b32.xlu0 %v431, 125
      %v450 = vpop.permute.xlu0 %449
      %451 = vrot.lane.b32.xlu0 %v432, 125
      %v452 = vpop.permute.xlu0 %451
      %453 = vrot.lane.b32.xlu0 %v433, 125
      %v454 = vpop.permute.xlu0 %453
      %455 = vrot.lane.b32.xlu0 %v434, 125
      %v456 = vpop.permute.xlu0 %455
      %457 = vrot.lane.b32.xlu0 %v435, 125
      %v458 = vpop.permute.xlu0 %457
      %459 = vrot.lane.b32.xlu0 %v436, 125
      %v460 = vpop.permute.xlu0 %459
      %v461 = vrot.slane %v446, 4
      %v462 = vrot.slane %v448, 4
      %v463 = vrot.slane %v450, 4
      %v464 = vrot.slane %v452, 4
      %v465 = vrot.slane %v454, 4
      %v466 = vrot.slane %v456, 4
      %v467 = vrot.slane %v458, 4
      %v468 = vrot.slane %v460, 4
      %vm469 = vcmask 1022976
      %v470 = vsel %vm469, %v446, %v461
      %v471 = vsel %vm469, %v448, %v462
      %v472 = vsel %vm469, %v450, %v463
      %v473 = vsel %vm469, %v452, %v464
      %v474 = vsel %vm469, %v454, %v465
      %v475 = vsel %vm469, %v456, %v466
      %v476 = vsel %vm469, %v458, %v467
      %v477 = vsel %vm469, %v460, %v468
      %486 = vst.msk [vmem:[#allocation2 + $0xc0] sm:$0xff] %vm290, %v470
      %487 = vst.msk [vmem:[#allocation2 + $0xc8] sm:$0xff] %vm290, %v471
      %488 = vst.msk [vmem:[#allocation2 + $0xd0] sm:$0xff] %vm290, %v472
      %489 = vst.msk [vmem:[#allocation2 + $0xd8] sm:$0xff] %vm290, %v473
      %490 = vst.msk [vmem:[#allocation2 + $0xe0] sm:$0xff] %vm290, %v474
      %491 = vst.msk [vmem:[#allocation2 + $0xe8] sm:$0xff] %vm290, %v475
      %492 = vst.msk [vmem:[#allocation2 + $0xf0] sm:$0xff] %vm290, %v476
      %493 = vst.msk [vmem:[#allocation2 + $0xf8] sm:$0xff] %vm290, %v477
      %v494 = vld [vmem:[%s273] sm:$0xff]
      %v495 = vld [vmem:[%s273 + $0xc] sm:$0xff]
      %v496 = vld [vmem:[%s273 + $0x18] sm:$0xff]
      %v497 = vld [vmem:[%s273 + $0x24] sm:$0xff]
      %v498 = vld [vmem:[%s273 + $0x30] sm:$0xff]
      %v499 = vld [vmem:[%s273 + $0x3c] sm:$0xff]
      %v500 = vld [vmem:[%s273 + $0x48] sm:$0xff]
      %v501 = vld [vmem:[%s273 + $0x54] sm:$0xff]
      %510 = vrot.lane.b32.xlu0 %v494, 124
      %v511 = vpop.permute.xlu0 %510
      %512 = vrot.lane.b32.xlu0 %v495, 124
      %v513 = vpop.permute.xlu0 %512
      %514 = vrot.lane.b32.xlu0 %v496, 124
      %v515 = vpop.permute.xlu0 %514
      %516 = vrot.lane.b32.xlu0 %v497, 124
      %v517 = vpop.permute.xlu0 %516
      %518 = vrot.lane.b32.xlu0 %v498, 124
      %v519 = vpop.permute.xlu0 %518
      %520 = vrot.lane.b32.xlu0 %v499, 124
      %v521 = vpop.permute.xlu0 %520
      %522 = vrot.lane.b32.xlu0 %v500, 124
      %v523 = vpop.permute.xlu0 %522
      %524 = vrot.lane.b32.xlu0 %v501, 124
      %v525 = vpop.permute.xlu0 %524
      %v526 = vrot.slane %v511, 4
      %v527 = vrot.slane %v513, 4
      %v528 = vrot.slane %v515, 4
      %v529 = vrot.slane %v517, 4
      %v530 = vrot.slane %v519, 4
      %v531 = vrot.slane %v521, 4
      %v532 = vrot.slane %v523, 4
      %v533 = vrot.slane %v525, 4
      %vm534 = vcmask 1014784
      %v535 = vsel %vm534, %v511, %v526
      %v536 = vsel %vm534, %v513, %v527
      %v537 = vsel %vm534, %v515, %v528
      %v538 = vsel %vm534, %v517, %v529
      %v539 = vsel %vm534, %v519, %v530
      %v540 = vsel %vm534, %v521, %v531
      %v541 = vsel %vm534, %v523, %v532
      %v542 = vsel %vm534, %v525, %v533
      %551 = vst.msk [vmem:[#allocation2 + $0x100] sm:$0xff] %vm290, %v535
      %552 = vst.msk [vmem:[#allocation2 + $0x108] sm:$0xff] %vm290, %v536
      %553 = vst.msk [vmem:[#allocation2 + $0x110] sm:$0xff] %vm290, %v537
      %554 = vst.msk [vmem:[#allocation2 + $0x118] sm:$0xff] %vm290, %v538
      %555 = vst.msk [vmem:[#allocation2 + $0x120] sm:$0xff] %vm290, %v539
      %556 = vst.msk [vmem:[#allocation2 + $0x128] sm:$0xff] %vm290, %v540
      %557 = vst.msk [vmem:[#allocation2 + $0x130] sm:$0xff] %vm290, %v541
      %558 = vst.msk [vmem:[#allocation2 + $0x138] sm:$0xff] %vm290, %v542
      %v559 = vld [vmem:[%s273] sm:$0xff]
      %v560 = vld [vmem:[%s273 + $0xc] sm:$0xff]
      %v561 = vld [vmem:[%s273 + $0x18] sm:$0xff]
      %v562 = vld [vmem:[%s273 + $0x24] sm:$0xff]
      %v563 = vld [vmem:[%s273 + $0x30] sm:$0xff]
      %v564 = vld [vmem:[%s273 + $0x3c] sm:$0xff]
      %v565 = vld [vmem:[%s273 + $0x48] sm:$0xff]
      %v566 = vld [vmem:[%s273 + $0x54] sm:$0xff]
      %575 = vrot.lane.b32.xlu0 %v559, 112
      %v576 = vpop.permute.xlu0 %575
      %577 = vrot.lane.b32.xlu0 %v560, 112
      %v578 = vpop.permute.xlu0 %577
      %579 = vrot.lane.b32.xlu0 %v561, 112
      %v580 = vpop.permute.xlu0 %579
      %581 = vrot.lane.b32.xlu0 %v562, 112
      %v582 = vpop.permute.xlu0 %581
      %583 = vrot.lane.b32.xlu0 %v563, 112
      %v584 = vpop.permute.xlu0 %583
      %585 = vrot.lane.b32.xlu0 %v564, 112
      %v586 = vpop.permute.xlu0 %585
      %587 = vrot.lane.b32.xlu0 %v565, 112
      %v588 = vpop.permute.xlu0 %587
      %589 = vrot.lane.b32.xlu0 %v566, 112
      %v590 = vpop.permute.xlu0 %589
      %v591 = vrot.slane %v576, 4
      %v592 = vrot.slane %v578, 4
      %v593 = vrot.slane %v580, 4
      %v594 = vrot.slane %v582, 4
      %v595 = vrot.slane %v584, 4
      %v596 = vrot.slane %v586, 4
      %v597 = vrot.slane %v588, 4
      %v598 = vrot.slane %v590, 4
      %vm599 = vcmask 916480
      %v600 = vsel %vm599, %v576, %v591
      %v601 = vsel %vm599, %v578, %v592
      %v602 = vsel %vm599, %v580, %v593
      %v603 = vsel %vm599, %v582, %v594
      %v604 = vsel %vm599, %v584, %v595
      %v605 = vsel %vm599, %v586, %v596
      %v606 = vsel %vm599, %v588, %v597
      %v607 = vsel %vm599, %v590, %v598
      %616 = vst.msk [vmem:[#allocation2 + $0x140] sm:$0xff] %vm290, %v600
      %617 = vst.msk [vmem:[#allocation2 + $0x148] sm:$0xff] %vm290, %v601
      %618 = vst.msk [vmem:[#allocation2 + $0x150] sm:$0xff] %vm290, %v602
      %619 = vst.msk [vmem:[#allocation2 + $0x158] sm:$0xff] %vm290, %v603
      %620 = vst.msk [vmem:[#allocation2 + $0x160] sm:$0xff] %vm290, %v604
      %621 = vst.msk [vmem:[#allocation2 + $0x168] sm:$0xff] %vm290, %v605
      %622 = vst.msk [vmem:[#allocation2 + $0x170] sm:$0xff] %vm290, %v606
      %623 = vst.msk [vmem:[#allocation2 + $0x178] sm:$0xff] %vm290, %v607
      %v624 = vld [vmem:[%s273] sm:$0xff]
      %v625 = vld [vmem:[%s273 + $0xc] sm:$0xff]
      %v626 = vld [vmem:[%s273 + $0x18] sm:$0xff]
      %v627 = vld [vmem:[%s273 + $0x24] sm:$0xff]
      %v628 = vld [vmem:[%s273 + $0x30] sm:$0xff]
      %v629 = vld [vmem:[%s273 + $0x3c] sm:$0xff]
      %v630 = vld [vmem:[%s273 + $0x48] sm:$0xff]
      %v631 = vld [vmem:[%s273 + $0x54] sm:$0xff]
      %640 = vrot.lane.b32.xlu0 %v624, 111
      %v641 = vpop.permute.xlu0 %640
      %642 = vrot.lane.b32.xlu0 %v625, 111
      %v643 = vpop.permute.xlu0 %642
      %644 = vrot.lane.b32.xlu0 %v626, 111
      %v645 = vpop.permute.xlu0 %644
      %646 = vrot.lane.b32.xlu0 %v627, 111
      %v647 = vpop.permute.xlu0 %646
      %648 = vrot.lane.b32.xlu0 %v628, 111
      %v649 = vpop.permute.xlu0 %648
      %650 = vrot.lane.b32.xlu0 %v629, 111
      %v651 = vpop.permute.xlu0 %650
      %652 = vrot.lane.b32.xlu0 %v630, 111
      %v653 = vpop.permute.xlu0 %652
      %654 = vrot.lane.b32.xlu0 %v631, 111
      %v655 = vpop.permute.xlu0 %654
      %v656 = vrot.slane %v641, 4
      %v657 = vrot.slane %v643, 4
      %v658 = vrot.slane %v645, 4
      %v659 = vrot.slane %v647, 4
      %v660 = vrot.slane %v649, 4
      %v661 = vrot.slane %v651, 4
      %v662 = vrot.slane %v653, 4
      %v663 = vrot.slane %v655, 4
      %vm664 = vcmask 908288
      %v665 = vsel %vm664, %v641, %v656
      %v666 = vsel %vm664, %v643, %v657
      %v667 = vsel %vm664, %v645, %v658
      %v668 = vsel %vm664, %v647, %v659
      %v669 = vsel %vm664, %v649, %v660
      %v670 = vsel %vm664, %v651, %v661
      %v671 = vsel %vm664, %v653, %v662
      %v672 = vsel %vm664, %v655, %v663
      %681 = vst.msk [vmem:[#allocation2 + $0x180] sm:$0xff] %vm290, %v665
      %682 = vst.msk [vmem:[#allocation2 + $0x188] sm:$0xff] %vm290, %v666
      %683 = vst.msk [vmem:[#allocation2 + $0x190] sm:$0xff] %vm290, %v667
      %684 = vst.msk [vmem:[#allocation2 + $0x198] sm:$0xff] %vm290, %v668
      %685 = vst.msk [vmem:[#allocation2 + $0x1a0] sm:$0xff] %vm290, %v669
      %686 = vst.msk [vmem:[#allocation2 + $0x1a8] sm:$0xff] %vm290, %v670
      %687 = vst.msk [vmem:[#allocation2 + $0x1b0] sm:$0xff] %vm290, %v671
      %688 = vst.msk [vmem:[#allocation2 + $0x1b8] sm:$0xff] %vm290, %v672
      %v689 = vld [vmem:[%s273] sm:$0xff]
      %v690 = vld [vmem:[%s273 + $0xc] sm:$0xff]
      %v691 = vld [vmem:[%s273 + $0x18] sm:$0xff]
      %v692 = vld [vmem:[%s273 + $0x24] sm:$0xff]
      %v693 = vld [vmem:[%s273 + $0x30] sm:$0xff]
      %v694 = vld [vmem:[%s273 + $0x3c] sm:$0xff]
      %v695 = vld [vmem:[%s273 + $0x48] sm:$0xff]
      %v696 = vld [vmem:[%s273 + $0x54] sm:$0xff]
      %705 = vrot.lane.b32.xlu0 %v689, 110
      %v706 = vpop.permute.xlu0 %705
      %707 = vrot.lane.b32.xlu0 %v690, 110
      %v708 = vpop.permute.xlu0 %707
      %709 = vrot.lane.b32.xlu0 %v691, 110
      %v710 = vpop.permute.xlu0 %709
      %711 = vrot.lane.b32.xlu0 %v692, 110
      %v712 = vpop.permute.xlu0 %711
      %713 = vrot.lane.b32.xlu0 %v693, 110
      %v714 = vpop.permute.xlu0 %713
      %715 = vrot.lane.b32.xlu0 %v694, 110
      %v716 = vpop.permute.xlu0 %715
      %717 = vrot.lane.b32.xlu0 %v695, 110
      %v718 = vpop.permute.xlu0 %717
      %719 = vrot.lane.b32.xlu0 %v696, 110
      %v720 = vpop.permute.xlu0 %719
      %v721 = vrot.slane %v706, 4
      %v722 = vrot.slane %v708, 4
      %v723 = vrot.slane %v710, 4
      %v724 = vrot.slane %v712, 4
      %v725 = vrot.slane %v714, 4
      %v726 = vrot.slane %v716, 4
      %v727 = vrot.slane %v718, 4
      %v728 = vrot.slane %v720, 4
      %vm729 = vcmask 900096
      %v730 = vsel %vm729, %v706, %v721
      %v731 = vsel %vm729, %v708, %v722
      %v732 = vsel %vm729, %v710, %v723
      %v733 = vsel %vm729, %v712, %v724
      %v734 = vsel %vm729, %v714, %v725
      %v735 = vsel %vm729, %v716, %v726
      %v736 = vsel %vm729, %v718, %v727
      %v737 = vsel %vm729, %v720, %v728
      %746 = vst.msk [vmem:[#allocation2 + $0x1c0] sm:$0xff] %vm290, %v730
      %747 = vst.msk [vmem:[#allocation2 + $0x1c8] sm:$0xff] %vm290, %v731
      %748 = vst.msk [vmem:[#allocation2 + $0x1d0] sm:$0xff] %vm290, %v732
      %749 = vst.msk [vmem:[#allocation2 + $0x1d8] sm:$0xff] %vm290, %v733
      %750 = vst.msk [vmem:[#allocation2 + $0x1e0] sm:$0xff] %vm290, %v734
      %751 = vst.msk [vmem:[#allocation2 + $0x1e8] sm:$0xff] %vm290, %v735
      %752 = vst.msk [vmem:[#allocation2 + $0x1f0] sm:$0xff] %vm290, %v736
      %753 = vst.msk [vmem:[#allocation2 + $0x1f8] sm:$0xff] %vm290, %v737
      %v754 = vld [vmem:[%s273] sm:$0xff]
      %v755 = vld [vmem:[%s273 + $0xc] sm:$0xff]
      %v756 = vld [vmem:[%s273 + $0x18] sm:$0xff]
      %v757 = vld [vmem:[%s273 + $0x24] sm:$0xff]
      %v758 = vld [vmem:[%s273 + $0x30] sm:$0xff]
      %v759 = vld [vmem:[%s273 + $0x3c] sm:$0xff]
      %v760 = vld [vmem:[%s273 + $0x48] sm:$0xff]
      %v761 = vld [vmem:[%s273 + $0x54] sm:$0xff]
      %770 = vrot.lane.b32.xlu0 %v754, 109
      %v771 = vpop.permute.xlu0 %770
      %772 = vrot.lane.b32.xlu0 %v755, 109
      %v773 = vpop.permute.xlu0 %772
      %774 = vrot.lane.b32.xlu0 %v756, 109
      %v775 = vpop.permute.xlu0 %774
      %776 = vrot.lane.b32.xlu0 %v757, 109
      %v777 = vpop.permute.xlu0 %776
      %778 = vrot.lane.b32.xlu0 %v758, 109
      %v779 = vpop.permute.xlu0 %778
      %780 = vrot.lane.b32.xlu0 %v759, 109
      %v781 = vpop.permute.xlu0 %780
      %782 = vrot.lane.b32.xlu0 %v760, 109
      %v783 = vpop.permute.xlu0 %782
      %784 = vrot.lane.b32.xlu0 %v761, 109
      %v785 = vpop.permute.xlu0 %784
      %v786 = vrot.slane %v771, 4
      %v787 = vrot.slane %v773, 4
      %v788 = vrot.slane %v775, 4
      %v789 = vrot.slane %v777, 4
      %v790 = vrot.slane %v779, 4
      %v791 = vrot.slane %v781, 4
      %v792 = vrot.slane %v783, 4
      %v793 = vrot.slane %v785, 4
      %vm794 = vcmask 891904
      %v795 = vsel %vm794, %v771, %v786
      %v796 = vsel %vm794, %v773, %v787
      %v797 = vsel %vm794, %v775, %v788
      %v798 = vsel %vm794, %v777, %v789
      %v799 = vsel %vm794, %v779, %v790
      %v800 = vsel %vm794, %v781, %v791
      %v801 = vsel %vm794, %v783, %v792
      %v802 = vsel %vm794, %v785, %v793
      %811 = vst.msk [vmem:[#allocation2 + $0x200] sm:$0xff] %vm290, %v795
      %812 = vst.msk [vmem:[#allocation2 + $0x208] sm:$0xff] %vm290, %v796
      %813 = vst.msk [vmem:[#allocation2 + $0x210] sm:$0xff] %vm290, %v797
      %814 = vst.msk [vmem:[#allocation2 + $0x218] sm:$0xff] %vm290, %v798
      %815 = vst.msk [vmem:[#allocation2 + $0x220] sm:$0xff] %vm290, %v799
      %816 = vst.msk [vmem:[#allocation2 + $0x228] sm:$0xff] %vm290, %v800
      %817 = vst.msk [vmem:[#allocation2 + $0x230] sm:$0xff] %vm290, %v801
      %818 = vst.msk [vmem:[#allocation2 + $0x238] sm:$0xff] %vm290, %v802
      %v819 = vld [vmem:[%s273] sm:$0xff]
      %v820 = vld [vmem:[%s273 + $0xc] sm:$0xff]
      %v821 = vld [vmem:[%s273 + $0x18] sm:$0xff]
      %v822 = vld [vmem:[%s273 + $0x24] sm:$0xff]
      %v823 = vld [vmem:[%s273 + $0x30] sm:$0xff]
      %v824 = vld [vmem:[%s273 + $0x3c] sm:$0xff]
      %v825 = vld [vmem:[%s273 + $0x48] sm:$0xff]
      %v826 = vld [vmem:[%s273 + $0x54] sm:$0xff]
      %835 = vrot.lane.b32.xlu0 %v819, 108
      %v836 = vpop.permute.xlu0 %835
      %837 = vrot.lane.b32.xlu0 %v820, 108
      %v838 = vpop.permute.xlu0 %837
      %839 = vrot.lane.b32.xlu0 %v821, 108
      %v840 = vpop.permute.xlu0 %839
      %841 = vrot.lane.b32.xlu0 %v822, 108
      %v842 = vpop.permute.xlu0 %841
      %843 = vrot.lane.b32.xlu0 %v823, 108
      %v844 = vpop.permute.xlu0 %843
      %845 = vrot.lane.b32.xlu0 %v824, 108
      %v846 = vpop.permute.xlu0 %845
      %847 = vrot.lane.b32.xlu0 %v825, 108
      %v848 = vpop.permute.xlu0 %847
      %849 = vrot.lane.b32.xlu0 %v826, 108
      %v850 = vpop.permute.xlu0 %849
      %v851 = vrot.slane %v836, 4
      %v852 = vrot.slane %v838, 4
      %v853 = vrot.slane %v840, 4
      %v854 = vrot.slane %v842, 4
      %v855 = vrot.slane %v844, 4
      %v856 = vrot.slane %v846, 4
      %v857 = vrot.slane %v848, 4
      %v858 = vrot.slane %v850, 4
      %vm859 = vcmask 883712
      %v860 = vsel %vm859, %v836, %v851
      %v861 = vsel %vm859, %v838, %v852
      %v862 = vsel %vm859, %v840, %v853
      %v863 = vsel %vm859, %v842, %v854
      %v864 = vsel %vm859, %v844, %v855
      %v865 = vsel %vm859, %v846, %v856
      %v866 = vsel %vm859, %v848, %v857
      %v867 = vsel %vm859, %v850, %v858
      %876 = vst.msk [vmem:[#allocation2 + $0x240] sm:$0xff] %vm290, %v860
      %877 = vst.msk [vmem:[#allocation2 + $0x248] sm:$0xff] %vm290, %v861
      %878 = vst.msk [vmem:[#allocation2 + $0x250] sm:$0xff] %vm290, %v862
      %879 = vst.msk [vmem:[#allocation2 + $0x258] sm:$0xff] %vm290, %v863
      %880 = vst.msk [vmem:[#allocation2 + $0x260] sm:$0xff] %vm290, %v864
      %881 = vst.msk [vmem:[#allocation2 + $0x268] sm:$0xff] %vm290, %v865
      %882 = vst.msk [vmem:[#allocation2 + $0x270] sm:$0xff] %vm290, %v866
      %883 = vst.msk [vmem:[#allocation2 + $0x278] sm:$0xff] %vm290, %v867
      %v884 = vld [vmem:[%s273] sm:$0xff]
      %v885 = vld [vmem:[%s273 + $0xc] sm:$0xff]
      %v886 = vld [vmem:[%s273 + $0x18] sm:$0xff]
      %v887 = vld [vmem:[%s273 + $0x24] sm:$0xff]
      %v888 = vld [vmem:[%s273 + $0x30] sm:$0xff]
      %v889 = vld [vmem:[%s273 + $0x3c] sm:$0xff]
      %v890 = vld [vmem:[%s273 + $0x48] sm:$0xff]
      %v891 = vld [vmem:[%s273 + $0x54] sm:$0xff]
      %900 = vrot.lane.b32.xlu0 %v884, 96
      %v901 = vpop.permute.xlu0 %900
      %902 = vrot.lane.b32.xlu0 %v885, 96
      %v903 = vpop.permute.xlu0 %902
      %904 = vrot.lane.b32.xlu0 %v886, 96
      %v905 = vpop.permute.xlu0 %904
      %906 = vrot.lane.b32.xlu0 %v887, 96
      %v907 = vpop.permute.xlu0 %906
      %908 = vrot.lane.b32.xlu0 %v888, 96
      %v909 = vpop.permute.xlu0 %908
      %910 = vrot.lane.b32.xlu0 %v889, 96
      %v911 = vpop.permute.xlu0 %910
      %912 = vrot.lane.b32.xlu0 %v890, 96
      %v913 = vpop.permute.xlu0 %912
      %914 = vrot.lane.b32.xlu0 %v891, 96
      %v915 = vpop.permute.xlu0 %914
      %v916 = vrot.slane %v901, 4
      %v917 = vrot.slane %v903, 4
      %v918 = vrot.slane %v905, 4
      %v919 = vrot.slane %v907, 4
      %v920 = vrot.slane %v909, 4
      %v921 = vrot.slane %v911, 4
      %v922 = vrot.slane %v913, 4
      %v923 = vrot.slane %v915, 4
      %vm924 = vcmask 785408
      %v925 = vsel %vm924, %v901, %v916
      %v926 = vsel %vm924, %v903, %v917
      %v927 = vsel %vm924, %v905, %v918
      %v928 = vsel %vm924, %v907, %v919
      %v929 = vsel %vm924, %v909, %v920
      %v930 = vsel %vm924, %v911, %v921
      %v931 = vsel %vm924, %v913, %v922
      %v932 = vsel %vm924, %v915, %v923
      %941 = vst.msk [vmem:[#allocation2 + $0x280] sm:$0xff] %vm290, %v925
      %942 = vst.msk [vmem:[#allocation2 + $0x288] sm:$0xff] %vm290, %v926
      %943 = vst.msk [vmem:[#allocation2 + $0x290] sm:$0xff] %vm290, %v927
      %944 = vst.msk [vmem:[#allocation2 + $0x298] sm:$0xff] %vm290, %v928
      %945 = vst.msk [vmem:[#allocation2 + $0x2a0] sm:$0xff] %vm290, %v929
      %946 = vst.msk [vmem:[#allocation2 + $0x2a8] sm:$0xff] %vm290, %v930
      %947 = vst.msk [vmem:[#allocation2 + $0x2b0] sm:$0xff] %vm290, %v931
      %948 = vst.msk [vmem:[#allocation2 + $0x2b8] sm:$0xff] %vm290, %v932
      %v949 = vld [vmem:[%s273] sm:$0xff]
      %v950 = vld [vmem:[%s273 + $0xc] sm:$0xff]
      %v951 = vld [vmem:[%s273 + $0x18] sm:$0xff]
      %v952 = vld [vmem:[%s273 + $0x24] sm:$0xff]
      %v953 = vld [vmem:[%s273 + $0x30] sm:$0xff]
      %v954 = vld [vmem:[%s273 + $0x3c] sm:$0xff]
      %v955 = vld [vmem:[%s273 + $0x48] sm:$0xff]
      %v956 = vld [vmem:[%s273 + $0x54] sm:$0xff]
      %965 = vrot.lane.b32.xlu0 %v949, 95
      %v966 = vpop.permute.xlu0 %965
      %967 = vrot.lane.b32.xlu0 %v950, 95
      %v968 = vpop.permute.xlu0 %967
      %969 = vrot.lane.b32.xlu0 %v951, 95
      %v970 = vpop.permute.xlu0 %969
      %971 = vrot.lane.b32.xlu0 %v952, 95
      %v972 = vpop.permute.xlu0 %971
      %973 = vrot.lane.b32.xlu0 %v953, 95
      %v974 = vpop.permute.xlu0 %973
      %975 = vrot.lane.b32.xlu0 %v954, 95
      %v976 = vpop.permute.xlu0 %975
      %977 = vrot.lane.b32.xlu0 %v955, 95
      %v978 = vpop.permute.xlu0 %977
      %979 = vrot.lane.b32.xlu0 %v956, 95
      %v980 = vpop.permute.xlu0 %979
      %v981 = vrot.slane %v966, 4
      %v982 = vrot.slane %v968, 4
      %v983 = vrot.slane %v970, 4
      %v984 = vrot.slane %v972, 4
      %v985 = vrot.slane %v974, 4
      %v986 = vrot.slane %v976, 4
      %v987 = vrot.slane %v978, 4
      %v988 = vrot.slane %v980, 4
      %vm989 = vcmask 777216
      %v990 = vsel %vm989, %v966, %v981
      %v991 = vsel %vm989, %v968, %v982
      %v992 = vsel %vm989, %v970, %v983
      %v993 = vsel %vm989, %v972, %v984
      %v994 = vsel %vm989, %v974, %v985
      %v995 = vsel %vm989, %v976, %v986
      %v996 = vsel %vm989, %v978, %v987
      %v997 = vsel %vm989, %v980, %v988
      %1006 = vst.msk [vmem:[#allocation2 + $0x2c0] sm:$0xff] %vm290, %v990
      %1007 = vst.msk [vmem:[#allocation2 + $0x2c8] sm:$0xff] %vm290, %v991
      %1008 = vst.msk [vmem:[#allocation2 + $0x2d0] sm:$0xff] %vm290, %v992
      %1009 = vst.msk [vmem:[#allocation2 + $0x2d8] sm:$0xff] %vm290, %v993
      %1010 = vst.msk [vmem:[#allocation2 + $0x2e0] sm:$0xff] %vm290, %v994
      %1011 = vst.msk [vmem:[#allocation2 + $0x2e8] sm:$0xff] %vm290, %v995
      %1012 = vst.msk [vmem:[#allocation2 + $0x2f0] sm:$0xff] %vm290, %v996
      %1013 = vst.msk [vmem:[#allocation2 + $0x2f8] sm:$0xff] %vm290, %v997
      %v1014 = vld [vmem:[%s273] sm:$0xff]
      %v1015 = vld [vmem:[%s273 + $0xc] sm:$0xff]
      %v1016 = vld [vmem:[%s273 + $0x18] sm:$0xff]
      %v1017 = vld [vmem:[%s273 + $0x24] sm:$0xff]
      %v1018 = vld [vmem:[%s273 + $0x30] sm:$0xff]
      %v1019 = vld [vmem:[%s273 + $0x3c] sm:$0xff]
      %v1020 = vld [vmem:[%s273 + $0x48] sm:$0xff]
      %v1021 = vld [vmem:[%s273 + $0x54] sm:$0xff]
      %1030 = vrot.lane.b32.xlu0 %v1014, 94
      %v1031 = vpop.permute.xlu0 %1030
      %1032 = vrot.lane.b32.xlu0 %v1015, 94
      %v1033 = vpop.permute.xlu0 %1032
      %1034 = vrot.lane.b32.xlu0 %v1016, 94
      %v1035 = vpop.permute.xlu0 %1034
      %1036 = vrot.lane.b32.xlu0 %v1017, 94
      %v1037 = vpop.permute.xlu0 %1036
      %1038 = vrot.lane.b32.xlu0 %v1018, 94
      %v1039 = vpop.permute.xlu0 %1038
      %1040 = vrot.lane.b32.xlu0 %v1019, 94
      %v1041 = vpop.permute.xlu0 %1040
      %1042 = vrot.lane.b32.xlu0 %v1020, 94
      %v1043 = vpop.permute.xlu0 %1042
      %1044 = vrot.lane.b32.xlu0 %v1021, 94
      %v1045 = vpop.permute.xlu0 %1044
      %v1046 = vrot.slane %v1031, 4
      %v1047 = vrot.slane %v1033, 4
      %v1048 = vrot.slane %v1035, 4
      %v1049 = vrot.slane %v1037, 4
      %v1050 = vrot.slane %v1039, 4
      %v1051 = vrot.slane %v1041, 4
      %v1052 = vrot.slane %v1043, 4
      %v1053 = vrot.slane %v1045, 4
      %vm1054 = vcmask 769024
      %v1055 = vsel %vm1054, %v1031, %v1046
      %v1056 = vsel %vm1054, %v1033, %v1047
      %v1057 = vsel %vm1054, %v1035, %v1048
      %v1058 = vsel %vm1054, %v1037, %v1049
      %v1059 = vsel %vm1054, %v1039, %v1050
      %v1060 = vsel %vm1054, %v1041, %v1051
      %v1061 = vsel %vm1054, %v1043, %v1052
      %v1062 = vsel %vm1054, %v1045, %v1053
      %1071 = vst.msk [vmem:[#allocation2 + $0x300] sm:$0xff] %vm290, %v1055
      %1072 = vst.msk [vmem:[#allocation2 + $0x308] sm:$0xff] %vm290, %v1056
      %1073 = vst.msk [vmem:[#allocation2 + $0x310] sm:$0xff] %vm290, %v1057
      %1074 = vst.msk [vmem:[#allocation2 + $0x318] sm:$0xff] %vm290, %v1058
      %1075 = vst.msk [vmem:[#allocation2 + $0x320] sm:$0xff] %vm290, %v1059
      %1076 = vst.msk [vmem:[#allocation2 + $0x328] sm:$0xff] %vm290, %v1060
      %1077 = vst.msk [vmem:[#allocation2 + $0x330] sm:$0xff] %vm290, %v1061
      %1078 = vst.msk [vmem:[#allocation2 + $0x338] sm:$0xff] %vm290, %v1062
      %v1079 = vld [vmem:[%s273] sm:$0xff]
      %v1080 = vld [vmem:[%s273 + $0xc] sm:$0xff]
      %v1081 = vld [vmem:[%s273 + $0x18] sm:$0xff]
      %v1082 = vld [vmem:[%s273 + $0x24] sm:$0xff]
      %v1083 = vld [vmem:[%s273 + $0x30] sm:$0xff]
      %v1084 = vld [vmem:[%s273 + $0x3c] sm:$0xff]
      %v1085 = vld [vmem:[%s273 + $0x48] sm:$0xff]
      %v1086 = vld [vmem:[%s273 + $0x54] sm:$0xff]
      %1095 = vrot.lane.b32.xlu0 %v1079, 93
      %v1096 = vpop.permute.xlu0 %1095
      %1097 = vrot.lane.b32.xlu0 %v1080, 93
      %v1098 = vpop.permute.xlu0 %1097
      %1099 = vrot.lane.b32.xlu0 %v1081, 93
      %v1100 = vpop.permute.xlu0 %1099
      %1101 = vrot.lane.b32.xlu0 %v1082, 93
      %v1102 = vpop.permute.xlu0 %1101
      %1103 = vrot.lane.b32.xlu0 %v1083, 93
      %v1104 = vpop.permute.xlu0 %1103
      %1105 = vrot.lane.b32.xlu0 %v1084, 93
      %v1106 = vpop.permute.xlu0 %1105
      %1107 = vrot.lane.b32.xlu0 %v1085, 93
      %v1108 = vpop.permute.xlu0 %1107
      %1109 = vrot.lane.b32.xlu0 %v1086, 93
      %v1110 = vpop.permute.xlu0 %1109
      %v1111 = vrot.slane %v1096, 4
      %v1112 = vrot.slane %v1098, 4
      %v1113 = vrot.slane %v1100, 4
      %v1114 = vrot.slane %v1102, 4
      %v1115 = vrot.slane %v1104, 4
      %v1116 = vrot.slane %v1106, 4
      %v1117 = vrot.slane %v1108, 4
      %v1118 = vrot.slane %v1110, 4
      %vm1119 = vcmask 760832
      %v1120 = vsel %vm1119, %v1096, %v1111
      %v1121 = vsel %vm1119, %v1098, %v1112
      %v1122 = vsel %vm1119, %v1100, %v1113
      %v1123 = vsel %vm1119, %v1102, %v1114
      %v1124 = vsel %vm1119, %v1104, %v1115
      %v1125 = vsel %vm1119, %v1106, %v1116
      %v1126 = vsel %vm1119, %v1108, %v1117
      %v1127 = vsel %vm1119, %v1110, %v1118
      %1136 = vst.msk [vmem:[#allocation2 + $0x340] sm:$0xff] %vm290, %v1120
      %1137 = vst.msk [vmem:[#allocation2 + $0x348] sm:$0xff] %vm290, %v1121
      %1138 = vst.msk [vmem:[#allocation2 + $0x350] sm:$0xff] %vm290, %v1122
      %1139 = vst.msk [vmem:[#allocation2 + $0x358] sm:$0xff] %vm290, %v1123
      %1140 = vst.msk [vmem:[#allocation2 + $0x360] sm:$0xff] %vm290, %v1124
      %1141 = vst.msk [vmem:[#allocation2 + $0x368] sm:$0xff] %vm290, %v1125
      %1142 = vst.msk [vmem:[#allocation2 + $0x370] sm:$0xff] %vm290, %v1126
      %1143 = vst.msk [vmem:[#allocation2 + $0x378] sm:$0xff] %vm290, %v1127
      %v1144 = vld [vmem:[%s273] sm:$0xff]
      %v1145 = vld [vmem:[%s273 + $0xc] sm:$0xff]
      %v1146 = vld [vmem:[%s273 + $0x18] sm:$0xff]
      %v1147 = vld [vmem:[%s273 + $0x24] sm:$0xff]
      %v1148 = vld [vmem:[%s273 + $0x30] sm:$0xff]
      %v1149 = vld [vmem:[%s273 + $0x3c] sm:$0xff]
      %v1150 = vld [vmem:[%s273 + $0x48] sm:$0xff]
      %v1151 = vld [vmem:[%s273 + $0x54] sm:$0xff]
      %1160 = vrot.lane.b32.xlu0 %v1144, 92
      %v1161 = vpop.permute.xlu0 %1160
      %1162 = vrot.lane.b32.xlu0 %v1145, 92
      %v1163 = vpop.permute.xlu0 %1162
      %1164 = vrot.lane.b32.xlu0 %v1146, 92
      %v1165 = vpop.permute.xlu0 %1164
      %1166 = vrot.lane.b32.xlu0 %v1147, 92
      %v1167 = vpop.permute.xlu0 %1166
      %1168 = vrot.lane.b32.xlu0 %v1148, 92
      %v1169 = vpop.permute.xlu0 %1168
      %1170 = vrot.lane.b32.xlu0 %v1149, 92
      %v1171 = vpop.permute.xlu0 %1170
      %1172 = vrot.lane.b32.xlu0 %v1150, 92
      %v1173 = vpop.permute.xlu0 %1172
      %1174 = vrot.lane.b32.xlu0 %v1151, 92
      %v1175 = vpop.permute.xlu0 %1174
      %v1176 = vrot.slane %v1161, 4
      %v1177 = vrot.slane %v1163, 4
      %v1178 = vrot.slane %v1165, 4
      %v1179 = vrot.slane %v1167, 4
      %v1180 = vrot.slane %v1169, 4
      %v1181 = vrot.slane %v1171, 4
      %v1182 = vrot.slane %v1173, 4
      %v1183 = vrot.slane %v1175, 4
      %vm1184 = vcmask 752640
      %v1185 = vsel %vm1184, %v1161, %v1176
      %v1186 = vsel %vm1184, %v1163, %v1177
      %v1187 = vsel %vm1184, %v1165, %v1178
      %v1188 = vsel %vm1184, %v1167, %v1179
      %v1189 = vsel %vm1184, %v1169, %v1180
      %v1190 = vsel %vm1184, %v1171, %v1181
      %v1191 = vsel %vm1184, %v1173, %v1182
      %v1192 = vsel %vm1184, %v1175, %v1183
      %1201 = vst.msk [vmem:[#allocation2 + $0x380] sm:$0xff] %vm290, %v1185
      %1202 = vst.msk [vmem:[#allocation2 + $0x388] sm:$0xff] %vm290, %v1186
      %1203 = vst.msk [vmem:[#allocation2 + $0x390] sm:$0xff] %vm290, %v1187
      %1204 = vst.msk [vmem:[#allocation2 + $0x398] sm:$0xff] %vm290, %v1188
      %1205 = vst.msk [vmem:[#allocation2 + $0x3a0] sm:$0xff] %vm290, %v1189
      %1206 = vst.msk [vmem:[#allocation2 + $0x3a8] sm:$0xff] %vm290, %v1190
      %1207 = vst.msk [vmem:[#allocation2 + $0x3b0] sm:$0xff] %vm290, %v1191
      %1208 = vst.msk [vmem:[#allocation2 + $0x3b8] sm:$0xff] %vm290, %v1192
      %v1209 = vld [vmem:[%s273] sm:$0xff]
      %v1210 = vld [vmem:[%s273 + $0xc] sm:$0xff]
      %v1211 = vld [vmem:[%s273 + $0x18] sm:$0xff]
      %v1212 = vld [vmem:[%s273 + $0x24] sm:$0xff]
      %v1213 = vld [vmem:[%s273 + $0x30] sm:$0xff]
      %v1214 = vld [vmem:[%s273 + $0x3c] sm:$0xff]
      %v1215 = vld [vmem:[%s273 + $0x48] sm:$0xff]
      %v1216 = vld [vmem:[%s273 + $0x54] sm:$0xff]
      %1225 = vrot.lane.b32.xlu0 %v1209, 80
      %v1226 = vpop.permute.xlu0 %1225
      %1227 = vrot.lane.b32.xlu0 %v1210, 80
      %v1228 = vpop.permute.xlu0 %1227
      %1229 = vrot.lane.b32.xlu0 %v1211, 80
      %v1230 = vpop.permute.xlu0 %1229
      %1231 = vrot.lane.b32.xlu0 %v1212, 80
      %v1232 = vpop.permute.xlu0 %1231
      %1233 = vrot.lane.b32.xlu0 %v1213, 80
      %v1234 = vpop.permute.xlu0 %1233
      %1235 = vrot.lane.b32.xlu0 %v1214, 80
      %v1236 = vpop.permute.xlu0 %1235
      %1237 = vrot.lane.b32.xlu0 %v1215, 80
      %v1238 = vpop.permute.xlu0 %1237
      %1239 = vrot.lane.b32.xlu0 %v1216, 80
      %v1240 = vpop.permute.xlu0 %1239
      %v1241 = vrot.slane %v1226, 4
      %v1242 = vrot.slane %v1228, 4
      %v1243 = vrot.slane %v1230, 4
      %v1244 = vrot.slane %v1232, 4
      %v1245 = vrot.slane %v1234, 4
      %v1246 = vrot.slane %v1236, 4
      %v1247 = vrot.slane %v1238, 4
      %v1248 = vrot.slane %v1240, 4
      %vm1249 = vcmask 654336
      %v1250 = vsel %vm1249, %v1226, %v1241
      %v1251 = vsel %vm1249, %v1228, %v1242
      %v1252 = vsel %vm1249, %v1230, %v1243
      %v1253 = vsel %vm1249, %v1232, %v1244
      %v1254 = vsel %vm1249, %v1234, %v1245
      %v1255 = vsel %vm1249, %v1236, %v1246
      %v1256 = vsel %vm1249, %v1238, %v1247
      %v1257 = vsel %vm1249, %v1240, %v1248
      %1266 = vst.msk [vmem:[#allocation2 + $0x3c0] sm:$0xff] %vm290, %v1250
      %1267 = vst.msk [vmem:[#allocation2 + $0x3c8] sm:$0xff] %vm290, %v1251
      %1268 = vst.msk [vmem:[#allocation2 + $0x3d0] sm:$0xff] %vm290, %v1252
      %1269 = vst.msk [vmem:[#allocation2 + $0x3d8] sm:$0xff] %vm290, %v1253
      %1270 = vst.msk [vmem:[#allocation2 + $0x3e0] sm:$0xff] %vm290, %v1254
      %1271 = vst.msk [vmem:[#allocation2 + $0x3e8] sm:$0xff] %vm290, %v1255
      %1272 = vst.msk [vmem:[#allocation2 + $0x3f0] sm:$0xff] %vm290, %v1256
      %1273 = vst.msk [vmem:[#allocation2 + $0x3f8] sm:$0xff] %vm290, %v1257
      %v1274 = vld [vmem:[%s273] sm:$0xff]
      %v1275 = vld [vmem:[%s273 + $0xc] sm:$0xff]
      %v1276 = vld [vmem:[%s273 + $0x18] sm:$0xff]
      %v1277 = vld [vmem:[%s273 + $0x24] sm:$0xff]
      %v1278 = vld [vmem:[%s273 + $0x30] sm:$0xff]
      %v1279 = vld [vmem:[%s273 + $0x3c] sm:$0xff]
      %v1280 = vld [vmem:[%s273 + $0x48] sm:$0xff]
      %v1281 = vld [vmem:[%s273 + $0x54] sm:$0xff]
      %1290 = vrot.lane.b32.xlu0 %v1274, 79
      %v1291 = vpop.permute.xlu0 %1290
      %1292 = vrot.lane.b32.xlu0 %v1275, 79
      %v1293 = vpop.permute.xlu0 %1292
      %1294 = vrot.lane.b32.xlu0 %v1276, 79
      %v1295 = vpop.permute.xlu0 %1294
      %1296 = vrot.lane.b32.xlu0 %v1277, 79
      %v1297 = vpop.permute.xlu0 %1296
      %1298 = vrot.lane.b32.xlu0 %v1278, 79
      %v1299 = vpop.permute.xlu0 %1298
      %1300 = vrot.lane.b32.xlu0 %v1279, 79
      %v1301 = vpop.permute.xlu0 %1300
      %1302 = vrot.lane.b32.xlu0 %v1280, 79
      %v1303 = vpop.permute.xlu0 %1302
      %1304 = vrot.lane.b32.xlu0 %v1281, 79
      %v1305 = vpop.permute.xlu0 %1304
      %v1306 = vrot.slane %v1291, 4
      %v1307 = vrot.slane %v1293, 4
      %v1308 = vrot.slane %v1295, 4
      %v1309 = vrot.slane %v1297, 4
      %v1310 = vrot.slane %v1299, 4
      %v1311 = vrot.slane %v1301, 4
      %v1312 = vrot.slane %v1303, 4
      %v1313 = vrot.slane %v1305, 4
      %vm1314 = vcmask 646144
      %v1315 = vsel %vm1314, %v1291, %v1306
      %v1316 = vsel %vm1314, %v1293, %v1307
      %v1317 = vsel %vm1314, %v1295, %v1308
      %v1318 = vsel %vm1314, %v1297, %v1309
      %v1319 = vsel %vm1314, %v1299, %v1310
      %v1320 = vsel %vm1314, %v1301, %v1311
      %v1321 = vsel %vm1314, %v1303, %v1312
      %v1322 = vsel %vm1314, %v1305, %v1313
      %1331 = vst.msk [vmem:[#allocation2 + $0x400] sm:$0xff] %vm290, %v1315
      %1332 = vst.msk [vmem:[#allocation2 + $0x408] sm:$0xff] %vm290, %v1316
      %1333 = vst.msk [vmem:[#allocation2 + $0x410] sm:$0xff] %vm290, %v1317
      %1334 = vst.msk [vmem:[#allocation2 + $0x418] sm:$0xff] %vm290, %v1318
      %1335 = vst.msk [vmem:[#allocation2 + $0x420] sm:$0xff] %vm290, %v1319
      %1336 = vst.msk [vmem:[#allocation2 + $0x428] sm:$0xff] %vm290, %v1320
      %1337 = vst.msk [vmem:[#allocation2 + $0x430] sm:$0xff] %vm290, %v1321
      %1338 = vst.msk [vmem:[#allocation2 + $0x438] sm:$0xff] %vm290, %v1322
      %v1339 = vld [vmem:[%s273] sm:$0xff]
      %v1340 = vld [vmem:[%s273 + $0xc] sm:$0xff]
      %v1341 = vld [vmem:[%s273 + $0x18] sm:$0xff]
      %v1342 = vld [vmem:[%s273 + $0x24] sm:$0xff]
      %v1343 = vld [vmem:[%s273 + $0x30] sm:$0xff]
      %v1344 = vld [vmem:[%s273 + $0x3c] sm:$0xff]
      %v1345 = vld [vmem:[%s273 + $0x48] sm:$0xff]
      %v1346 = vld [vmem:[%s273 + $0x54] sm:$0xff]
      %1355 = vrot.lane.b32.xlu0 %v1339, 78
      %v1356 = vpop.permute.xlu0 %1355
      %1357 = vrot.lane.b32.xlu0 %v1340, 78
      %v1358 = vpop.permute.xlu0 %1357
      %1359 = vrot.lane.b32.xlu0 %v1341, 78
      %v1360 = vpop.permute.xlu0 %1359
      %1361 = vrot.lane.b32.xlu0 %v1342, 78
      %v1362 = vpop.permute.xlu0 %1361
      %1363 = vrot.lane.b32.xlu0 %v1343, 78
      %v1364 = vpop.permute.xlu0 %1363
      %1365 = vrot.lane.b32.xlu0 %v1344, 78
      %v1366 = vpop.permute.xlu0 %1365
      %1367 = vrot.lane.b32.xlu0 %v1345, 78
      %v1368 = vpop.permute.xlu0 %1367
      %1369 = vrot.lane.b32.xlu0 %v1346, 78
      %v1370 = vpop.permute.xlu0 %1369
      %v1371 = vrot.slane %v1356, 4
      %v1372 = vrot.slane %v1358, 4
      %v1373 = vrot.slane %v1360, 4
      %v1374 = vrot.slane %v1362, 4
      %v1375 = vrot.slane %v1364, 4
      %v1376 = vrot.slane %v1366, 4
      %v1377 = vrot.slane %v1368, 4
      %v1378 = vrot.slane %v1370, 4
      %vm1379 = vcmask 637952
      %v1380 = vsel %vm1379, %v1356, %v1371
      %v1381 = vsel %vm1379, %v1358, %v1372
      %v1382 = vsel %vm1379, %v1360, %v1373
      %v1383 = vsel %vm1379, %v1362, %v1374
      %v1384 = vsel %vm1379, %v1364, %v1375
      %v1385 = vsel %vm1379, %v1366, %v1376
      %v1386 = vsel %vm1379, %v1368, %v1377
      %v1387 = vsel %vm1379, %v1370, %v1378
      %1396 = vst.msk [vmem:[#allocation2 + $0x440] sm:$0xff] %vm290, %v1380
      %1397 = vst.msk [vmem:[#allocation2 + $0x448] sm:$0xff] %vm290, %v1381
      %1398 = vst.msk [vmem:[#allocation2 + $0x450] sm:$0xff] %vm290, %v1382
      %1399 = vst.msk [vmem:[#allocation2 + $0x458] sm:$0xff] %vm290, %v1383
      %1400 = vst.msk [vmem:[#allocation2 + $0x460] sm:$0xff] %vm290, %v1384
      %1401 = vst.msk [vmem:[#allocation2 + $0x468] sm:$0xff] %vm290, %v1385
      %1402 = vst.msk [vmem:[#allocation2 + $0x470] sm:$0xff] %vm290, %v1386
      %1403 = vst.msk [vmem:[#allocation2 + $0x478] sm:$0xff] %vm290, %v1387
      %v1404 = vld [vmem:[%s273] sm:$0xff]
      %v1405 = vld [vmem:[%s273 + $0xc] sm:$0xff]
      %v1406 = vld [vmem:[%s273 + $0x18] sm:$0xff]
      %v1407 = vld [vmem:[%s273 + $0x24] sm:$0xff]
      %v1408 = vld [vmem:[%s273 + $0x30] sm:$0xff]
      %v1409 = vld [vmem:[%s273 + $0x3c] sm:$0xff]
      %v1410 = vld [vmem:[%s273 + $0x48] sm:$0xff]
      %v1411 = vld [vmem:[%s273 + $0x54] sm:$0xff]
      %1420 = vrot.lane.b32.xlu0 %v1404, 77
      %v1421 = vpop.permute.xlu0 %1420
      %1422 = vrot.lane.b32.xlu0 %v1405, 77
      %v1423 = vpop.permute.xlu0 %1422
      %1424 = vrot.lane.b32.xlu0 %v1406, 77
      %v1425 = vpop.permute.xlu0 %1424
      %1426 = vrot.lane.b32.xlu0 %v1407, 77
      %v1427 = vpop.permute.xlu0 %1426
      %1428 = vrot.lane.b32.xlu0 %v1408, 77
      %v1429 = vpop.permute.xlu0 %1428
      %1430 = vrot.lane.b32.xlu0 %v1409, 77
      %v1431 = vpop.permute.xlu0 %1430
      %1432 = vrot.lane.b32.xlu0 %v1410, 77
      %v1433 = vpop.permute.xlu0 %1432
      %1434 = vrot.lane.b32.xlu0 %v1411, 77
      %v1435 = vpop.permute.xlu0 %1434
      %v1436 = vrot.slane %v1421, 4
      %v1437 = vrot.slane %v1423, 4
      %v1438 = vrot.slane %v1425, 4
      %v1439 = vrot.slane %v1427, 4
      %v1440 = vrot.slane %v1429, 4
      %v1441 = vrot.slane %v1431, 4
      %v1442 = vrot.slane %v1433, 4
      %v1443 = vrot.slane %v1435, 4
      %vm1444 = vcmask 629760
      %v1445 = vsel %vm1444, %v1421, %v1436
      %v1446 = vsel %vm1444, %v1423, %v1437
      %v1447 = vsel %vm1444, %v1425, %v1438
      %v1448 = vsel %vm1444, %v1427, %v1439
      %v1449 = vsel %vm1444, %v1429, %v1440
      %v1450 = vsel %vm1444, %v1431, %v1441
      %v1451 = vsel %vm1444, %v1433, %v1442
      %v1452 = vsel %vm1444, %v1435, %v1443
      %1461 = vst.msk [vmem:[#allocation2 + $0x480] sm:$0xff] %vm290, %v1445
      %1462 = vst.msk [vmem:[#allocation2 + $0x488] sm:$0xff] %vm290, %v1446
      %1463 = vst.msk [vmem:[#allocation2 + $0x490] sm:$0xff] %vm290, %v1447
      %1464 = vst.msk [vmem:[#allocation2 + $0x498] sm:$0xff] %vm290, %v1448
      %1465 = vst.msk [vmem:[#allocation2 + $0x4a0] sm:$0xff] %vm290, %v1449
      %1466 = vst.msk [vmem:[#allocation2 + $0x4a8] sm:$0xff] %vm290, %v1450
      %1467 = vst.msk [vmem:[#allocation2 + $0x4b0] sm:$0xff] %vm290, %v1451
      %1468 = vst.msk [vmem:[#allocation2 + $0x4b8] sm:$0xff] %vm290, %v1452
      %v1469 = vld [vmem:[%s273] sm:$0xff]
      %v1470 = vld [vmem:[%s273 + $0xc] sm:$0xff]
      %v1471 = vld [vmem:[%s273 + $0x18] sm:$0xff]
      %v1472 = vld [vmem:[%s273 + $0x24] sm:$0xff]
      %v1473 = vld [vmem:[%s273 + $0x30] sm:$0xff]
      %v1474 = vld [vmem:[%s273 + $0x3c] sm:$0xff]
      %v1475 = vld [vmem:[%s273 + $0x48] sm:$0xff]
      %v1476 = vld [vmem:[%s273 + $0x54] sm:$0xff]
      %1485 = vrot.lane.b32.xlu0 %v1469, 76
      %v1486 = vpop.permute.xlu0 %1485
      %1487 = vrot.lane.b32.xlu0 %v1470, 76
      %v1488 = vpop.permute.xlu0 %1487
      %1489 = vrot.lane.b32.xlu0 %v1471, 76
      %v1490 = vpop.permute.xlu0 %1489
      %1491 = vrot.lane.b32.xlu0 %v1472, 76
      %v1492 = vpop.permute.xlu0 %1491
      %1493 = vrot.lane.b32.xlu0 %v1473, 76
      %v1494 = vpop.permute.xlu0 %1493
      %1495 = vrot.lane.b32.xlu0 %v1474, 76
      %v1496 = vpop.permute.xlu0 %1495
      %1497 = vrot.lane.b32.xlu0 %v1475, 76
      %v1498 = vpop.permute.xlu0 %1497
      %1499 = vrot.lane.b32.xlu0 %v1476, 76
      %v1500 = vpop.permute.xlu0 %1499
      %v1501 = vrot.slane %v1486, 4
      %v1502 = vrot.slane %v1488, 4
      %v1503 = vrot.slane %v1490, 4
      %v1504 = vrot.slane %v1492, 4
      %v1505 = vrot.slane %v1494, 4
      %v1506 = vrot.slane %v1496, 4
      %v1507 = vrot.slane %v1498, 4
      %v1508 = vrot.slane %v1500, 4
      %vm1509 = vcmask 621568
      %v1510 = vsel %vm1509, %v1486, %v1501
      %v1511 = vsel %vm1509, %v1488, %v1502
      %v1512 = vsel %vm1509, %v1490, %v1503
      %v1513 = vsel %vm1509, %v1492, %v1504
      %v1514 = vsel %vm1509, %v1494, %v1505
      %v1515 = vsel %vm1509, %v1496, %v1506
      %v1516 = vsel %vm1509, %v1498, %v1507
      %v1517 = vsel %vm1509, %v1500, %v1508
      %1526 = vst.msk [vmem:[#allocation2 + $0x4c0] sm:$0xff] %vm290, %v1510
      %1527 = vst.msk [vmem:[#allocation2 + $0x4c8] sm:$0xff] %vm290, %v1511
      %1528 = vst.msk [vmem:[#allocation2 + $0x4d0] sm:$0xff] %vm290, %v1512
      %1529 = vst.msk [vmem:[#allocation2 + $0x4d8] sm:$0xff] %vm290, %v1513
      %1530 = vst.msk [vmem:[#allocation2 + $0x4e0] sm:$0xff] %vm290, %v1514
      %1531 = vst.msk [vmem:[#allocation2 + $0x4e8] sm:$0xff] %vm290, %v1515
      %1532 = vst.msk [vmem:[#allocation2 + $0x4f0] sm:$0xff] %vm290, %v1516
      %1533 = vst.msk [vmem:[#allocation2 + $0x4f8] sm:$0xff] %vm290, %v1517
      %v1534 = vld [vmem:[%s273] sm:$0xff]
      %v1535 = vld [vmem:[%s273 + $0xc] sm:$0xff]
      %v1536 = vld [vmem:[%s273 + $0x18] sm:$0xff]
      %v1537 = vld [vmem:[%s273 + $0x24] sm:$0xff]
      %v1538 = vld [vmem:[%s273 + $0x30] sm:$0xff]
      %v1539 = vld [vmem:[%s273 + $0x3c] sm:$0xff]
      %v1540 = vld [vmem:[%s273 + $0x48] sm:$0xff]
      %v1541 = vld [vmem:[%s273 + $0x54] sm:$0xff]
      %1550 = vrot.lane.b32.xlu0 %v1534, 64
      %v1551 = vpop.permute.xlu0 %1550
      %1552 = vrot.lane.b32.xlu0 %v1535, 64
      %v1553 = vpop.permute.xlu0 %1552
      %1554 = vrot.lane.b32.xlu0 %v1536, 64
      %v1555 = vpop.permute.xlu0 %1554
      %1556 = vrot.lane.b32.xlu0 %v1537, 64
      %v1557 = vpop.permute.xlu0 %1556
      %1558 = vrot.lane.b32.xlu0 %v1538, 64
      %v1559 = vpop.permute.xlu0 %1558
      %1560 = vrot.lane.b32.xlu0 %v1539, 64
      %v1561 = vpop.permute.xlu0 %1560
      %1562 = vrot.lane.b32.xlu0 %v1540, 64
      %v1563 = vpop.permute.xlu0 %1562
      %1564 = vrot.lane.b32.xlu0 %v1541, 64
      %v1565 = vpop.permute.xlu0 %1564
      %v1566 = vrot.slane %v1551, 4
      %v1567 = vrot.slane %v1553, 4
      %v1568 = vrot.slane %v1555, 4
      %v1569 = vrot.slane %v1557, 4
      %v1570 = vrot.slane %v1559, 4
      %v1571 = vrot.slane %v1561, 4
      %v1572 = vrot.slane %v1563, 4
      %v1573 = vrot.slane %v1565, 4
      %vm1574 = vcmask 523264
      %v1575 = vsel %vm1574, %v1551, %v1566
      %v1576 = vsel %vm1574, %v1553, %v1567
      %v1577 = vsel %vm1574, %v1555, %v1568
      %v1578 = vsel %vm1574, %v1557, %v1569
      %v1579 = vsel %vm1574, %v1559, %v1570
      %v1580 = vsel %vm1574, %v1561, %v1571
      %v1581 = vsel %vm1574, %v1563, %v1572
      %v1582 = vsel %vm1574, %v1565, %v1573
      %1591 = vst.msk [vmem:[#allocation2 + $0x500] sm:$0xff] %vm290, %v1575
      %1592 = vst.msk [vmem:[#allocation2 + $0x508] sm:$0xff] %vm290, %v1576
      %1593 = vst.msk [vmem:[#allocation2 + $0x510] sm:$0xff] %vm290, %v1577
      %1594 = vst.msk [vmem:[#allocation2 + $0x518] sm:$0xff] %vm290, %v1578
      %1595 = vst.msk [vmem:[#allocation2 + $0x520] sm:$0xff] %vm290, %v1579
      %1596 = vst.msk [vmem:[#allocation2 + $0x528] sm:$0xff] %vm290, %v1580
      %1597 = vst.msk [vmem:[#allocation2 + $0x530] sm:$0xff] %vm290, %v1581
      %1598 = vst.msk [vmem:[#allocation2 + $0x538] sm:$0xff] %vm290, %v1582
      %v1599 = vld [vmem:[%s273] sm:$0xff]
      %v1600 = vld [vmem:[%s273 + $0x8] sm:$0xf]
      %v1601 = vld [vmem:[%s273 + $0xc] sm:$0xff]
      %v1602 = vld [vmem:[%s273 + $0x14] sm:$0xf]
      %v1603 = vld [vmem:[%s273 + $0x18] sm:$0xff]
      %v1604 = vld [vmem:[%s273 + $0x20] sm:$0xf]
      %v1605 = vld [vmem:[%s273 + $0x24] sm:$0xff]
      %v1606 = vld [vmem:[%s273 + $0x2c] sm:$0xf]
      %v1607 = vld [vmem:[%s273 + $0x30] sm:$0xff]
      %v1608 = vld [vmem:[%s273 + $0x38] sm:$0xf]
      %v1609 = vld [vmem:[%s273 + $0x3c] sm:$0xff]
      %v1610 = vld [vmem:[%s273 + $0x44] sm:$0xf]
      %v1611 = vld [vmem:[%s273 + $0x48] sm:$0xff]
      %v1612 = vld [vmem:[%s273 + $0x50] sm:$0xf]
      %v1613 = vld [vmem:[%s273 + $0x54] sm:$0xff]
      %v1614 = vld [vmem:[%s273 + $0x5c] sm:$0xf]
      %1631 = vrot.lane.b32.xlu0 %v1599, 63
      %v1632 = vpop.permute.xlu0 %1631
      %1633 = vrot.lane.b32.xlu0 %v1600, 63
      %v1634 = vpop.permute.xlu0 %1633
      %1635 = vrot.lane.b32.xlu0 %v1601, 63
      %v1636 = vpop.permute.xlu0 %1635
      %1637 = vrot.lane.b32.xlu0 %v1602, 63
      %v1638 = vpop.permute.xlu0 %1637
      %1639 = vrot.lane.b32.xlu0 %v1603, 63
      %v1640 = vpop.permute.xlu0 %1639
      %1641 = vrot.lane.b32.xlu0 %v1604, 63
      %v1642 = vpop.permute.xlu0 %1641
      %1643 = vrot.lane.b32.xlu0 %v1605, 63
      %v1644 = vpop.permute.xlu0 %1643
      %1645 = vrot.lane.b32.xlu0 %v1606, 63
      %v1646 = vpop.permute.xlu0 %1645
      %1647 = vrot.lane.b32.xlu0 %v1607, 63
      %v1648 = vpop.permute.xlu0 %1647
      %1649 = vrot.lane.b32.xlu0 %v1608, 63
      %v1650 = vpop.permute.xlu0 %1649
      %1651 = vrot.lane.b32.xlu0 %v1609, 63
      %v1652 = vpop.permute.xlu0 %1651
      %1653 = vrot.lane.b32.xlu0 %v1610, 63
      %v1654 = vpop.permute.xlu0 %1653
      %1655 = vrot.lane.b32.xlu0 %v1611, 63
      %v1656 = vpop.permute.xlu0 %1655
      %1657 = vrot.lane.b32.xlu0 %v1612, 63
      %v1658 = vpop.permute.xlu0 %1657
      %1659 = vrot.lane.b32.xlu0 %v1613, 63
      %v1660 = vpop.permute.xlu0 %1659
      %1661 = vrot.lane.b32.xlu0 %v1614, 63
      %v1662 = vpop.permute.xlu0 %1661
      %v1663 = vrot.slane %v1632, 4
      %v1664 = vrot.slane %v1634, 4
      %v1665 = vrot.slane %v1636, 4
      %v1666 = vrot.slane %v1638, 4
      %v1667 = vrot.slane %v1640, 4
      %v1668 = vrot.slane %v1642, 4
      %v1669 = vrot.slane %v1644, 4
      %v1670 = vrot.slane %v1646, 4
      %v1671 = vrot.slane %v1648, 4
      %v1672 = vrot.slane %v1650, 4
      %v1673 = vrot.slane %v1652, 4
      %v1674 = vrot.slane %v1654, 4
      %v1675 = vrot.slane %v1656, 4
      %v1676 = vrot.slane %v1658, 4
      %v1677 = vrot.slane %v1660, 4
      %v1678 = vrot.slane %v1662, 4
      %vm1679 = vcmask 1043456
      %v1680 = vsel %vm1679, %v1663, %v1664
      %vm1681 = vcmask 515072
      %v1682 = vsel %vm1681, %v1632, %v1680
      %v1683 = vsel %vm1679, %v1665, %v1666
      %v1684 = vsel %vm1681, %v1636, %v1683
      %v1685 = vsel %vm1679, %v1667, %v1668
      %v1686 = vsel %vm1681, %v1640, %v1685
      %v1687 = vsel %vm1679, %v1669, %v1670
      %v1688 = vsel %vm1681, %v1644, %v1687
      %v1689 = vsel %vm1679, %v1671, %v1672
      %v1690 = vsel %vm1681, %v1648, %v1689
      %v1691 = vsel %vm1679, %v1673, %v1674
      %v1692 = vsel %vm1681, %v1652, %v1691
      %v1693 = vsel %vm1679, %v1675, %v1676
      %v1694 = vsel %vm1681, %v1656, %v1693
      %v1695 = vsel %vm1679, %v1677, %v1678
      %v1696 = vsel %vm1681, %v1660, %v1695
      %1705 = vst.msk [vmem:[#allocation2 + $0x540] sm:$0xff] %vm290, %v1682
      %1706 = vst.msk [vmem:[#allocation2 + $0x548] sm:$0xff] %vm290, %v1684
      %1707 = vst.msk [vmem:[#allocation2 + $0x550] sm:$0xff] %vm290, %v1686
      %1708 = vst.msk [vmem:[#allocation2 + $0x558] sm:$0xff] %vm290, %v1688
      %1709 = vst.msk [vmem:[#allocation2 + $0x560] sm:$0xff] %vm290, %v1690
      %1710 = vst.msk [vmem:[#allocation2 + $0x568] sm:$0xff] %vm290, %v1692
      %1711 = vst.msk [vmem:[#allocation2 + $0x570] sm:$0xff] %vm290, %v1694
      %1712 = vst.msk [vmem:[#allocation2 + $0x578] sm:$0xff] %vm290, %v1696
      %v1713 = vld [vmem:[%s273] sm:$0xff]
      %v1714 = vld [vmem:[%s273 + $0x8] sm:$0xf]
      %v1715 = vld [vmem:[%s273 + $0xc] sm:$0xff]
      %v1716 = vld [vmem:[%s273 + $0x14] sm:$0xf]
      %v1717 = vld [vmem:[%s273 + $0x18] sm:$0xff]
      %v1718 = vld [vmem:[%s273 + $0x20] sm:$0xf]
      %v1719 = vld [vmem:[%s273 + $0x24] sm:$0xff]
      %v1720 = vld [vmem:[%s273 + $0x2c] sm:$0xf]
      %v1721 = vld [vmem:[%s273 + $0x30] sm:$0xff]
      %v1722 = vld [vmem:[%s273 + $0x38] sm:$0xf]
      %v1723 = vld [vmem:[%s273 + $0x3c] sm:$0xff]
      %v1724 = vld [vmem:[%s273 + $0x44] sm:$0xf]
      %v1725 = vld [vmem:[%s273 + $0x48] sm:$0xff]
      %v1726 = vld [vmem:[%s273 + $0x50] sm:$0xf]
      %v1727 = vld [vmem:[%s273 + $0x54] sm:$0xff]
      %v1728 = vld [vmem:[%s273 + $0x5c] sm:$0xf]
      %1745 = vrot.lane.b32.xlu0 %v1713, 62
      %v1746 = vpop.permute.xlu0 %1745
      %1747 = vrot.lane.b32.xlu0 %v1714, 62
      %v1748 = vpop.permute.xlu0 %1747
      %1749 = vrot.lane.b32.xlu0 %v1715, 62
      %v1750 = vpop.permute.xlu0 %1749
      %1751 = vrot.lane.b32.xlu0 %v1716, 62
      %v1752 = vpop.permute.xlu0 %1751
      %1753 = vrot.lane.b32.xlu0 %v1717, 62
      %v1754 = vpop.permute.xlu0 %1753
      %1755 = vrot.lane.b32.xlu0 %v1718, 62
      %v1756 = vpop.permute.xlu0 %1755
      %1757 = vrot.lane.b32.xlu0 %v1719, 62
      %v1758 = vpop.permute.xlu0 %1757
      %1759 = vrot.lane.b32.xlu0 %v1720, 62
      %v1760 = vpop.permute.xlu0 %1759
      %1761 = vrot.lane.b32.xlu0 %v1721, 62
      %v1762 = vpop.permute.xlu0 %1761
      %1763 = vrot.lane.b32.xlu0 %v1722, 62
      %v1764 = vpop.permute.xlu0 %1763
      %1765 = vrot.lane.b32.xlu0 %v1723, 62
      %v1766 = vpop.permute.xlu0 %1765
      %1767 = vrot.lane.b32.xlu0 %v1724, 62
      %v1768 = vpop.permute.xlu0 %1767
      %1769 = vrot.lane.b32.xlu0 %v1725, 62
      %v1770 = vpop.permute.xlu0 %1769
      %1771 = vrot.lane.b32.xlu0 %v1726, 62
      %v1772 = vpop.permute.xlu0 %1771
      %1773 = vrot.lane.b32.xlu0 %v1727, 62
      %v1774 = vpop.permute.xlu0 %1773
      %1775 = vrot.lane.b32.xlu0 %v1728, 62
      %v1776 = vpop.permute.xlu0 %1775
      %v1777 = vrot.slane %v1746, 4
      %v1778 = vrot.slane %v1748, 4
      %v1779 = vrot.slane %v1750, 4
      %v1780 = vrot.slane %v1752, 4
      %v1781 = vrot.slane %v1754, 4
      %v1782 = vrot.slane %v1756, 4
      %v1783 = vrot.slane %v1758, 4
      %v1784 = vrot.slane %v1760, 4
      %v1785 = vrot.slane %v1762, 4
      %v1786 = vrot.slane %v1764, 4
      %v1787 = vrot.slane %v1766, 4
      %v1788 = vrot.slane %v1768, 4
      %v1789 = vrot.slane %v1770, 4
      %v1790 = vrot.slane %v1772, 4
      %v1791 = vrot.slane %v1774, 4
      %v1792 = vrot.slane %v1776, 4
      %v1793 = vsel %vm1679, %v1777, %v1778
      %vm1794 = vcmask 506880
      %v1795 = vsel %vm1794, %v1746, %v1793
      %v1796 = vsel %vm1679, %v1779, %v1780
      %v1797 = vsel %vm1794, %v1750, %v1796
      %v1798 = vsel %vm1679, %v1781, %v1782
      %v1799 = vsel %vm1794, %v1754, %v1798
      %v1800 = vsel %vm1679, %v1783, %v1784
      %v1801 = vsel %vm1794, %v1758, %v1800
      %v1802 = vsel %vm1679, %v1785, %v1786
      %v1803 = vsel %vm1794, %v1762, %v1802
      %v1804 = vsel %vm1679, %v1787, %v1788
      %v1805 = vsel %vm1794, %v1766, %v1804
      %v1806 = vsel %vm1679, %v1789, %v1790
      %v1807 = vsel %vm1794, %v1770, %v1806
      %v1808 = vsel %vm1679, %v1791, %v1792
      %v1809 = vsel %vm1794, %v1774, %v1808
      %1818 = vst.msk [vmem:[#allocation2 + $0x580] sm:$0xff] %vm290, %v1795
      %1819 = vst.msk [vmem:[#allocation2 + $0x588] sm:$0xff] %vm290, %v1797
      %1820 = vst.msk [vmem:[#allocation2 + $0x590] sm:$0xff] %vm290, %v1799
      %1821 = vst.msk [vmem:[#allocation2 + $0x598] sm:$0xff] %vm290, %v1801
      %1822 = vst.msk [vmem:[#allocation2 + $0x5a0] sm:$0xff] %vm290, %v1803
      %1823 = vst.msk [vmem:[#allocation2 + $0x5a8] sm:$0xff] %vm290, %v1805
      %1824 = vst.msk [vmem:[#allocation2 + $0x5b0] sm:$0xff] %vm290, %v1807
      %1825 = vst.msk [vmem:[#allocation2 + $0x5b8] sm:$0xff] %vm290, %v1809
      %v1826 = vld [vmem:[%s273] sm:$0xff]
      %v1827 = vld [vmem:[%s273 + $0x8] sm:$0xf]
      %v1828 = vld [vmem:[%s273 + $0xc] sm:$0xff]
      %v1829 = vld [vmem:[%s273 + $0x14] sm:$0xf]
      %v1830 = vld [vmem:[%s273 + $0x18] sm:$0xff]
      %v1831 = vld [vmem:[%s273 + $0x20] sm:$0xf]
      %v1832 = vld [vmem:[%s273 + $0x24] sm:$0xff]
      %v1833 = vld [vmem:[%s273 + $0x2c] sm:$0xf]
      %v1834 = vld [vmem:[%s273 + $0x30] sm:$0xff]
      %v1835 = vld [vmem:[%s273 + $0x38] sm:$0xf]
      %v1836 = vld [vmem:[%s273 + $0x3c] sm:$0xff]
      %v1837 = vld [vmem:[%s273 + $0x44] sm:$0xf]
      %v1838 = vld [vmem:[%s273 + $0x48] sm:$0xff]
      %v1839 = vld [vmem:[%s273 + $0x50] sm:$0xf]
      %v1840 = vld [vmem:[%s273 + $0x54] sm:$0xff]
      %v1841 = vld [vmem:[%s273 + $0x5c] sm:$0xf]
      %1858 = vrot.lane.b32.xlu0 %v1826, 61
      %v1859 = vpop.permute.xlu0 %1858
      %1860 = vrot.lane.b32.xlu0 %v1827, 61
      %v1861 = vpop.permute.xlu0 %1860
      %1862 = vrot.lane.b32.xlu0 %v1828, 61
      %v1863 = vpop.permute.xlu0 %1862
      %1864 = vrot.lane.b32.xlu0 %v1829, 61
      %v1865 = vpop.permute.xlu0 %1864
      %1866 = vrot.lane.b32.xlu0 %v1830, 61
      %v1867 = vpop.permute.xlu0 %1866
      %1868 = vrot.lane.b32.xlu0 %v1831, 61
      %v1869 = vpop.permute.xlu0 %1868
      %1870 = vrot.lane.b32.xlu0 %v1832, 61
      %v1871 = vpop.permute.xlu0 %1870
      %1872 = vrot.lane.b32.xlu0 %v1833, 61
      %v1873 = vpop.permute.xlu0 %1872
      %1874 = vrot.lane.b32.xlu0 %v1834, 61
      %v1875 = vpop.permute.xlu0 %1874
      %1876 = vrot.lane.b32.xlu0 %v1835, 61
      %v1877 = vpop.permute.xlu0 %1876
      %1878 = vrot.lane.b32.xlu0 %v1836, 61
      %v1879 = vpop.permute.xlu0 %1878
      %1880 = vrot.lane.b32.xlu0 %v1837, 61
      %v1881 = vpop.permute.xlu0 %1880
      %1882 = vrot.lane.b32.xlu0 %v1838, 61
      %v1883 = vpop.permute.xlu0 %1882
      %1884 = vrot.lane.b32.xlu0 %v1839, 61
      %v1885 = vpop.permute.xlu0 %1884
      %1886 = vrot.lane.b32.xlu0 %v1840, 61
      %v1887 = vpop.permute.xlu0 %1886
      %1888 = vrot.lane.b32.xlu0 %v1841, 61
      %v1889 = vpop.permute.xlu0 %1888
      %v1890 = vrot.slane %v1859, 4
      %v1891 = vrot.slane %v1861, 4
      %v1892 = vrot.slane %v1863, 4
      %v1893 = vrot.slane %v1865, 4
      %v1894 = vrot.slane %v1867, 4
      %v1895 = vrot.slane %v1869, 4
      %v1896 = vrot.slane %v1871, 4
      %v1897 = vrot.slane %v1873, 4
      %v1898 = vrot.slane %v1875, 4
      %v1899 = vrot.slane %v1877, 4
      %v1900 = vrot.slane %v1879, 4
      %v1901 = vrot.slane %v1881, 4
      %v1902 = vrot.slane %v1883, 4
      %v1903 = vrot.slane %v1885, 4
      %v1904 = vrot.slane %v1887, 4
      %v1905 = vrot.slane %v1889, 4
      %v1906 = vsel %vm1679, %v1890, %v1891
      %vm1907 = vcmask 498688
      %v1908 = vsel %vm1907, %v1859, %v1906
      %v1909 = vsel %vm1679, %v1892, %v1893
      %v1910 = vsel %vm1907, %v1863, %v1909
      %v1911 = vsel %vm1679, %v1894, %v1895
      %v1912 = vsel %vm1907, %v1867, %v1911
      %v1913 = vsel %vm1679, %v1896, %v1897
      %v1914 = vsel %vm1907, %v1871, %v1913
      %v1915 = vsel %vm1679, %v1898, %v1899
      %v1916 = vsel %vm1907, %v1875, %v1915
      %v1917 = vsel %vm1679, %v1900, %v1901
      %v1918 = vsel %vm1907, %v1879, %v1917
      %v1919 = vsel %vm1679, %v1902, %v1903
      %v1920 = vsel %vm1907, %v1883, %v1919
      %v1921 = vsel %vm1679, %v1904, %v1905
      %v1922 = vsel %vm1907, %v1887, %v1921
      %1931 = vst.msk [vmem:[#allocation2 + $0x5c0] sm:$0xff] %vm290, %v1908
      %1932 = vst.msk [vmem:[#allocation2 + $0x5c8] sm:$0xff] %vm290, %v1910
      %1933 = vst.msk [vmem:[#allocation2 + $0x5d0] sm:$0xff] %vm290, %v1912
      %1934 = vst.msk [vmem:[#allocation2 + $0x5d8] sm:$0xff] %vm290, %v1914
      %1935 = vst.msk [vmem:[#allocation2 + $0x5e0] sm:$0xff] %vm290, %v1916
      %1936 = vst.msk [vmem:[#allocation2 + $0x5e8] sm:$0xff] %vm290, %v1918
      %1937 = vst.msk [vmem:[#allocation2 + $0x5f0] sm:$0xff] %vm290, %v1920
      %1938 = vst.msk [vmem:[#allocation2 + $0x5f8] sm:$0xff] %vm290, %v1922
      %v1939 = vld [vmem:[%s273] sm:$0xff]
      %v1940 = vld [vmem:[%s273 + $0x8] sm:$0xf]
      %v1941 = vld [vmem:[%s273 + $0xc] sm:$0xff]
      %v1942 = vld [vmem:[%s273 + $0x14] sm:$0xf]
      %v1943 = vld [vmem:[%s273 + $0x18] sm:$0xff]
      %v1944 = vld [vmem:[%s273 + $0x20] sm:$0xf]
      %v1945 = vld [vmem:[%s273 + $0x24] sm:$0xff]
      %v1946 = vld [vmem:[%s273 + $0x2c] sm:$0xf]
      %v1947 = vld [vmem:[%s273 + $0x30] sm:$0xff]
      %v1948 = vld [vmem:[%s273 + $0x38] sm:$0xf]
      %v1949 = vld [vmem:[%s273 + $0x3c] sm:$0xff]
      %v1950 = vld [vmem:[%s273 + $0x44] sm:$0xf]
      %v1951 = vld [vmem:[%s273 + $0x48] sm:$0xff]
      %v1952 = vld [vmem:[%s273 + $0x50] sm:$0xf]
      %v1953 = vld [vmem:[%s273 + $0x54] sm:$0xff]
      %v1954 = vld [vmem:[%s273 + $0x5c] sm:$0xf]
      %1971 = vrot.lane.b32.xlu0 %v1939, 60
      %v1972 = vpop.permute.xlu0 %1971
      %1973 = vrot.lane.b32.xlu0 %v1940, 60
      %v1974 = vpop.permute.xlu0 %1973
      %1975 = vrot.lane.b32.xlu0 %v1941, 60
      %v1976 = vpop.permute.xlu0 %1975
      %1977 = vrot.lane.b32.xlu0 %v1942, 60
      %v1978 = vpop.permute.xlu0 %1977
      %1979 = vrot.lane.b32.xlu0 %v1943, 60
      %v1980 = vpop.permute.xlu0 %1979
      %1981 = vrot.lane.b32.xlu0 %v1944, 60
      %v1982 = vpop.permute.xlu0 %1981
      %1983 = vrot.lane.b32.xlu0 %v1945, 60
      %v1984 = vpop.permute.xlu0 %1983
      %1985 = vrot.lane.b32.xlu0 %v1946, 60
      %v1986 = vpop.permute.xlu0 %1985
      %1987 = vrot.lane.b32.xlu0 %v1947, 60
      %v1988 = vpop.permute.xlu0 %1987
      %1989 = vrot.lane.b32.xlu0 %v1948, 60
      %v1990 = vpop.permute.xlu0 %1989
      %1991 = vrot.lane.b32.xlu0 %v1949, 60
      %v1992 = vpop.permute.xlu0 %1991
      %1993 = vrot.lane.b32.xlu0 %v1950, 60
      %v1994 = vpop.permute.xlu0 %1993
      %1995 = vrot.lane.b32.xlu0 %v1951, 60
      %v1996 = vpop.permute.xlu0 %1995
      %1997 = vrot.lane.b32.xlu0 %v1952, 60
      %v1998 = vpop.permute.xlu0 %1997
      %1999 = vrot.lane.b32.xlu0 %v1953, 60
      %v2000 = vpop.permute.xlu0 %1999
      %2001 = vrot.lane.b32.xlu0 %v1954, 60
      %v2002 = vpop.permute.xlu0 %2001
      %v2003 = vrot.slane %v1972, 4
      %v2004 = vrot.slane %v1974, 4
      %v2005 = vrot.slane %v1976, 4
      %v2006 = vrot.slane %v1978, 4
      %v2007 = vrot.slane %v1980, 4
      %v2008 = vrot.slane %v1982, 4
      %v2009 = vrot.slane %v1984, 4
      %v2010 = vrot.slane %v1986, 4
      %v2011 = vrot.slane %v1988, 4
      %v2012 = vrot.slane %v1990, 4
      %v2013 = vrot.slane %v1992, 4
      %v2014 = vrot.slane %v1994, 4
      %v2015 = vrot.slane %v1996, 4
      %v2016 = vrot.slane %v1998, 4
      %v2017 = vrot.slane %v2000, 4
      %v2018 = vrot.slane %v2002, 4
      %v2019 = vsel %vm1679, %v2003, %v2004
      %vm2020 = vcmask 490496
      %v2021 = vsel %vm2020, %v1972, %v2019
      %v2022 = vsel %vm1679, %v2005, %v2006
      %v2023 = vsel %vm2020, %v1976, %v2022
      %v2024 = vsel %vm1679, %v2007, %v2008
      %v2025 = vsel %vm2020, %v1980, %v2024
      %v2026 = vsel %vm1679, %v2009, %v2010
      %v2027 = vsel %vm2020, %v1984, %v2026
      %v2028 = vsel %vm1679, %v2011, %v2012
      %v2029 = vsel %vm2020, %v1988, %v2028
      %v2030 = vsel %vm1679, %v2013, %v2014
      %v2031 = vsel %vm2020, %v1992, %v2030
      %v2032 = vsel %vm1679, %v2015, %v2016
      %v2033 = vsel %vm2020, %v1996, %v2032
      %v2034 = vsel %vm1679, %v2017, %v2018
      %v2035 = vsel %vm2020, %v2000, %v2034
      %2044 = vst.msk [vmem:[#allocation2 + $0x600] sm:$0xff] %vm290, %v2021
      %2045 = vst.msk [vmem:[#allocation2 + $0x608] sm:$0xff] %vm290, %v2023
      %2046 = vst.msk [vmem:[#allocation2 + $0x610] sm:$0xff] %vm290, %v2025
      %2047 = vst.msk [vmem:[#allocation2 + $0x618] sm:$0xff] %vm290, %v2027
      %2048 = vst.msk [vmem:[#allocation2 + $0x620] sm:$0xff] %vm290, %v2029
      %2049 = vst.msk [vmem:[#allocation2 + $0x628] sm:$0xff] %vm290, %v2031
      %2050 = vst.msk [vmem:[#allocation2 + $0x630] sm:$0xff] %vm290, %v2033
      %2051 = vst.msk [vmem:[#allocation2 + $0x638] sm:$0xff] %vm290, %v2035
      %v2052 = vld [vmem:[%s1] sm:$0xff]
      %v2053 = vld [vmem:[%s1 + $0x8] sm:$0xff]
      %v2054 = vld [vmem:[%s1 + $0x10] sm:$0xff]
      %v2055 = vld [vmem:[%s1 + $0x18] sm:$0xff]
      %v2056 = vld [vmem:[%s1 + $0x20] sm:$0xff]
      %v2057 = vld [vmem:[%s1 + $0x28] sm:$0xff]
      %v2058 = vld [vmem:[%s1 + $0x30] sm:$0xf]
      %v2059 = vld [vmem:[%s1 + $0x34] sm:$0xff]
      %v2060 = vld [vmem:[%s1 + $0x3c] sm:$0xff]
      %v2061 = vld [vmem:[%s1 + $0x44] sm:$0xff]
      %v2062 = vld [vmem:[%s1 + $0x4c] sm:$0xff]
      %v2063 = vld [vmem:[%s1 + $0x54] sm:$0xff]
      %v2064 = vld [vmem:[%s1 + $0x5c] sm:$0xff]
      %v2065 = vld [vmem:[%s1 + $0x64] sm:$0xf]
      %v2066 = vld [vmem:[%s1 + $0x68] sm:$0xff]
      %v2067 = vld [vmem:[%s1 + $0x70] sm:$0xff]
      %v2068 = vld [vmem:[%s1 + $0x78] sm:$0xff]
      %v2069 = vld [vmem:[%s1 + $0x80] sm:$0xff]
      %v2070 = vld [vmem:[%s1 + $0x88] sm:$0xff]
      %v2071 = vld [vmem:[%s1 + $0x90] sm:$0xff]
      %v2072 = vld [vmem:[%s1 + $0x98] sm:$0xf]
      %v2073 = vld [vmem:[%s1 + $0x9c] sm:$0xff]
      %v2074 = vld [vmem:[%s1 + $0xa4] sm:$0xff]
      %v2075 = vld [vmem:[%s1 + $0xac] sm:$0xff]
      %v2076 = vld [vmem:[%s1 + $0xb4] sm:$0xff]
      %v2077 = vld [vmem:[%s1 + $0xbc] sm:$0xff]
      %v2078 = vld [vmem:[%s1 + $0xc4] sm:$0xff]
      %v2079 = vld [vmem:[%s1 + $0xcc] sm:$0xf]
      %v2080 = vld [vmem:[#allocation2] sm:$0xff]
      %v2081 = vld [vmem:[#allocation2 + $0x8] sm:$0xff]
      %v2082 = vld [vmem:[#allocation2 + $0x10] sm:$0xff]
      %v2083 = vld [vmem:[#allocation2 + $0x18] sm:$0xff]
      %v2084 = vld [vmem:[#allocation2 + $0x20] sm:$0xff]
      %v2085 = vld [vmem:[#allocation2 + $0x28] sm:$0xff]
      %v2086 = vld [vmem:[#allocation2 + $0x30] sm:$0xff]
      %v2087 = vld [vmem:[#allocation2 + $0x38] sm:$0xff]
      %v2088 = vld [vmem:[#allocation2 + $0x40] sm:$0xff]
      %v2089 = vld [vmem:[#allocation2 + $0x48] sm:$0xff]
      %v2090 = vld [vmem:[#allocation2 + $0x50] sm:$0xff]
      %v2091 = vld [vmem:[#allocation2 + $0x58] sm:$0xff]
      %v2092 = vld [vmem:[#allocation2 + $0x60] sm:$0xff]
      %v2093 = vld [vmem:[#allocation2 + $0x68] sm:$0xff]
      %v2094 = vld [vmem:[#allocation2 + $0x70] sm:$0xff]
      %v2095 = vld [vmem:[#allocation2 + $0x78] sm:$0xff]
      %v2096 = vld [vmem:[#allocation2 + $0x80] sm:$0xff]
      %v2097 = vld [vmem:[#allocation2 + $0x88] sm:$0xff]
      %v2098 = vld [vmem:[#allocation2 + $0x90] sm:$0xff]
      %v2099 = vld [vmem:[#allocation2 + $0x98] sm:$0xff]
      %v2100 = vld [vmem:[#allocation2 + $0xa0] sm:$0xff]
      %v2101 = vld [vmem:[#allocation2 + $0xa8] sm:$0xff]
      %v2102 = vld [vmem:[#allocation2 + $0xb0] sm:$0xff]
      %v2103 = vld [vmem:[#allocation2 + $0xb8] sm:$0xff]
      %v2104 = vld [vmem:[#allocation2 + $0xc0] sm:$0xff]
      %v2105 = vld [vmem:[#allocation2 + $0xc8] sm:$0xff]
      %v2106 = vld [vmem:[#allocation2 + $0xd0] sm:$0xff]
      %v2107 = vld [vmem:[#allocation2 + $0xd8] sm:$0xff]
      %v2108 = vld [vmem:[#allocation2 + $0xe0] sm:$0xff]
      %v2109 = vld [vmem:[#allocation2 + $0xe8] sm:$0xff]
      %v2110 = vld [vmem:[#allocation2 + $0xf0] sm:$0xff]
      %v2111 = vld [vmem:[#allocation2 + $0xf8] sm:$0xff]
      %v2112 = vld [vmem:[#allocation2 + $0x100] sm:$0xff]
      %v2113 = vld [vmem:[#allocation2 + $0x108] sm:$0xff]
      %v2114 = vld [vmem:[#allocation2 + $0x110] sm:$0xff]
      %v2115 = vld [vmem:[#allocation2 + $0x118] sm:$0xff]
      %v2116 = vld [vmem:[#allocation2 + $0x120] sm:$0xff]
      %v2117 = vld [vmem:[#allocation2 + $0x128] sm:$0xff]
      %v2118 = vld [vmem:[#allocation2 + $0x130] sm:$0xff]
      %v2119 = vld [vmem:[#allocation2 + $0x138] sm:$0xff]
      %v2120 = vld [vmem:[#allocation2 + $0x140] sm:$0xff]
      %v2121 = vld [vmem:[#allocation2 + $0x148] sm:$0xff]
      %v2122 = vld [vmem:[#allocation2 + $0x150] sm:$0xff]
      %v2123 = vld [vmem:[#allocation2 + $0x158] sm:$0xff]
      %v2124 = vld [vmem:[#allocation2 + $0x160] sm:$0xff]
      %v2125 = vld [vmem:[#allocation2 + $0x168] sm:$0xff]
      %v2126 = vld [vmem:[#allocation2 + $0x170] sm:$0xff]
      %v2127 = vld [vmem:[#allocation2 + $0x178] sm:$0xff]
      %v2128 = vld [vmem:[#allocation2 + $0x180] sm:$0xff]
      %v2129 = vld [vmem:[#allocation2 + $0x188] sm:$0xff]
      %v2130 = vld [vmem:[#allocation2 + $0x190] sm:$0xff]
      %v2131 = vld [vmem:[#allocation2 + $0x198] sm:$0xff]
      %v2132 = vld [vmem:[#allocation2 + $0x1a0] sm:$0xff]
      %v2133 = vld [vmem:[#allocation2 + $0x1a8] sm:$0xff]
      %v2134 = vld [vmem:[#allocation2 + $0x1b0] sm:$0xff]
      %v2135 = vld [vmem:[#allocation2 + $0x1b8] sm:$0xff]
      %v2136 = vld [vmem:[#allocation2 + $0x1c0] sm:$0xff]
      %v2137 = vld [vmem:[#allocation2 + $0x1c8] sm:$0xff]
      %v2138 = vld [vmem:[#allocation2 + $0x1d0] sm:$0xff]
      %v2139 = vld [vmem:[#allocation2 + $0x1d8] sm:$0xff]
      %v2140 = vld [vmem:[#allocation2 + $0x1e0] sm:$0xff]
      %v2141 = vld [vmem:[#allocation2 + $0x1e8] sm:$0xff]
      %v2142 = vld [vmem:[#allocation2 + $0x1f0] sm:$0xff]
      %v2143 = vld [vmem:[#allocation2 + $0x1f8] sm:$0xff]
      %v2144 = vld [vmem:[#allocation2 + $0x200] sm:$0xff]
      %v2145 = vld [vmem:[#allocation2 + $0x208] sm:$0xff]
      %v2146 = vld [vmem:[#allocation2 + $0x210] sm:$0xff]
      %v2147 = vld [vmem:[#allocation2 + $0x218] sm:$0xff]
      %v2148 = vld [vmem:[#allocation2 + $0x220] sm:$0xff]
      %v2149 = vld [vmem:[#allocation2 + $0x228] sm:$0xff]
      %v2150 = vld [vmem:[#allocation2 + $0x230] sm:$0xff]
      %v2151 = vld [vmem:[#allocation2 + $0x238] sm:$0xff]
      %v2152 = vld [vmem:[#allocation2 + $0x240] sm:$0xff]
      %v2153 = vld [vmem:[#allocation2 + $0x248] sm:$0xff]
      %v2154 = vld [vmem:[#allocation2 + $0x250] sm:$0xff]
      %v2155 = vld [vmem:[#allocation2 + $0x258] sm:$0xff]
      %v2156 = vld [vmem:[#allocation2 + $0x260] sm:$0xff]
      %v2157 = vld [vmem:[#allocation2 + $0x268] sm:$0xff]
      %v2158 = vld [vmem:[#allocation2 + $0x270] sm:$0xff]
      %v2159 = vld [vmem:[#allocation2 + $0x278] sm:$0xff]
      %v2160 = vld [vmem:[#allocation2 + $0x280] sm:$0xff]
      %v2161 = vld [vmem:[#allocation2 + $0x288] sm:$0xff]
      %v2162 = vld [vmem:[#allocation2 + $0x290] sm:$0xff]
      %v2163 = vld [vmem:[#allocation2 + $0x298] sm:$0xff]
      %v2164 = vld [vmem:[#allocation2 + $0x2a0] sm:$0xff]
      %v2165 = vld [vmem:[#allocation2 + $0x2a8] sm:$0xff]
      %v2166 = vld [vmem:[#allocation2 + $0x2b0] sm:$0xff]
      %v2167 = vld [vmem:[#allocation2 + $0x2b8] sm:$0xff]
      %v2168 = vld [vmem:[#allocation2 + $0x2c0] sm:$0xff]
      %v2169 = vld [vmem:[#allocation2 + $0x2c8] sm:$0xff]
      %v2170 = vld [vmem:[#allocation2 + $0x2d0] sm:$0xff]
      %v2171 = vld [vmem:[#allocation2 + $0x2d8] sm:$0xff]
      %v2172 = vld [vmem:[#allocation2 + $0x2e0] sm:$0xff]
      %v2173 = vld [vmem:[#allocation2 + $0x2e8] sm:$0xff]
      %v2174 = vld [vmem:[#allocation2 + $0x2f0] sm:$0xff]
      %v2175 = vld [vmem:[#allocation2 + $0x2f8] sm:$0xff]
      %v2176 = vld [vmem:[#allocation2 + $0x300] sm:$0xff]
      %v2177 = vld [vmem:[#allocation2 + $0x308] sm:$0xff]
      %v2178 = vld [vmem:[#allocation2 + $0x310] sm:$0xff]
      %v2179 = vld [vmem:[#allocation2 + $0x318] sm:$0xff]
      %v2180 = vld [vmem:[#allocation2 + $0x320] sm:$0xff]
      %v2181 = vld [vmem:[#allocation2 + $0x328] sm:$0xff]
      %v2182 = vld [vmem:[#allocation2 + $0x330] sm:$0xff]
      %v2183 = vld [vmem:[#allocation2 + $0x338] sm:$0xff]
      %v2184 = vld [vmem:[#allocation2 + $0x340] sm:$0xff]
      %v2185 = vld [vmem:[#allocation2 + $0x348] sm:$0xff]
      %v2186 = vld [vmem:[#allocation2 + $0x350] sm:$0xff]
      %v2187 = vld [vmem:[#allocation2 + $0x358] sm:$0xff]
      %v2188 = vld [vmem:[#allocation2 + $0x360] sm:$0xff]
      %v2189 = vld [vmem:[#allocation2 + $0x368] sm:$0xff]
      %v2190 = vld [vmem:[#allocation2 + $0x370] sm:$0xff]
      %v2191 = vld [vmem:[#allocation2 + $0x378] sm:$0xff]
      %v2192 = vld [vmem:[#allocation2 + $0x380] sm:$0xff]
      %v2193 = vld [vmem:[#allocation2 + $0x388] sm:$0xff]
      %v2194 = vld [vmem:[#allocation2 + $0x390] sm:$0xff]
      %v2195 = vld [vmem:[#allocation2 + $0x398] sm:$0xff]
      %v2196 = vld [vmem:[#allocation2 + $0x3a0] sm:$0xff]
      %v2197 = vld [vmem:[#allocation2 + $0x3a8] sm:$0xff]
      %v2198 = vld [vmem:[#allocation2 + $0x3b0] sm:$0xff]
      %v2199 = vld [vmem:[#allocation2 + $0x3b8] sm:$0xff]
      %v2200 = vld [vmem:[#allocation2 + $0x3c0] sm:$0xff]
      %v2201 = vld [vmem:[#allocation2 + $0x3c8] sm:$0xff]
      %v2202 = vld [vmem:[#allocation2 + $0x3d0] sm:$0xff]
      %v2203 = vld [vmem:[#allocation2 + $0x3d8] sm:$0xff]
      %v2204 = vld [vmem:[#allocation2 + $0x3e0] sm:$0xff]
      %v2205 = vld [vmem:[#allocation2 + $0x3e8] sm:$0xff]
      %v2206 = vld [vmem:[#allocation2 + $0x3f0] sm:$0xff]
      %v2207 = vld [vmem:[#allocation2 + $0x3f8] sm:$0xff]
      %v2208 = vld [vmem:[#allocation2 + $0x400] sm:$0xff]
      %v2209 = vld [vmem:[#allocation2 + $0x408] sm:$0xff]
      %v2210 = vld [vmem:[#allocation2 + $0x410] sm:$0xff]
      %v2211 = vld [vmem:[#allocation2 + $0x418] sm:$0xff]
      %v2212 = vld [vmem:[#allocation2 + $0x420] sm:$0xff]
      %v2213 = vld [vmem:[#allocation2 + $0x428] sm:$0xff]
      %v2214 = vld [vmem:[#allocation2 + $0x430] sm:$0xff]
      %v2215 = vld [vmem:[#allocation2 + $0x438] sm:$0xff]
      %v2216 = vld [vmem:[#allocation2 + $0x440] sm:$0xff]
      %v2217 = vld [vmem:[#allocation2 + $0x448] sm:$0xff]
      %v2218 = vld [vmem:[#allocation2 + $0x450] sm:$0xff]
      %v2219 = vld [vmem:[#allocation2 + $0x458] sm:$0xff]
      %v2220 = vld [vmem:[#allocation2 + $0x460] sm:$0xff]
      %v2221 = vld [vmem:[#allocation2 + $0x468] sm:$0xff]
      %v2222 = vld [vmem:[#allocation2 + $0x470] sm:$0xff]
      %v2223 = vld [vmem:[#allocation2 + $0x478] sm:$0xff]
      %v2224 = vld [vmem:[#allocation2 + $0x480] sm:$0xff]
      %v2225 = vld [vmem:[#allocation2 + $0x488] sm:$0xff]
      %v2226 = vld [vmem:[#allocation2 + $0x490] sm:$0xff]
      %v2227 = vld [vmem:[#allocation2 + $0x498] sm:$0xff]
      %v2228 = vld [vmem:[#allocation2 + $0x4a0] sm:$0xff]
      %v2229 = vld [vmem:[#allocation2 + $0x4a8] sm:$0xff]
      %v2230 = vld [vmem:[#allocation2 + $0x4b0] sm:$0xff]
      %v2231 = vld [vmem:[#allocation2 + $0x4b8] sm:$0xff]
      %v2232 = vld [vmem:[#allocation2 + $0x4c0] sm:$0xff]
      %v2233 = vld [vmem:[#allocation2 + $0x4c8] sm:$0xff]
      %v2234 = vld [vmem:[#allocation2 + $0x4d0] sm:$0xff]
      %v2235 = vld [vmem:[#allocation2 + $0x4d8] sm:$0xff]
      %v2236 = vld [vmem:[#allocation2 + $0x4e0] sm:$0xff]
      %v2237 = vld [vmem:[#allocation2 + $0x4e8] sm:$0xff]
      %v2238 = vld [vmem:[#allocation2 + $0x4f0] sm:$0xff]
      %v2239 = vld [vmem:[#allocation2 + $0x4f8] sm:$0xff]
      %v2240 = vld [vmem:[#allocation2 + $0x500] sm:$0xff]
      %v2241 = vld [vmem:[#allocation2 + $0x508] sm:$0xff]
      %v2242 = vld [vmem:[#allocation2 + $0x510] sm:$0xff]
      %v2243 = vld [vmem:[#allocation2 + $0x518] sm:$0xff]
      %v2244 = vld [vmem:[#allocation2 + $0x520] sm:$0xff]
      %v2245 = vld [vmem:[#allocation2 + $0x528] sm:$0xff]
      %v2246 = vld [vmem:[#allocation2 + $0x530] sm:$0xff]
      %v2247 = vld [vmem:[#allocation2 + $0x538] sm:$0xff]
      %v2248 = vld [vmem:[#allocation2 + $0x540] sm:$0xff]
      %v2249 = vld [vmem:[#allocation2 + $0x548] sm:$0xff]
      %v2250 = vld [vmem:[#allocation2 + $0x550] sm:$0xff]
      %v2251 = vld [vmem:[#allocation2 + $0x558] sm:$0xff]
      %v2252 = vld [vmem:[#allocation2 + $0x560] sm:$0xff]
      %v2253 = vld [vmem:[#allocation2 + $0x568] sm:$0xff]
      %v2254 = vld [vmem:[#allocation2 + $0x570] sm:$0xff]
      %v2255 = vld [vmem:[#allocation2 + $0x578] sm:$0xff]
      %v2256 = vld [vmem:[#allocation2 + $0x580] sm:$0xff]
      %v2257 = vld [vmem:[#allocation2 + $0x588] sm:$0xff]
      %v2258 = vld [vmem:[#allocation2 + $0x590] sm:$0xff]
      %v2259 = vld [vmem:[#allocation2 + $0x598] sm:$0xff]
      %v2260 = vld [vmem:[#allocation2 + $0x5a0] sm:$0xff]
      %v2261 = vld [vmem:[#allocation2 + $0x5a8] sm:$0xff]
      %v2262 = vld [vmem:[#allocation2 + $0x5b0] sm:$0xff]
      %v2263 = vld [vmem:[#allocation2 + $0x5b8] sm:$0xff]
      %v2264 = vld [vmem:[#allocation2 + $0x5c0] sm:$0xff]
      %v2265 = vld [vmem:[#allocation2 + $0x5c8] sm:$0xff]
      %v2266 = vld [vmem:[#allocation2 + $0x5d0] sm:$0xff]
      %v2267 = vld [vmem:[#allocation2 + $0x5d8] sm:$0xff]
      %v2268 = vld [vmem:[#allocation2 + $0x5e0] sm:$0xff]
      %v2269 = vld [vmem:[#allocation2 + $0x5e8] sm:$0xff]
      %v2270 = vld [vmem:[#allocation2 + $0x5f0] sm:$0xff]
      %v2271 = vld [vmem:[#allocation2 + $0x5f8] sm:$0xff]
      %v2272 = vld [vmem:[#allocation2 + $0x600] sm:$0xff]
      %v2273 = vld [vmem:[#allocation2 + $0x608] sm:$0xff]
      %v2274 = vld [vmem:[#allocation2 + $0x610] sm:$0xff]
      %v2275 = vld [vmem:[#allocation2 + $0x618] sm:$0xff]
      %v2276 = vld [vmem:[#allocation2 + $0x620] sm:$0xff]
      %v2277 = vld [vmem:[#allocation2 + $0x628] sm:$0xff]
      %v2278 = vld [vmem:[#allocation2 + $0x630] sm:$0xff]
      %v2279 = vld [vmem:[#allocation2 + $0x638] sm:$0xff]
      %v2280 = vld [vmem:[%s2] sm:$0xff]
      %v2281 = vld [vmem:[%s2 + $0x8] sm:$0xff]
      %v2282 = vld [vmem:[%s2 + $0x10] sm:$0xff]
      %v2283 = vld [vmem:[%s2 + $0x18] sm:$0xff]
      %2285 = vset.pattern.permute.xlu0 0
      %2286 = vperm.xlu0 %2285, %v2280
      %v2287 = vpop.permute.xlu0 %2286
      %2290 = vset.pattern.permute.xlu0 0
      %2291 = vperm.xlu0 %2290, %v2281
      %v2292 = vpop.permute.xlu0 %2291
      %2295 = vset.pattern.permute.xlu0 0
      %2296 = vperm.xlu0 %2295, %v2282
      %v2297 = vpop.permute.xlu0 %2296
      %2300 = vset.pattern.permute.xlu0 0
      %2301 = vperm.xlu0 %2300, %v2283
      %v2302 = vpop.permute.xlu0 %2301
      %v2332 = vunpack.c.l.b16 %v2052
      %v2333 = vunpack.c.h.b16 %v2052
      %v2334 = vunpack.c.l.b16 %v2053
      %v2335 = vunpack.c.h.b16 %v2053
      %v2336 = vunpack.c.l.b16 %v2054
      %v2337 = vunpack.c.h.b16 %v2054
      %v2338 = vunpack.c.l.b16 %v2055
      %v2339 = vunpack.c.h.b16 %v2055
      %v2340 = vunpack.c.l.b16 %v2056
      %v2341 = vunpack.c.h.b16 %v2056
      %v2342 = vunpack.c.l.b16 %v2057
      %v2343 = vunpack.c.h.b16 %v2057
      %v2344 = vunpack.c.l.b16 %v2058
      %v2345 = vunpack.c.l.b16 %v2059
      %v2346 = vunpack.c.h.b16 %v2059
      %v2347 = vunpack.c.l.b16 %v2060
      %v2348 = vunpack.c.h.b16 %v2060
      %v2349 = vunpack.c.l.b16 %v2061
      %v2350 = vunpack.c.h.b16 %v2061
      %v2351 = vunpack.c.l.b16 %v2062
      %v2352 = vunpack.c.h.b16 %v2062
      %v2353 = vunpack.c.l.b16 %v2063
      %v2354 = vunpack.c.h.b16 %v2063
      %v2355 = vunpack.c.l.b16 %v2064
      %v2356 = vunpack.c.h.b16 %v2064
      %v2357 = vunpack.c.l.b16 %v2065
      %v2358 = vunpack.c.l.b16 %v2066
      %v2359 = vunpack.c.h.b16 %v2066
      %v2360 = vunpack.c.l.b16 %v2067
      %v2361 = vunpack.c.h.b16 %v2067
      %v2362 = vunpack.c.l.b16 %v2068
      %v2363 = vunpack.c.h.b16 %v2068
      %v2364 = vunpack.c.l.b16 %v2069
      %v2365 = vunpack.c.h.b16 %v2069
      %v2366 = vunpack.c.l.b16 %v2070
      %v2367 = vunpack.c.h.b16 %v2070
      %v2368 = vunpack.c.l.b16 %v2071
      %v2369 = vunpack.c.h.b16 %v2071
      %v2370 = vunpack.c.l.b16 %v2072
      %v2371 = vunpack.c.l.b16 %v2073
      %v2372 = vunpack.c.h.b16 %v2073
      %v2373 = vunpack.c.l.b16 %v2074
      %v2374 = vunpack.c.h.b16 %v2074
      %v2375 = vunpack.c.l.b16 %v2075
      %v2376 = vunpack.c.h.b16 %v2075
      %v2377 = vunpack.c.l.b16 %v2076
      %v2378 = vunpack.c.h.b16 %v2076
      %v2379 = vunpack.c.l.b16 %v2077
      %v2380 = vunpack.c.h.b16 %v2077
      %v2381 = vunpack.c.l.b16 %v2078
      %v2382 = vunpack.c.h.b16 %v2078
      %v2383 = vunpack.c.l.b16 %v2079
      %v2384 = vpack.c.b16 %v2345, %v2332
      %v2385 = vpack.c.b16 %v2346, %v2333
      %v2386 = vpack.c.b16 %v2347, %v2334
      %v2387 = vpack.c.b16 %v2348, %v2335
      %v2388 = vpack.c.b16 %v2349, %v2336
      %v2389 = vpack.c.b16 %v2350, %v2337
      %v2390 = vpack.c.b16 %v2351, %v2338
      %v2391 = vpack.c.b16 %v2352, %v2339
      %v2392 = vpack.c.b16 %v2353, %v2340
      %v2393 = vpack.c.b16 %v2354, %v2341
      %v2394 = vpack.c.b16 %v2355, %v2342
      %v2395 = vpack.c.b16 %v2356, %v2343
      %v2396 = vpack.c.b16 %v2357, %v2344
      %v2397 = vpack.c.b16 %v2371, %v2358
      %v2398 = vpack.c.b16 %v2372, %v2359
      %v2399 = vpack.c.b16 %v2373, %v2360
      %v2400 = vpack.c.b16 %v2374, %v2361
      %v2401 = vpack.c.b16 %v2375, %v2362
      %v2402 = vpack.c.b16 %v2376, %v2363
      %v2403 = vpack.c.b16 %v2377, %v2364
      %v2404 = vpack.c.b16 %v2378, %v2365
      %v2405 = vpack.c.b16 %v2379, %v2366
      %v2406 = vpack.c.b16 %v2380, %v2367
      %v2407 = vpack.c.b16 %v2381, %v2368
      %v2408 = vpack.c.b16 %v2382, %v2369
      %v2409 = vpack.c.b16 %v2383, %v2370
      %v2634 = vunpack.c.l.b16 %v2080
      %v2635 = vunpack.c.h.b16 %v2080
      %v2636 = vunpack.c.l.b16 %v2081
      %v2637 = vunpack.c.h.b16 %v2081
      %v2638 = vunpack.c.l.b16 %v2082
      %v2639 = vunpack.c.h.b16 %v2082
      %v2640 = vunpack.c.l.b16 %v2083
      %v2641 = vunpack.c.h.b16 %v2083
      %v2642 = vunpack.c.l.b16 %v2084
      %v2643 = vunpack.c.h.b16 %v2084
      %v2644 = vunpack.c.l.b16 %v2085
      %v2645 = vunpack.c.h.b16 %v2085
      %v2646 = vunpack.c.l.b16 %v2086
      %v2647 = vunpack.c.h.b16 %v2086
      %v2648 = vunpack.c.l.b16 %v2087
      %v2649 = vunpack.c.h.b16 %v2087
      %v2650 = vunpack.c.l.b16 %v2088
      %v2651 = vunpack.c.h.b16 %v2088
      %v2652 = vunpack.c.l.b16 %v2089
      %v2653 = vunpack.c.h.b16 %v2089
      %v2654 = vunpack.c.l.b16 %v2090
      %v2655 = vunpack.c.h.b16 %v2090
      %v2656 = vunpack.c.l.b16 %v2091
      %v2657 = vunpack.c.h.b16 %v2091
      %v2658 = vunpack.c.l.b16 %v2092
      %v2659 = vunpack.c.h.b16 %v2092
      %v2660 = vunpack.c.l.b16 %v2093
      %v2661 = vunpack.c.h.b16 %v2093
      %v2662 = vunpack.c.l.b16 %v2094
      %v2663 = vunpack.c.h.b16 %v2094
      %v2664 = vunpack.c.l.b16 %v2095
      %v2665 = vunpack.c.h.b16 %v2095
      %v2666 = vunpack.c.l.b16 %v2096
      %v2667 = vunpack.c.h.b16 %v2096
      %v2668 = vunpack.c.l.b16 %v2097
      %v2669 = vunpack.c.h.b16 %v2097
      %v2670 = vunpack.c.l.b16 %v2098
      %v2671 = vunpack.c.h.b16 %v2098
      %v2672 = vunpack.c.l.b16 %v2099
      %v2673 = vunpack.c.h.b16 %v2099
      %v2674 = vunpack.c.l.b16 %v2100
      %v2675 = vunpack.c.h.b16 %v2100
      %v2676 = vunpack.c.l.b16 %v2101
      %v2677 = vunpack.c.h.b16 %v2101
      %v2678 = vunpack.c.l.b16 %v2102
      %v2679 = vunpack.c.h.b16 %v2102
      %v2680 = vunpack.c.l.b16 %v2103
      %v2681 = vunpack.c.h.b16 %v2103
      %v2682 = vunpack.c.l.b16 %v2104
      %v2683 = vunpack.c.h.b16 %v2104
      %v2684 = vunpack.c.l.b16 %v2105
      %v2685 = vunpack.c.h.b16 %v2105
      %v2686 = vunpack.c.l.b16 %v2106
      %v2687 = vunpack.c.h.b16 %v2106
      %v2688 = vunpack.c.l.b16 %v2107
      %v2689 = vunpack.c.h.b16 %v2107
      %v2690 = vunpack.c.l.b16 %v2108
      %v2691 = vunpack.c.h.b16 %v2108
      %v2692 = vunpack.c.l.b16 %v2109
      %v2693 = vunpack.c.h.b16 %v2109
      %v2694 = vunpack.c.l.b16 %v2110
      %v2695 = vunpack.c.h.b16 %v2110
      %v2696 = vunpack.c.l.b16 %v2111
      %v2697 = vunpack.c.h.b16 %v2111
      %v2698 = vunpack.c.l.b16 %v2112
      %v2699 = vunpack.c.h.b16 %v2112
      %v2700 = vunpack.c.l.b16 %v2113
      %v2701 = vunpack.c.h.b16 %v2113
      %v2702 = vunpack.c.l.b16 %v2114
      %v2703 = vunpack.c.h.b16 %v2114
      %v2704 = vunpack.c.l.b16 %v2115
      %v2705 = vunpack.c.h.b16 %v2115
      %v2706 = vunpack.c.l.b16 %v2116
      %v2707 = vunpack.c.h.b16 %v2116
      %v2708 = vunpack.c.l.b16 %v2117
      %v2709 = vunpack.c.h.b16 %v2117
      %v2710 = vunpack.c.l.b16 %v2118
      %v2711 = vunpack.c.h.b16 %v2118
      %v2712 = vunpack.c.l.b16 %v2119
      %v2713 = vunpack.c.h.b16 %v2119
      %v2714 = vunpack.c.l.b16 %v2120
      %v2715 = vunpack.c.h.b16 %v2120
      %v2716 = vunpack.c.l.b16 %v2121
      %v2717 = vunpack.c.h.b16 %v2121
      %v2718 = vunpack.c.l.b16 %v2122
      %v2719 = vunpack.c.h.b16 %v2122
      %v2720 = vunpack.c.l.b16 %v2123
      %v2721 = vunpack.c.h.b16 %v2123
      %v2722 = vunpack.c.l.b16 %v2124
      %v2723 = vunpack.c.h.b16 %v2124
      %v2724 = vunpack.c.l.b16 %v2125
      %v2725 = vunpack.c.h.b16 %v2125
      %v2726 = vunpack.c.l.b16 %v2126
      %v2727 = vunpack.c.h.b16 %v2126
      %v2728 = vunpack.c.l.b16 %v2127
      %v2729 = vunpack.c.h.b16 %v2127
      %v2730 = vunpack.c.l.b16 %v2128
      %v2731 = vunpack.c.h.b16 %v2128
      %v2732 = vunpack.c.l.b16 %v2129
      %v2733 = vunpack.c.h.b16 %v2129
      %v2734 = vunpack.c.l.b16 %v2130
      %v2735 = vunpack.c.h.b16 %v2130
      %v2736 = vunpack.c.l.b16 %v2131
      %v2737 = vunpack.c.h.b16 %v2131
      %v2738 = vunpack.c.l.b16 %v2132
      %v2739 = vunpack.c.h.b16 %v2132
      %v2740 = vunpack.c.l.b16 %v2133
      %v2741 = vunpack.c.h.b16 %v2133
      %v2742 = vunpack.c.l.b16 %v2134
      %v2743 = vunpack.c.h.b16 %v2134
      %v2744 = vunpack.c.l.b16 %v2135
      %v2745 = vunpack.c.h.b16 %v2135
      %v2746 = vunpack.c.l.b16 %v2136
      %v2747 = vunpack.c.h.b16 %v2136
      %v2748 = vunpack.c.l.b16 %v2137
      %v2749 = vunpack.c.h.b16 %v2137
      %v2750 = vunpack.c.l.b16 %v2138
      %v2751 = vunpack.c.h.b16 %v2138
      %v2752 = vunpack.c.l.b16 %v2139
      %v2753 = vunpack.c.h.b16 %v2139
      %v2754 = vunpack.c.l.b16 %v2140
      %v2755 = vunpack.c.h.b16 %v2140
      %v2756 = vunpack.c.l.b16 %v2141
      %v2757 = vunpack.c.h.b16 %v2141
      %v2758 = vunpack.c.l.b16 %v2142
      %v2759 = vunpack.c.h.b16 %v2142
      %v2760 = vunpack.c.l.b16 %v2143
      %v2761 = vunpack.c.h.b16 %v2143
      %v2762 = vunpack.c.l.b16 %v2144
      %v2763 = vunpack.c.h.b16 %v2144
      %v2764 = vunpack.c.l.b16 %v2145
      %v2765 = vunpack.c.h.b16 %v2145
      %v2766 = vunpack.c.l.b16 %v2146
      %v2767 = vunpack.c.h.b16 %v2146
      %v2768 = vunpack.c.l.b16 %v2147
      %v2769 = vunpack.c.h.b16 %v2147
      %v2770 = vunpack.c.l.b16 %v2148
      %v2771 = vunpack.c.h.b16 %v2148
      %v2772 = vunpack.c.l.b16 %v2149
      %v2773 = vunpack.c.h.b16 %v2149
      %v2774 = vunpack.c.l.b16 %v2150
      %v2775 = vunpack.c.h.b16 %v2150
      %v2776 = vunpack.c.l.b16 %v2151
      %v2777 = vunpack.c.h.b16 %v2151
      %v2778 = vunpack.c.l.b16 %v2152
      %v2779 = vunpack.c.h.b16 %v2152
      %v2780 = vunpack.c.l.b16 %v2153
      %v2781 = vunpack.c.h.b16 %v2153
      %v2782 = vunpack.c.l.b16 %v2154
      %v2783 = vunpack.c.h.b16 %v2154
      %v2784 = vunpack.c.l.b16 %v2155
      %v2785 = vunpack.c.h.b16 %v2155
      %v2786 = vunpack.c.l.b16 %v2156
      %v2787 = vunpack.c.h.b16 %v2156
      %v2788 = vunpack.c.l.b16 %v2157
      %v2789 = vunpack.c.h.b16 %v2157
      %v2790 = vunpack.c.l.b16 %v2158
      %v2791 = vunpack.c.h.b16 %v2158
      %v2792 = vunpack.c.l.b16 %v2159
      %v2793 = vunpack.c.h.b16 %v2159
      %v2794 = vunpack.c.l.b16 %v2160
      %v2795 = vunpack.c.h.b16 %v2160
      %v2796 = vunpack.c.l.b16 %v2161
      %v2797 = vunpack.c.h.b16 %v2161
      %v2798 = vunpack.c.l.b16 %v2162
      %v2799 = vunpack.c.h.b16 %v2162
      %v2800 = vunpack.c.l.b16 %v2163
      %v2801 = vunpack.c.h.b16 %v2163
      %v2802 = vunpack.c.l.b16 %v2164
      %v2803 = vunpack.c.h.b16 %v2164
      %v2804 = vunpack.c.l.b16 %v2165
      %v2805 = vunpack.c.h.b16 %v2165
      %v2806 = vunpack.c.l.b16 %v2166
      %v2807 = vunpack.c.h.b16 %v2166
      %v2808 = vunpack.c.l.b16 %v2167
      %v2809 = vunpack.c.h.b16 %v2167
      %v2810 = vunpack.c.l.b16 %v2168
      %v2811 = vunpack.c.h.b16 %v2168
      %v2812 = vunpack.c.l.b16 %v2169
      %v2813 = vunpack.c.h.b16 %v2169
      %v2814 = vunpack.c.l.b16 %v2170
      %v2815 = vunpack.c.h.b16 %v2170
      %v2816 = vunpack.c.l.b16 %v2171
      %v2817 = vunpack.c.h.b16 %v2171
      %v2818 = vunpack.c.l.b16 %v2172
      %v2819 = vunpack.c.h.b16 %v2172
      %v2820 = vunpack.c.l.b16 %v2173
      %v2821 = vunpack.c.h.b16 %v2173
      %v2822 = vunpack.c.l.b16 %v2174
      %v2823 = vunpack.c.h.b16 %v2174
      %v2824 = vunpack.c.l.b16 %v2175
      %v2825 = vunpack.c.h.b16 %v2175
      %v2826 = vunpack.c.l.b16 %v2176
      %v2827 = vunpack.c.h.b16 %v2176
      %v2828 = vunpack.c.l.b16 %v2177
      %v2829 = vunpack.c.h.b16 %v2177
      %v2830 = vunpack.c.l.b16 %v2178
      %v2831 = vunpack.c.h.b16 %v2178
      %v2832 = vunpack.c.l.b16 %v2179
      %v2833 = vunpack.c.h.b16 %v2179
      %v2834 = vunpack.c.l.b16 %v2180
      %v2835 = vunpack.c.h.b16 %v2180
      %v2836 = vunpack.c.l.b16 %v2181
      %v2837 = vunpack.c.h.b16 %v2181
      %v2838 = vunpack.c.l.b16 %v2182
      %v2839 = vunpack.c.h.b16 %v2182
      %v2840 = vunpack.c.l.b16 %v2183
      %v2841 = vunpack.c.h.b16 %v2183
      %v2842 = vunpack.c.l.b16 %v2184
      %v2843 = vunpack.c.h.b16 %v2184
      %v2844 = vunpack.c.l.b16 %v2185
      %v2845 = vunpack.c.h.b16 %v2185
      %v2846 = vunpack.c.l.b16 %v2186
      %v2847 = vunpack.c.h.b16 %v2186
      %v2848 = vunpack.c.l.b16 %v2187
      %v2849 = vunpack.c.h.b16 %v2187
      %v2850 = vunpack.c.l.b16 %v2188
      %v2851 = vunpack.c.h.b16 %v2188
      %v2852 = vunpack.c.l.b16 %v2189
      %v2853 = vunpack.c.h.b16 %v2189
      %v2854 = vunpack.c.l.b16 %v2190
      %v2855 = vunpack.c.h.b16 %v2190
      %v2856 = vunpack.c.l.b16 %v2191
      %v2857 = vunpack.c.h.b16 %v2191
      %v2858 = vunpack.c.l.b16 %v2192
      %v2859 = vunpack.c.h.b16 %v2192
      %v2860 = vunpack.c.l.b16 %v2193
      %v2861 = vunpack.c.h.b16 %v2193
      %v2862 = vunpack.c.l.b16 %v2194
      %v2863 = vunpack.c.h.b16 %v2194
      %v2864 = vunpack.c.l.b16 %v2195
      %v2865 = vunpack.c.h.b16 %v2195
      %v2866 = vunpack.c.l.b16 %v2196
      %v2867 = vunpack.c.h.b16 %v2196
      %v2868 = vunpack.c.l.b16 %v2197
      %v2869 = vunpack.c.h.b16 %v2197
      %v2870 = vunpack.c.l.b16 %v2198
      %v2871 = vunpack.c.h.b16 %v2198
      %v2872 = vunpack.c.l.b16 %v2199
      %v2873 = vunpack.c.h.b16 %v2199
      %v2874 = vunpack.c.l.b16 %v2200
      %v2875 = vunpack.c.h.b16 %v2200
      %v2876 = vunpack.c.l.b16 %v2201
      %v2877 = vunpack.c.h.b16 %v2201
      %v2878 = vunpack.c.l.b16 %v2202
      %v2879 = vunpack.c.h.b16 %v2202
      %v2880 = vunpack.c.l.b16 %v2203
      %v2881 = vunpack.c.h.b16 %v2203
      %v2882 = vunpack.c.l.b16 %v2204
      %v2883 = vunpack.c.h.b16 %v2204
      %v2884 = vunpack.c.l.b16 %v2205
      %v2885 = vunpack.c.h.b16 %v2205
      %v2886 = vunpack.c.l.b16 %v2206
      %v2887 = vunpack.c.h.b16 %v2206
      %v2888 = vunpack.c.l.b16 %v2207
      %v2889 = vunpack.c.h.b16 %v2207
      %v2890 = vunpack.c.l.b16 %v2208
      %v2891 = vunpack.c.h.b16 %v2208
      %v2892 = vunpack.c.l.b16 %v2209
      %v2893 = vunpack.c.h.b16 %v2209
      %v2894 = vunpack.c.l.b16 %v2210
      %v2895 = vunpack.c.h.b16 %v2210
      %v2896 = vunpack.c.l.b16 %v2211
      %v2897 = vunpack.c.h.b16 %v2211
      %v2898 = vunpack.c.l.b16 %v2212
      %v2899 = vunpack.c.h.b16 %v2212
      %v2900 = vunpack.c.l.b16 %v2213
      %v2901 = vunpack.c.h.b16 %v2213
      %v2902 = vunpack.c.l.b16 %v2214
      %v2903 = vunpack.c.h.b16 %v2214
      %v2904 = vunpack.c.l.b16 %v2215
      %v2905 = vunpack.c.h.b16 %v2215
      %v2906 = vunpack.c.l.b16 %v2216
      %v2907 = vunpack.c.h.b16 %v2216
      %v2908 = vunpack.c.l.b16 %v2217
      %v2909 = vunpack.c.h.b16 %v2217
      %v2910 = vunpack.c.l.b16 %v2218
      %v2911 = vunpack.c.h.b16 %v2218
      %v2912 = vunpack.c.l.b16 %v2219
      %v2913 = vunpack.c.h.b16 %v2219
      %v2914 = vunpack.c.l.b16 %v2220
      %v2915 = vunpack.c.h.b16 %v2220
      %v2916 = vunpack.c.l.b16 %v2221
      %v2917 = vunpack.c.h.b16 %v2221
      %v2918 = vunpack.c.l.b16 %v2222
      %v2919 = vunpack.c.h.b16 %v2222
      %v2920 = vunpack.c.l.b16 %v2223
      %v2921 = vunpack.c.h.b16 %v2223
      %v2922 = vunpack.c.l.b16 %v2224
      %v2923 = vunpack.c.h.b16 %v2224
      %v2924 = vunpack.c.l.b16 %v2225
      %v2925 = vunpack.c.h.b16 %v2225
      %v2926 = vunpack.c.l.b16 %v2226
      %v2927 = vunpack.c.h.b16 %v2226
      %v2928 = vunpack.c.l.b16 %v2227
      %v2929 = vunpack.c.h.b16 %v2227
      %v2930 = vunpack.c.l.b16 %v2228
      %v2931 = vunpack.c.h.b16 %v2228
      %v2932 = vunpack.c.l.b16 %v2229
      %v2933 = vunpack.c.h.b16 %v2229
      %v2934 = vunpack.c.l.b16 %v2230
      %v2935 = vunpack.c.h.b16 %v2230
      %v2936 = vunpack.c.l.b16 %v2231
      %v2937 = vunpack.c.h.b16 %v2231
      %v2938 = vunpack.c.l.b16 %v2232
      %v2939 = vunpack.c.h.b16 %v2232
      %v2940 = vunpack.c.l.b16 %v2233
      %v2941 = vunpack.c.h.b16 %v2233
      %v2942 = vunpack.c.l.b16 %v2234
      %v2943 = vunpack.c.h.b16 %v2234
      %v2944 = vunpack.c.l.b16 %v2235
      %v2945 = vunpack.c.h.b16 %v2235
      %v2946 = vunpack.c.l.b16 %v2236
      %v2947 = vunpack.c.h.b16 %v2236
      %v2948 = vunpack.c.l.b16 %v2237
      %v2949 = vunpack.c.h.b16 %v2237
      %v2950 = vunpack.c.l.b16 %v2238
      %v2951 = vunpack.c.h.b16 %v2238
      %v2952 = vunpack.c.l.b16 %v2239
      %v2953 = vunpack.c.h.b16 %v2239
      %v2954 = vunpack.c.l.b16 %v2240
      %v2955 = vunpack.c.h.b16 %v2240
      %v2956 = vunpack.c.l.b16 %v2241
      %v2957 = vunpack.c.h.b16 %v2241
      %v2958 = vunpack.c.l.b16 %v2242
      %v2959 = vunpack.c.h.b16 %v2242
      %v2960 = vunpack.c.l.b16 %v2243
      %v2961 = vunpack.c.h.b16 %v2243
      %v2962 = vunpack.c.l.b16 %v2244
      %v2963 = vunpack.c.h.b16 %v2244
      %v2964 = vunpack.c.l.b16 %v2245
      %v2965 = vunpack.c.h.b16 %v2245
      %v2966 = vunpack.c.l.b16 %v2246
      %v2967 = vunpack.c.h.b16 %v2246
      %v2968 = vunpack.c.l.b16 %v2247
      %v2969 = vunpack.c.h.b16 %v2247
      %v2970 = vunpack.c.l.b16 %v2248
      %v2971 = vunpack.c.h.b16 %v2248
      %v2972 = vunpack.c.l.b16 %v2249
      %v2973 = vunpack.c.h.b16 %v2249
      %v2974 = vunpack.c.l.b16 %v2250
      %v2975 = vunpack.c.h.b16 %v2250
      %v2976 = vunpack.c.l.b16 %v2251
      %v2977 = vunpack.c.h.b16 %v2251
      %v2978 = vunpack.c.l.b16 %v2252
      %v2979 = vunpack.c.h.b16 %v2252
      %v2980 = vunpack.c.l.b16 %v2253
      %v2981 = vunpack.c.h.b16 %v2253
      %v2982 = vunpack.c.l.b16 %v2254
      %v2983 = vunpack.c.h.b16 %v2254
      %v2984 = vunpack.c.l.b16 %v2255
      %v2985 = vunpack.c.h.b16 %v2255
      %v2986 = vunpack.c.l.b16 %v2256
      %v2987 = vunpack.c.h.b16 %v2256
      %v2988 = vunpack.c.l.b16 %v2257
      %v2989 = vunpack.c.h.b16 %v2257
      %v2990 = vunpack.c.l.b16 %v2258
      %v2991 = vunpack.c.h.b16 %v2258
      %v2992 = vunpack.c.l.b16 %v2259
      %v2993 = vunpack.c.h.b16 %v2259
      %v2994 = vunpack.c.l.b16 %v2260
      %v2995 = vunpack.c.h.b16 %v2260
      %v2996 = vunpack.c.l.b16 %v2261
      %v2997 = vunpack.c.h.b16 %v2261
      %v2998 = vunpack.c.l.b16 %v2262
      %v2999 = vunpack.c.h.b16 %v2262
      %v3000 = vunpack.c.l.b16 %v2263
      %v3001 = vunpack.c.h.b16 %v2263
      %v3002 = vunpack.c.l.b16 %v2264
      %v3003 = vunpack.c.h.b16 %v2264
      %v3004 = vunpack.c.l.b16 %v2265
      %v3005 = vunpack.c.h.b16 %v2265
      %v3006 = vunpack.c.l.b16 %v2266
      %v3007 = vunpack.c.h.b16 %v2266
      %v3008 = vunpack.c.l.b16 %v2267
      %v3009 = vunpack.c.h.b16 %v2267
      %v3010 = vunpack.c.l.b16 %v2268
      %v3011 = vunpack.c.h.b16 %v2268
      %v3012 = vunpack.c.l.b16 %v2269
      %v3013 = vunpack.c.h.b16 %v2269
      %v3014 = vunpack.c.l.b16 %v2270
      %v3015 = vunpack.c.h.b16 %v2270
      %v3016 = vunpack.c.l.b16 %v2271
      %v3017 = vunpack.c.h.b16 %v2271
      %v3018 = vunpack.c.l.b16 %v2272
      %v3019 = vunpack.c.h.b16 %v2272
      %v3020 = vunpack.c.l.b16 %v2273
      %v3021 = vunpack.c.h.b16 %v2273
      %v3022 = vunpack.c.l.b16 %v2274
      %v3023 = vunpack.c.h.b16 %v2274
      %v3024 = vunpack.c.l.b16 %v2275
      %v3025 = vunpack.c.h.b16 %v2275
      %v3026 = vunpack.c.l.b16 %v2276
      %v3027 = vunpack.c.h.b16 %v2276
      %v3028 = vunpack.c.l.b16 %v2277
      %v3029 = vunpack.c.h.b16 %v2277
      %v3030 = vunpack.c.l.b16 %v2278
      %v3031 = vunpack.c.h.b16 %v2278
      %v3032 = vunpack.c.l.b16 %v2279
      %v3033 = vunpack.c.h.b16 %v2279
      %v3034 = vpack.c.b16 %v2636, %v2634
      %v3035 = vpack.c.b16 %v2637, %v2635
      %v3036 = vpack.c.b16 %v2640, %v2638
      %v3037 = vpack.c.b16 %v2641, %v2639
      %v3038 = vpack.c.b16 %v2644, %v2642
      %v3039 = vpack.c.b16 %v2645, %v2643
      %v3040 = vpack.c.b16 %v2648, %v2646
      %v3041 = vpack.c.b16 %v2649, %v2647
      %v3042 = vpack.c.b16 %v2652, %v2650
      %v3043 = vpack.c.b16 %v2653, %v2651
      %v3044 = vpack.c.b16 %v2656, %v2654
      %v3045 = vpack.c.b16 %v2657, %v2655
      %v3046 = vpack.c.b16 %v2660, %v2658
      %v3047 = vpack.c.b16 %v2661, %v2659
      %v3048 = vpack.c.b16 %v2664, %v2662
      %v3049 = vpack.c.b16 %v2665, %v2663
      %v3050 = vpack.c.b16 %v2668, %v2666
      %v3051 = vpack.c.b16 %v2669, %v2667
      %v3052 = vpack.c.b16 %v2672, %v2670
      %v3053 = vpack.c.b16 %v2673, %v2671
      %v3054 = vpack.c.b16 %v2676, %v2674
      %v3055 = vpack.c.b16 %v2677, %v2675
      %v3056 = vpack.c.b16 %v2680, %v2678
      %v3057 = vpack.c.b16 %v2681, %v2679
      %v3058 = vpack.c.b16 %v2684, %v2682
      %v3059 = vpack.c.b16 %v2685, %v2683
      %v3060 = vpack.c.b16 %v2688, %v2686
      %v3061 = vpack.c.b16 %v2689, %v2687
      %v3062 = vpack.c.b16 %v2692, %v2690
      %v3063 = vpack.c.b16 %v2693, %v2691
      %v3064 = vpack.c.b16 %v2696, %v2694
      %v3065 = vpack.c.b16 %v2697, %v2695
      %v3066 = vpack.c.b16 %v2700, %v2698
      %v3067 = vpack.c.b16 %v2701, %v2699
      %v3068 = vpack.c.b16 %v2704, %v2702
      %v3069 = vpack.c.b16 %v2705, %v2703
      %v3070 = vpack.c.b16 %v2708, %v2706
      %v3071 = vpack.c.b16 %v2709, %v2707
      %v3072 = vpack.c.b16 %v2712, %v2710
      %v3073 = vpack.c.b16 %v2713, %v2711
      %v3074 = vpack.c.b16 %v2716, %v2714
      %v3075 = vpack.c.b16 %v2717, %v2715
      %v3076 = vpack.c.b16 %v2720, %v2718
      %v3077 = vpack.c.b16 %v2721, %v2719
      %v3078 = vpack.c.b16 %v2724, %v2722
      %v3079 = vpack.c.b16 %v2725, %v2723
      %v3080 = vpack.c.b16 %v2728, %v2726
      %v3081 = vpack.c.b16 %v2729, %v2727
      %v3082 = vpack.c.b16 %v2732, %v2730
      %v3083 = vpack.c.b16 %v2733, %v2731
      %v3084 = vpack.c.b16 %v2736, %v2734
      %v3085 = vpack.c.b16 %v2737, %v2735
      %v3086 = vpack.c.b16 %v2740, %v2738
      %v3087 = vpack.c.b16 %v2741, %v2739
      %v3088 = vpack.c.b16 %v2744, %v2742
      %v3089 = vpack.c.b16 %v2745, %v2743
      %v3090 = vpack.c.b16 %v2748, %v2746
      %v3091 = vpack.c.b16 %v2749, %v2747
      %v3092 = vpack.c.b16 %v2752, %v2750
      %v3093 = vpack.c.b16 %v2753, %v2751
      %v3094 = vpack.c.b16 %v2756, %v2754
      %v3095 = vpack.c.b16 %v2757, %v2755
      %v3096 = vpack.c.b16 %v2760, %v2758
      %v3097 = vpack.c.b16 %v2761, %v2759
      %v3098 = vpack.c.b16 %v2764, %v2762
      %v3099 = vpack.c.b16 %v2765, %v2763
      %v3100 = vpack.c.b16 %v2768, %v2766
      %v3101 = vpack.c.b16 %v2769, %v2767
      %v3102 = vpack.c.b16 %v2772, %v2770
      %v3103 = vpack.c.b16 %v2773, %v2771
      %v3104 = vpack.c.b16 %v2776, %v2774
      %v3105 = vpack.c.b16 %v2777, %v2775
      %v3106 = vpack.c.b16 %v2780, %v2778
      %v3107 = vpack.c.b16 %v2781, %v2779
      %v3108 = vpack.c.b16 %v2784, %v2782
      %v3109 = vpack.c.b16 %v2785, %v2783
      %v3110 = vpack.c.b16 %v2788, %v2786
      %v3111 = vpack.c.b16 %v2789, %v2787
      %v3112 = vpack.c.b16 %v2792, %v2790
      %v3113 = vpack.c.b16 %v2793, %v2791
      %v3114 = vpack.c.b16 %v2796, %v2794
      %v3115 = vpack.c.b16 %v2797, %v2795
      %v3116 = vpack.c.b16 %v2800, %v2798
      %v3117 = vpack.c.b16 %v2801, %v2799
      %v3118 = vpack.c.b16 %v2804, %v2802
      %v3119 = vpack.c.b16 %v2805, %v2803
      %v3120 = vpack.c.b16 %v2808, %v2806
      %v3121 = vpack.c.b16 %v2809, %v2807
      %v3122 = vpack.c.b16 %v2812, %v2810
      %v3123 = vpack.c.b16 %v2813, %v2811
      %v3124 = vpack.c.b16 %v2816, %v2814
      %v3125 = vpack.c.b16 %v2817, %v2815
      %v3126 = vpack.c.b16 %v2820, %v2818
      %v3127 = vpack.c.b16 %v2821, %v2819
      %v3128 = vpack.c.b16 %v2824, %v2822
      %v3129 = vpack.c.b16 %v2825, %v2823
      %v3130 = vpack.c.b16 %v2828, %v2826
      %v3131 = vpack.c.b16 %v2829, %v2827
      %v3132 = vpack.c.b16 %v2832, %v2830
      %v3133 = vpack.c.b16 %v2833, %v2831
      %v3134 = vpack.c.b16 %v2836, %v2834
      %v3135 = vpack.c.b16 %v2837, %v2835
      %v3136 = vpack.c.b16 %v2840, %v2838
      %v3137 = vpack.c.b16 %v2841, %v2839
      %v3138 = vpack.c.b16 %v2844, %v2842
      %v3139 = vpack.c.b16 %v2845, %v2843
      %v3140 = vpack.c.b16 %v2848, %v2846
      %v3141 = vpack.c.b16 %v2849, %v2847
      %v3142 = vpack.c.b16 %v2852, %v2850
      %v3143 = vpack.c.b16 %v2853, %v2851
      %v3144 = vpack.c.b16 %v2856, %v2854
      %v3145 = vpack.c.b16 %v2857, %v2855
      %v3146 = vpack.c.b16 %v2860, %v2858
      %v3147 = vpack.c.b16 %v2861, %v2859
      %v3148 = vpack.c.b16 %v2864, %v2862
      %v3149 = vpack.c.b16 %v2865, %v2863
      %v3150 = vpack.c.b16 %v2868, %v2866
      %v3151 = vpack.c.b16 %v2869, %v2867
      %v3152 = vpack.c.b16 %v2872, %v2870
      %v3153 = vpack.c.b16 %v2873, %v2871
      %v3154 = vpack.c.b16 %v2876, %v2874
      %v3155 = vpack.c.b16 %v2877, %v2875
      %v3156 = vpack.c.b16 %v2880, %v2878
      %v3157 = vpack.c.b16 %v2881, %v2879
      %v3158 = vpack.c.b16 %v2884, %v2882
      %v3159 = vpack.c.b16 %v2885, %v2883
      %v3160 = vpack.c.b16 %v2888, %v2886
      %v3161 = vpack.c.b16 %v2889, %v2887
      %v3162 = vpack.c.b16 %v2892, %v2890
      %v3163 = vpack.c.b16 %v2893, %v2891
      %v3164 = vpack.c.b16 %v2896, %v2894
      %v3165 = vpack.c.b16 %v2897, %v2895
      %v3166 = vpack.c.b16 %v2900, %v2898
      %v3167 = vpack.c.b16 %v2901, %v2899
      %v3168 = vpack.c.b16 %v2904, %v2902
      %v3169 = vpack.c.b16 %v2905, %v2903
      %v3170 = vpack.c.b16 %v2908, %v2906
      %v3171 = vpack.c.b16 %v2909, %v2907
      %v3172 = vpack.c.b16 %v2912, %v2910
      %v3173 = vpack.c.b16 %v2913, %v2911
      %v3174 = vpack.c.b16 %v2916, %v2914
      %v3175 = vpack.c.b16 %v2917, %v2915
      %v3176 = vpack.c.b16 %v2920, %v2918
      %v3177 = vpack.c.b16 %v2921, %v2919
      %v3178 = vpack.c.b16 %v2924, %v2922
      %v3179 = vpack.c.b16 %v2925, %v2923
      %v3180 = vpack.c.b16 %v2928, %v2926
      %v3181 = vpack.c.b16 %v2929, %v2927
      %v3182 = vpack.c.b16 %v2932, %v2930
      %v3183 = vpack.c.b16 %v2933, %v2931
      %v3184 = vpack.c.b16 %v2936, %v2934
      %v3185 = vpack.c.b16 %v2937, %v2935
      %v3186 = vpack.c.b16 %v2940, %v2938
      %v3187 = vpack.c.b16 %v2941, %v2939
      %v3188 = vpack.c.b16 %v2944, %v2942
      %v3189 = vpack.c.b16 %v2945, %v2943
      %v3190 = vpack.c.b16 %v2948, %v2946
      %v3191 = vpack.c.b16 %v2949, %v2947
      %v3192 = vpack.c.b16 %v2952, %v2950
      %v3193 = vpack.c.b16 %v2953, %v2951
      %v3194 = vpack.c.b16 %v2956, %v2954
      %v3195 = vpack.c.b16 %v2957, %v2955
      %v3196 = vpack.c.b16 %v2960, %v2958
      %v3197 = vpack.c.b16 %v2961, %v2959
      %v3198 = vpack.c.b16 %v2964, %v2962
      %v3199 = vpack.c.b16 %v2965, %v2963
      %v3200 = vpack.c.b16 %v2968, %v2966
      %v3201 = vpack.c.b16 %v2969, %v2967
      %v3202 = vpack.c.b16 %v2972, %v2970
      %v3203 = vpack.c.b16 %v2973, %v2971
      %v3204 = vpack.c.b16 %v2976, %v2974
      %v3205 = vpack.c.b16 %v2977, %v2975
      %v3206 = vpack.c.b16 %v2980, %v2978
      %v3207 = vpack.c.b16 %v2981, %v2979
      %v3208 = vpack.c.b16 %v2984, %v2982
      %v3209 = vpack.c.b16 %v2985, %v2983
      %v3210 = vpack.c.b16 %v2988, %v2986
      %v3211 = vpack.c.b16 %v2989, %v2987
      %v3212 = vpack.c.b16 %v2992, %v2990
      %v3213 = vpack.c.b16 %v2993, %v2991
      %v3214 = vpack.c.b16 %v2996, %v2994
      %v3215 = vpack.c.b16 %v2997, %v2995
      %v3216 = vpack.c.b16 %v3000, %v2998
      %v3217 = vpack.c.b16 %v3001, %v2999
      %v3218 = vpack.c.b16 %v3004, %v3002
      %v3219 = vpack.c.b16 %v3005, %v3003
      %v3220 = vpack.c.b16 %v3008, %v3006
      %v3221 = vpack.c.b16 %v3009, %v3007
      %v3222 = vpack.c.b16 %v3012, %v3010
      %v3223 = vpack.c.b16 %v3013, %v3011
      %v3224 = vpack.c.b16 %v3016, %v3014
      %v3225 = vpack.c.b16 %v3017, %v3015
      %v3226 = vpack.c.b16 %v3020, %v3018
      %v3227 = vpack.c.b16 %v3021, %v3019
      %v3228 = vpack.c.b16 %v3024, %v3022
      %v3229 = vpack.c.b16 %v3025, %v3023
      %v3230 = vpack.c.b16 %v3028, %v3026
      %v3231 = vpack.c.b16 %v3029, %v3027
      %v3232 = vpack.c.b16 %v3032, %v3030
      %v3233 = vpack.c.b16 %v3033, %v3031
      %vm3434 = vcmask 523264
      %v3436 = vsel %vm3434, %v2396, 0
      %v3439 = vsel %vm3434, %v2409, 0
      %3441 = vmatpush.bf16.msra.mxu0 %v3048
      %3442 = vmatpush.bf16.msra.mxu0 %v3046
      %3443 = vmatpush.bf16.msra.mxu0 %v3044
      %3444 = vmatpush.bf16.msra.mxu0 %v3042
      %3445 = vmatpush.bf16.msra.mxu0 %v3040
      %3446 = vmatpush.bf16.msra.mxu0 %v3038
      %3447 = vmatpush.bf16.msra.mxu0 %v3036
      %3448 = vmatpush.bf16.msra.mxu0 %v3034
      %3449 = vmatmul.bf16.gmra.mxu0 %v2384
      %v3450 = vpop.f32.mrf.mxu0
      %v3451 = vadd.f32 %v2287, %v3450
      %v3452 = vpop.f32.mrf.mxu0
      %v3453 = vadd.f32 %v2292, %v3452
      %3454 = vmatmul.bf16.gmra.mxu0 %v2397
      %v3455 = vpop.f32.mrf.mxu0
      %v3456 = vadd.f32 %v2297, %v3455
      %v3457 = vpop.f32.mrf.mxu0
      %v3458 = vadd.f32 %v2302, %v3457
      %3459 = vdwg.mxu0
      %3460 = vmatpush.bf16.msra.mxu0 %v3064
      %3461 = vmatpush.bf16.msra.mxu0 %v3062
      %3462 = vmatpush.bf16.msra.mxu0 %v3060
      %3463 = vmatpush.bf16.msra.mxu0 %v3058
      %3464 = vmatpush.bf16.msra.mxu0 %v3056
      %3465 = vmatpush.bf16.msra.mxu0 %v3054
      %3466 = vmatpush.bf16.msra.mxu0 %v3052
      %3467 = vmatpush.bf16.msra.mxu0 %v3050
      %3468 = vmatmul.bf16.gmra.mxu0 %v2385
      %v3469 = vpop.f32.mrf.mxu0
      %v3470 = vadd.f32 %v3451, %v3469
      %v3471 = vpop.f32.mrf.mxu0
      %v3472 = vadd.f32 %v3453, %v3471
      %3473 = vmatmul.bf16.gmra.mxu0 %v2398
      %v3474 = vpop.f32.mrf.mxu0
      %v3475 = vadd.f32 %v3456, %v3474
      %v3476 = vpop.f32.mrf.mxu0
      %v3477 = vadd.f32 %v3458, %v3476
      %3478 = vdwg.mxu0
      %3479 = vmatpush.bf16.msra.mxu0 %v3080
      %3480 = vmatpush.bf16.msra.mxu0 %v3078
      %3481 = vmatpush.bf16.msra.mxu0 %v3076
      %3482 = vmatpush.bf16.msra.mxu0 %v3074
      %3483 = vmatpush.bf16.msra.mxu0 %v3072
      %3484 = vmatpush.bf16.msra.mxu0 %v3070
      %3485 = vmatpush.bf16.msra.mxu0 %v3068
      %3486 = vmatpush.bf16.msra.mxu0 %v3066
      %3487 = vmatmul.bf16.gmra.mxu0 %v2386
      %v3488 = vpop.f32.mrf.mxu0
      %v3489 = vadd.f32 %v3470, %v3488
      %v3490 = vpop.f32.mrf.mxu0
      %v3491 = vadd.f32 %v3472, %v3490
      %3492 = vmatmul.bf16.gmra.mxu0 %v2399
      %v3493 = vpop.f32.mrf.mxu0
      %v3494 = vadd.f32 %v3475, %v3493
      %v3495 = vpop.f32.mrf.mxu0
      %v3496 = vadd.f32 %v3477, %v3495
      %3497 = vdwg.mxu0
      %3498 = vmatpush.bf16.msra.mxu0 %v3096
      %3499 = vmatpush.bf16.msra.mxu0 %v3094
      %3500 = vmatpush.bf16.msra.mxu0 %v3092
      %3501 = vmatpush.bf16.msra.mxu0 %v3090
      %3502 = vmatpush.bf16.msra.mxu0 %v3088
      %3503 = vmatpush.bf16.msra.mxu0 %v3086
      %3504 = vmatpush.bf16.msra.mxu0 %v3084
      %3505 = vmatpush.bf16.msra.mxu0 %v3082
      %3506 = vmatmul.bf16.gmra.mxu0 %v2387
      %v3507 = vpop.f32.mrf.mxu0
      %v3508 = vadd.f32 %v3489, %v3507
      %v3509 = vpop.f32.mrf.mxu0
      %v3510 = vadd.f32 %v3491, %v3509
      %3511 = vmatmul.bf16.gmra.mxu0 %v2400
      %v3512 = vpop.f32.mrf.mxu0
      %v3513 = vadd.f32 %v3494, %v3512
      %v3514 = vpop.f32.mrf.mxu0
      %v3515 = vadd.f32 %v3496, %v3514
      %3516 = vdwg.mxu0
      %3517 = vmatpush.bf16.msra.mxu0 %v3112
      %3518 = vmatpush.bf16.msra.mxu0 %v3110
      %3519 = vmatpush.bf16.msra.mxu0 %v3108
      %3520 = vmatpush.bf16.msra.mxu0 %v3106
      %3521 = vmatpush.bf16.msra.mxu0 %v3104
      %3522 = vmatpush.bf16.msra.mxu0 %v3102
      %3523 = vmatpush.bf16.msra.mxu0 %v3100
      %3524 = vmatpush.bf16.msra.mxu0 %v3098
      %3525 = vmatmul.bf16.gmra.mxu0 %v2388
      %v3526 = vpop.f32.mrf.mxu0
      %v3527 = vadd.f32 %v3508, %v3526
      %v3528 = vpop.f32.mrf.mxu0
      %v3529 = vadd.f32 %v3510, %v3528
      %3530 = vmatmul.bf16.gmra.mxu0 %v2401
      %v3531 = vpop.f32.mrf.mxu0
      %v3532 = vadd.f32 %v3513, %v3531
      %v3533 = vpop.f32.mrf.mxu0
      %v3534 = vadd.f32 %v3515, %v3533
      %3535 = vdwg.mxu0
      %3536 = vmatpush.bf16.msra.mxu0 %v3128
      %3537 = vmatpush.bf16.msra.mxu0 %v3126
      %3538 = vmatpush.bf16.msra.mxu0 %v3124
      %3539 = vmatpush.bf16.msra.mxu0 %v3122
      %3540 = vmatpush.bf16.msra.mxu0 %v3120
      %3541 = vmatpush.bf16.msra.mxu0 %v3118
      %3542 = vmatpush.bf16.msra.mxu0 %v3116
      %3543 = vmatpush.bf16.msra.mxu0 %v3114
      %3544 = vmatmul.bf16.gmra.mxu0 %v2389
      %v3545 = vpop.f32.mrf.mxu0
      %v3546 = vadd.f32 %v3527, %v3545
      %v3547 = vpop.f32.mrf.mxu0
      %v3548 = vadd.f32 %v3529, %v3547
      %3549 = vmatmul.bf16.gmra.mxu0 %v2402
      %v3550 = vpop.f32.mrf.mxu0
      %v3551 = vadd.f32 %v3532, %v3550
      %v3552 = vpop.f32.mrf.mxu0
      %v3553 = vadd.f32 %v3534, %v3552
      %3554 = vdwg.mxu0
      %3555 = vmatpush.bf16.msra.mxu0 %v3144
      %3556 = vmatpush.bf16.msra.mxu0 %v3142
      %3557 = vmatpush.bf16.msra.mxu0 %v3140
      %3558 = vmatpush.bf16.msra.mxu0 %v3138
      %3559 = vmatpush.bf16.msra.mxu0 %v3136
      %3560 = vmatpush.bf16.msra.mxu0 %v3134
      %3561 = vmatpush.bf16.msra.mxu0 %v3132
      %3562 = vmatpush.bf16.msra.mxu0 %v3130
      %3563 = vmatmul.bf16.gmra.mxu0 %v2390
      %v3564 = vpop.f32.mrf.mxu0
      %v3565 = vadd.f32 %v3546, %v3564
      %v3566 = vpop.f32.mrf.mxu0
      %v3567 = vadd.f32 %v3548, %v3566
      %3568 = vmatmul.bf16.gmra.mxu0 %v2403
      %v3569 = vpop.f32.mrf.mxu0
      %v3570 = vadd.f32 %v3551, %v3569
      %v3571 = vpop.f32.mrf.mxu0
      %v3572 = vadd.f32 %v3553, %v3571
      %3573 = vdwg.mxu0
      %3574 = vmatpush.bf16.msra.mxu0 %v3160
      %3575 = vmatpush.bf16.msra.mxu0 %v3158
      %3576 = vmatpush.bf16.msra.mxu0 %v3156
      %3577 = vmatpush.bf16.msra.mxu0 %v3154
      %3578 = vmatpush.bf16.msra.mxu0 %v3152
      %3579 = vmatpush.bf16.msra.mxu0 %v3150
      %3580 = vmatpush.bf16.msra.mxu0 %v3148
      %3581 = vmatpush.bf16.msra.mxu0 %v3146
      %3582 = vmatmul.bf16.gmra.mxu0 %v2391
      %v3583 = vpop.f32.mrf.mxu0
      %v3584 = vadd.f32 %v3565, %v3583
      %v3585 = vpop.f32.mrf.mxu0
      %v3586 = vadd.f32 %v3567, %v3585
      %3587 = vmatmul.bf16.gmra.mxu0 %v2404
      %v3588 = vpop.f32.mrf.mxu0
      %v3589 = vadd.f32 %v3570, %v3588
      %v3590 = vpop.f32.mrf.mxu0
      %v3591 = vadd.f32 %v3572, %v3590
      %3592 = vdwg.mxu0
      %3593 = vmatpush.bf16.msra.mxu0 %v3176
      %3594 = vmatpush.bf16.msra.mxu0 %v3174
      %3595 = vmatpush.bf16.msra.mxu0 %v3172
      %3596 = vmatpush.bf16.msra.mxu0 %v3170
      %3597 = vmatpush.bf16.msra.mxu0 %v3168
      %3598 = vmatpush.bf16.msra.mxu0 %v3166
      %3599 = vmatpush.bf16.msra.mxu0 %v3164
      %3600 = vmatpush.bf16.msra.mxu0 %v3162
      %3601 = vmatmul.bf16.gmra.mxu0 %v2392
      %v3602 = vpop.f32.mrf.mxu0
      %v3603 = vadd.f32 %v3584, %v3602
      %v3604 = vpop.f32.mrf.mxu0
      %v3605 = vadd.f32 %v3586, %v3604
      %3606 = vmatmul.bf16.gmra.mxu0 %v2405
      %v3607 = vpop.f32.mrf.mxu0
      %v3608 = vadd.f32 %v3589, %v3607
      %v3609 = vpop.f32.mrf.mxu0
      %v3610 = vadd.f32 %v3591, %v3609
      %3611 = vdwg.mxu0
      %3612 = vmatpush.bf16.msra.mxu0 %v3192
      %3613 = vmatpush.bf16.msra.mxu0 %v3190
      %3614 = vmatpush.bf16.msra.mxu0 %v3188
      %3615 = vmatpush.bf16.msra.mxu0 %v3186
      %3616 = vmatpush.bf16.msra.mxu0 %v3184
      %3617 = vmatpush.bf16.msra.mxu0 %v3182
      %3618 = vmatpush.bf16.msra.mxu0 %v3180
      %3619 = vmatpush.bf16.msra.mxu0 %v3178
      %3620 = vmatmul.bf16.gmra.mxu0 %v2393
      %v3621 = vpop.f32.mrf.mxu0
      %v3622 = vadd.f32 %v3603, %v3621
      %v3623 = vpop.f32.mrf.mxu0
      %v3624 = vadd.f32 %v3605, %v3623
      %3625 = vmatmul.bf16.gmra.mxu0 %v2406
      %v3626 = vpop.f32.mrf.mxu0
      %v3627 = vadd.f32 %v3608, %v3626
      %v3628 = vpop.f32.mrf.mxu0
      %v3629 = vadd.f32 %v3610, %v3628
      %3630 = vdwg.mxu0
      %3631 = vmatpush.bf16.msra.mxu0 %v3208
      %3632 = vmatpush.bf16.msra.mxu0 %v3206
      %3633 = vmatpush.bf16.msra.mxu0 %v3204
      %3634 = vmatpush.bf16.msra.mxu0 %v3202
      %3635 = vmatpush.bf16.msra.mxu0 %v3200
      %3636 = vmatpush.bf16.msra.mxu0 %v3198
      %3637 = vmatpush.bf16.msra.mxu0 %v3196
      %3638 = vmatpush.bf16.msra.mxu0 %v3194
      %3639 = vmatmul.bf16.gmra.mxu0 %v2394
      %v3640 = vpop.f32.mrf.mxu0
      %v3641 = vadd.f32 %v3622, %v3640
      %v3642 = vpop.f32.mrf.mxu0
      %v3643 = vadd.f32 %v3624, %v3642
      %3644 = vmatmul.bf16.gmra.mxu0 %v2407
      %v3645 = vpop.f32.mrf.mxu0
      %v3646 = vadd.f32 %v3627, %v3645
      %v3647 = vpop.f32.mrf.mxu0
      %v3648 = vadd.f32 %v3629, %v3647
      %3649 = vdwg.mxu0
      %3650 = vmatpush.bf16.msra.mxu0 %v3224
      %3651 = vmatpush.bf16.msra.mxu0 %v3222
      %3652 = vmatpush.bf16.msra.mxu0 %v3220
      %3653 = vmatpush.bf16.msra.mxu0 %v3218
      %3654 = vmatpush.bf16.msra.mxu0 %v3216
      %3655 = vmatpush.bf16.msra.mxu0 %v3214
      %3656 = vmatpush.bf16.msra.mxu0 %v3212
      %3657 = vmatpush.bf16.msra.mxu0 %v3210
      %3658 = vmatmul.bf16.gmra.mxu0 %v2395
      %v3659 = vpop.f32.mrf.mxu0
      %v3660 = vadd.f32 %v3641, %v3659
      %v3661 = vpop.f32.mrf.mxu0
      %v3662 = vadd.f32 %v3643, %v3661
      %3663 = vmatmul.bf16.gmra.mxu0 %v2408
      %v3664 = vpop.f32.mrf.mxu0
      %v3665 = vadd.f32 %v3646, %v3664
      %v3666 = vpop.f32.mrf.mxu0
      %v3667 = vadd.f32 %v3648, %v3666
      %3668 = vdwg.mxu0
      %3669 = vmatpush.bf16.msra.mxu0 0
      %3670 = vmatpush.bf16.msra.mxu0 0
      %3671 = vmatpush.bf16.msra.mxu0 0
      %3672 = vmatpush.bf16.msra.mxu0 0
      %3673 = vmatpush.bf16.msra.mxu0 %v3232
      %3674 = vmatpush.bf16.msra.mxu0 %v3230
      %3675 = vmatpush.bf16.msra.mxu0 %v3228
      %3676 = vmatpush.bf16.msra.mxu0 %v3226
      %3677 = vmatmul.bf16.gmra.mxu0 %v3436
      %v3678 = vpop.f32.mrf.mxu0
      %v3679 = vadd.f32 %v3660, %v3678
      %v3680 = vpop.f32.mrf.mxu0
      %v3681 = vadd.f32 %v3662, %v3680
      %3682 = vmatmul.bf16.gmra.mxu0 %v3439
      %v3683 = vpop.f32.mrf.mxu0
      %v3684 = vadd.f32 %v3665, %v3683
      %v3685 = vpop.f32.mrf.mxu0
      %v3686 = vadd.f32 %v3667, %v3685
      %3687 = vdwg.mxu0
      %3688 = vmatpush.bf16.msra.mxu0 %v3049
      %3689 = vmatpush.bf16.msra.mxu0 %v3047
      %3690 = vmatpush.bf16.msra.mxu0 %v3045
      %3691 = vmatpush.bf16.msra.mxu0 %v3043
      %3692 = vmatpush.bf16.msra.mxu0 %v3041
      %3693 = vmatpush.bf16.msra.mxu0 %v3039
      %3694 = vmatpush.bf16.msra.mxu0 %v3037
      %3695 = vmatpush.bf16.msra.mxu0 %v3035
      %3696 = vmatmul.bf16.gmra.mxu0 %v2384
      %v3697 = vpop.f32.mrf.mxu0
      %v3698 = vadd.f32 %v2287, %v3697
      %v3699 = vpop.f32.mrf.mxu0
      %v3700 = vadd.f32 %v2292, %v3699
      %3701 = vmatmul.bf16.gmra.mxu0 %v2397
      %v3702 = vpop.f32.mrf.mxu0
      %v3703 = vadd.f32 %v2297, %v3702
      %v3704 = vpop.f32.mrf.mxu0
      %v3705 = vadd.f32 %v2302, %v3704
      %3706 = vdwg.mxu0
      %3707 = vmatpush.bf16.msra.mxu0 %v3065
      %3708 = vmatpush.bf16.msra.mxu0 %v3063
      %3709 = vmatpush.bf16.msra.mxu0 %v3061
      %3710 = vmatpush.bf16.msra.mxu0 %v3059
      %3711 = vmatpush.bf16.msra.mxu0 %v3057
      %3712 = vmatpush.bf16.msra.mxu0 %v3055
      %3713 = vmatpush.bf16.msra.mxu0 %v3053
      %3714 = vmatpush.bf16.msra.mxu0 %v3051
      %3715 = vmatmul.bf16.gmra.mxu0 %v2385
      %v3716 = vpop.f32.mrf.mxu0
      %v3717 = vadd.f32 %v3698, %v3716
      %v3718 = vpop.f32.mrf.mxu0
      %v3719 = vadd.f32 %v3700, %v3718
      %3720 = vmatmul.bf16.gmra.mxu0 %v2398
      %v3721 = vpop.f32.mrf.mxu0
      %v3722 = vadd.f32 %v3703, %v3721
      %v3723 = vpop.f32.mrf.mxu0
      %v3724 = vadd.f32 %v3705, %v3723
      %3725 = vdwg.mxu0
      %3726 = vmatpush.bf16.msra.mxu0 %v3081
      %3727 = vmatpush.bf16.msra.mxu0 %v3079
      %3728 = vmatpush.bf16.msra.mxu0 %v3077
      %3729 = vmatpush.bf16.msra.mxu0 %v3075
      %3730 = vmatpush.bf16.msra.mxu0 %v3073
      %3731 = vmatpush.bf16.msra.mxu0 %v3071
      %3732 = vmatpush.bf16.msra.mxu0 %v3069
      %3733 = vmatpush.bf16.msra.mxu0 %v3067
      %3734 = vmatmul.bf16.gmra.mxu0 %v2386
      %v3735 = vpop.f32.mrf.mxu0
      %v3736 = vadd.f32 %v3717, %v3735
      %v3737 = vpop.f32.mrf.mxu0
      %v3738 = vadd.f32 %v3719, %v3737
      %3739 = vmatmul.bf16.gmra.mxu0 %v2399
      %v3740 = vpop.f32.mrf.mxu0
      %v3741 = vadd.f32 %v3722, %v3740
      %v3742 = vpop.f32.mrf.mxu0
      %v3743 = vadd.f32 %v3724, %v3742
      %3744 = vdwg.mxu0
      %3745 = vmatpush.bf16.msra.mxu0 %v3097
      %3746 = vmatpush.bf16.msra.mxu0 %v3095
      %3747 = vmatpush.bf16.msra.mxu0 %v3093
      %3748 = vmatpush.bf16.msra.mxu0 %v3091
      %3749 = vmatpush.bf16.msra.mxu0 %v3089
      %3750 = vmatpush.bf16.msra.mxu0 %v3087
      %3751 = vmatpush.bf16.msra.mxu0 %v3085
      %3752 = vmatpush.bf16.msra.mxu0 %v3083
      %3753 = vmatmul.bf16.gmra.mxu0 %v2387
      %v3754 = vpop.f32.mrf.mxu0
      %v3755 = vadd.f32 %v3736, %v3754
      %v3756 = vpop.f32.mrf.mxu0
      %v3757 = vadd.f32 %v3738, %v3756
      %3758 = vmatmul.bf16.gmra.mxu0 %v2400
      %v3759 = vpop.f32.mrf.mxu0
      %v3760 = vadd.f32 %v3741, %v3759
      %v3761 = vpop.f32.mrf.mxu0
      %v3762 = vadd.f32 %v3743, %v3761
      %3763 = vdwg.mxu0
      %3764 = vmatpush.bf16.msra.mxu0 %v3113
      %3765 = vmatpush.bf16.msra.mxu0 %v3111
      %3766 = vmatpush.bf16.msra.mxu0 %v3109
      %3767 = vmatpush.bf16.msra.mxu0 %v3107
      %3768 = vmatpush.bf16.msra.mxu0 %v3105
      %3769 = vmatpush.bf16.msra.mxu0 %v3103
      %3770 = vmatpush.bf16.msra.mxu0 %v3101
      %3771 = vmatpush.bf16.msra.mxu0 %v3099
      %3772 = vmatmul.bf16.gmra.mxu0 %v2388
      %v3773 = vpop.f32.mrf.mxu0
      %v3774 = vadd.f32 %v3755, %v3773
      %v3775 = vpop.f32.mrf.mxu0
      %v3776 = vadd.f32 %v3757, %v3775
      %3777 = vmatmul.bf16.gmra.mxu0 %v2401
      %v3778 = vpop.f32.mrf.mxu0
      %v3779 = vadd.f32 %v3760, %v3778
      %v3780 = vpop.f32.mrf.mxu0
      %v3781 = vadd.f32 %v3762, %v3780
      %3782 = vdwg.mxu0
      %3783 = vmatpush.bf16.msra.mxu0 %v3129
      %3784 = vmatpush.bf16.msra.mxu0 %v3127
      %3785 = vmatpush.bf16.msra.mxu0 %v3125
      %3786 = vmatpush.bf16.msra.mxu0 %v3123
      %3787 = vmatpush.bf16.msra.mxu0 %v3121
      %3788 = vmatpush.bf16.msra.mxu0 %v3119
      %3789 = vmatpush.bf16.msra.mxu0 %v3117
      %3790 = vmatpush.bf16.msra.mxu0 %v3115
      %3791 = vmatmul.bf16.gmra.mxu0 %v2389
      %v3792 = vpop.f32.mrf.mxu0
      %v3793 = vadd.f32 %v3774, %v3792
      %v3794 = vpop.f32.mrf.mxu0
      %v3795 = vadd.f32 %v3776, %v3794
      %3796 = vmatmul.bf16.gmra.mxu0 %v2402
      %v3797 = vpop.f32.mrf.mxu0
      %v3798 = vadd.f32 %v3779, %v3797
      %v3799 = vpop.f32.mrf.mxu0
      %v3800 = vadd.f32 %v3781, %v3799
      %3801 = vdwg.mxu0
      %3802 = vmatpush.bf16.msra.mxu0 %v3145
      %3803 = vmatpush.bf16.msra.mxu0 %v3143
      %3804 = vmatpush.bf16.msra.mxu0 %v3141
      %3805 = vmatpush.bf16.msra.mxu0 %v3139
      %3806 = vmatpush.bf16.msra.mxu0 %v3137
      %3807 = vmatpush.bf16.msra.mxu0 %v3135
      %3808 = vmatpush.bf16.msra.mxu0 %v3133
      %3809 = vmatpush.bf16.msra.mxu0 %v3131
      %3810 = vmatmul.bf16.gmra.mxu0 %v2390
      %v3811 = vpop.f32.mrf.mxu0
      %v3812 = vadd.f32 %v3793, %v3811
      %v3813 = vpop.f32.mrf.mxu0
      %v3814 = vadd.f32 %v3795, %v3813
      %3815 = vmatmul.bf16.gmra.mxu0 %v2403
      %v3816 = vpop.f32.mrf.mxu0
      %v3817 = vadd.f32 %v3798, %v3816
      %v3818 = vpop.f32.mrf.mxu0
      %v3819 = vadd.f32 %v3800, %v3818
      %3820 = vdwg.mxu0
      %3821 = vmatpush.bf16.msra.mxu0 %v3161
      %3822 = vmatpush.bf16.msra.mxu0 %v3159
      %3823 = vmatpush.bf16.msra.mxu0 %v3157
      %3824 = vmatpush.bf16.msra.mxu0 %v3155
      %3825 = vmatpush.bf16.msra.mxu0 %v3153
      %3826 = vmatpush.bf16.msra.mxu0 %v3151
      %3827 = vmatpush.bf16.msra.mxu0 %v3149
      %3828 = vmatpush.bf16.msra.mxu0 %v3147
      %3829 = vmatmul.bf16.gmra.mxu0 %v2391
      %v3830 = vpop.f32.mrf.mxu0
      %v3831 = vadd.f32 %v3812, %v3830
      %v3832 = vpop.f32.mrf.mxu0
      %v3833 = vadd.f32 %v3814, %v3832
      %3834 = vmatmul.bf16.gmra.mxu0 %v2404
      %v3835 = vpop.f32.mrf.mxu0
      %v3836 = vadd.f32 %v3817, %v3835
      %v3837 = vpop.f32.mrf.mxu0
      %v3838 = vadd.f32 %v3819, %v3837
      %3839 = vdwg.mxu0
      %3840 = vmatpush.bf16.msra.mxu0 %v3177
      %3841 = vmatpush.bf16.msra.mxu0 %v3175
      %3842 = vmatpush.bf16.msra.mxu0 %v3173
      %3843 = vmatpush.bf16.msra.mxu0 %v3171
      %3844 = vmatpush.bf16.msra.mxu0 %v3169
      %3845 = vmatpush.bf16.msra.mxu0 %v3167
      %3846 = vmatpush.bf16.msra.mxu0 %v3165
      %3847 = vmatpush.bf16.msra.mxu0 %v3163
      %3848 = vmatmul.bf16.gmra.mxu0 %v2392
      %v3849 = vpop.f32.mrf.mxu0
      %v3850 = vadd.f32 %v3831, %v3849
      %v3851 = vpop.f32.mrf.mxu0
      %v3852 = vadd.f32 %v3833, %v3851
      %3853 = vmatmul.bf16.gmra.mxu0 %v2405
      %v3854 = vpop.f32.mrf.mxu0
      %v3855 = vadd.f32 %v3836, %v3854
      %v3856 = vpop.f32.mrf.mxu0
      %v3857 = vadd.f32 %v3838, %v3856
      %3858 = vdwg.mxu0
      %3859 = vmatpush.bf16.msra.mxu0 %v3193
      %3860 = vmatpush.bf16.msra.mxu0 %v3191
      %3861 = vmatpush.bf16.msra.mxu0 %v3189
      %3862 = vmatpush.bf16.msra.mxu0 %v3187
      %3863 = vmatpush.bf16.msra.mxu0 %v3185
      %3864 = vmatpush.bf16.msra.mxu0 %v3183
      %3865 = vmatpush.bf16.msra.mxu0 %v3181
      %3866 = vmatpush.bf16.msra.mxu0 %v3179
      %3867 = vmatmul.bf16.gmra.mxu0 %v2393
      %v3868 = vpop.f32.mrf.mxu0
      %v3869 = vadd.f32 %v3850, %v3868
      %v3870 = vpop.f32.mrf.mxu0
      %v3871 = vadd.f32 %v3852, %v3870
      %3872 = vmatmul.bf16.gmra.mxu0 %v2406
      %v3873 = vpop.f32.mrf.mxu0
      %v3874 = vadd.f32 %v3855, %v3873
      %v3875 = vpop.f32.mrf.mxu0
      %v3876 = vadd.f32 %v3857, %v3875
      %3877 = vdwg.mxu0
      %3878 = vmatpush.bf16.msra.mxu0 %v3209
      %3879 = vmatpush.bf16.msra.mxu0 %v3207
      %3880 = vmatpush.bf16.msra.mxu0 %v3205
      %3881 = vmatpush.bf16.msra.mxu0 %v3203
      %3882 = vmatpush.bf16.msra.mxu0 %v3201
      %3883 = vmatpush.bf16.msra.mxu0 %v3199
      %3884 = vmatpush.bf16.msra.mxu0 %v3197
      %3885 = vmatpush.bf16.msra.mxu0 %v3195
      %3886 = vmatmul.bf16.gmra.mxu0 %v2394
      %v3887 = vpop.f32.mrf.mxu0
      %v3888 = vadd.f32 %v3869, %v3887
      %v3889 = vpop.f32.mrf.mxu0
      %v3890 = vadd.f32 %v3871, %v3889
      %3891 = vmatmul.bf16.gmra.mxu0 %v2407
      %v3892 = vpop.f32.mrf.mxu0
      %v3893 = vadd.f32 %v3874, %v3892
      %v3894 = vpop.f32.mrf.mxu0
      %v3895 = vadd.f32 %v3876, %v3894
      %3896 = vdwg.mxu0
      %3897 = vmatpush.bf16.msra.mxu0 %v3225
      %3898 = vmatpush.bf16.msra.mxu0 %v3223
      %3899 = vmatpush.bf16.msra.mxu0 %v3221
      %3900 = vmatpush.bf16.msra.mxu0 %v3219
      %3901 = vmatpush.bf16.msra.mxu0 %v3217
      %3902 = vmatpush.bf16.msra.mxu0 %v3215
      %3903 = vmatpush.bf16.msra.mxu0 %v3213
      %3904 = vmatpush.bf16.msra.mxu0 %v3211
      %3905 = vmatmul.bf16.gmra.mxu0 %v2395
      %v3906 = vpop.f32.mrf.mxu0
      %v3907 = vadd.f32 %v3888, %v3906
      %v3908 = vpop.f32.mrf.mxu0
      %v3909 = vadd.f32 %v3890, %v3908
      %3910 = vmatmul.bf16.gmra.mxu0 %v2408
      %v3911 = vpop.f32.mrf.mxu0
      %v3912 = vadd.f32 %v3893, %v3911
      %v3913 = vpop.f32.mrf.mxu0
      %v3914 = vadd.f32 %v3895, %v3913
      %3915 = vdwg.mxu0
      %3916 = vmatpush.bf16.msra.mxu0 0
      %3917 = vmatpush.bf16.msra.mxu0 0
      %3918 = vmatpush.bf16.msra.mxu0 0
      %3919 = vmatpush.bf16.msra.mxu0 0
      %3920 = vmatpush.bf16.msra.mxu0 %v3233
      %3921 = vmatpush.bf16.msra.mxu0 %v3231
      %3922 = vmatpush.bf16.msra.mxu0 %v3229
      %3923 = vmatpush.bf16.msra.mxu0 %v3227
      %3924 = vmatmul.bf16.gmra.mxu0 %v3436
      %v3925 = vpop.f32.mrf.mxu0
      %v3926 = vadd.f32 %v3907, %v3925
      %v3927 = vpop.f32.mrf.mxu0
      %v3928 = vadd.f32 %v3909, %v3927
      %3929 = vmatmul.bf16.gmra.mxu0 %v3439
      %v3930 = vpop.f32.mrf.mxu0
      %v3931 = vadd.f32 %v3912, %v3930
      %v3932 = vpop.f32.mrf.mxu0
      %v3933 = vadd.f32 %v3914, %v3932
      %3934 = vdwg.mxu0
      %v3935 = vmax.f32 %v3679, 0.0
      %v3936 = vmax.f32 %v3926, 0.0
      %v3937 = vmax.f32 %v3681, 0.0
      %v3938 = vmax.f32 %v3928, 0.0
      %v3939 = vmax.f32 %v3684, 0.0
      %v3940 = vmax.f32 %v3931, 0.0
      %v3941 = vmax.f32 %v3686, 0.0
      %v3942 = vmax.f32 %v3933, 0.0
      %v3943 = vpack.c.bf16 %v3936, %v3935
      %v3944 = vpack.c.bf16 %v3938, %v3937
      %v3945 = vpack.c.bf16 %v3940, %v3939
      %v3946 = vpack.c.bf16 %v3942, %v3941
      %3947 = vst.msk [vmem:[#allocation3] sm:$0xff] %vm290, %v3943
      %3948 = vst.msk [vmem:[#allocation3 + $0x8] sm:$0xff] %vm290, %v3944
      %3949 = vst.msk [vmem:[#allocation3 + $0x10] sm:$0xff] %vm290, %v3945
      %3950 = vst.msk [vmem:[#allocation3 + $0x18] sm:$0xff] %vm290, %v3946
      %vm3951 = vcmask 552448
      %3952 = vst.msk [vmem:[#allocation3 + $0x4] sm:$0xf] %vm3951, 0
      %3953 = vst.msk [vmem:[#allocation3 + $0xc] sm:$0xf] %vm3951, 0
      %3954 = vst.msk [vmem:[#allocation3 + $0x14] sm:$0xf] %vm3951, 0
      %3955 = vst.msk [vmem:[#allocation3 + $0x1c] sm:$0xf] %vm3951, 0
      %v3956 = vld [vmem:[#allocation3] sm:$0xf]
      %v3957 = vld [vmem:[#allocation3 + $0x8] sm:$0xf]
      %v3958 = vld [vmem:[#allocation3 + $0x10] sm:$0xf]
      %v3959 = vld [vmem:[#allocation3 + $0x18] sm:$0xf]
      %3960 = vst [vmem:[#allocation4] sm:$0xf] %v3956
      %3961 = vst [vmem:[#allocation4 + $0x4] sm:$0xf] %v3957
      %3962 = vst [vmem:[#allocation4 + $0x8] sm:$0xf] %v3958
      %3963 = vst [vmem:[#allocation4 + $0xc] sm:$0xf] %v3959
      %v3964 = vld [vmem:[#allocation3] sm:$0xff]
      %v3965 = vld [vmem:[#allocation3 + $0x8] sm:$0xff]
      %v3966 = vld [vmem:[#allocation3 + $0x10] sm:$0xff]
      %v3967 = vld [vmem:[#allocation3 + $0x18] sm:$0xff]
      %3972 = vrot.lane.b32.xlu0 %v3964, 127
      %v3973 = vpop.permute.xlu0 %3972
      %3974 = vrot.lane.b32.xlu0 %v3965, 127
      %v3975 = vpop.permute.xlu0 %3974
      %3976 = vrot.lane.b32.xlu0 %v3966, 127
      %v3977 = vpop.permute.xlu0 %3976
      %3978 = vrot.lane.b32.xlu0 %v3967, 127
      %v3979 = vpop.permute.xlu0 %3978
      %v3980 = vrot.slane %v3973, 4
      %v3981 = vrot.slane %v3975, 4
      %v3982 = vrot.slane %v3977, 4
      %v3983 = vrot.slane %v3979, 4
      %v3984 = vsel %vm339, %v3973, %v3980
      %v3985 = vsel %vm339, %v3975, %v3981
      %v3986 = vsel %vm339, %v3977, %v3982
      %v3987 = vsel %vm339, %v3979, %v3983
      %3992 = vst [vmem:[#allocation4 + $0x10] sm:$0xf] %v3984
      %3993 = vst [vmem:[#allocation4 + $0x14] sm:$0xf] %v3985
      %3994 = vst [vmem:[#allocation4 + $0x18] sm:$0xf] %v3986
      %3995 = vst [vmem:[#allocation4 + $0x1c] sm:$0xf] %v3987
      %v3996 = vld [vmem:[#allocation3] sm:$0xff]
      %v3997 = vld [vmem:[#allocation3 + $0x8] sm:$0xff]
      %v3998 = vld [vmem:[#allocation3 + $0x10] sm:$0xff]
      %v3999 = vld [vmem:[#allocation3 + $0x18] sm:$0xff]
      %4004 = vrot.lane.b32.xlu0 %v3996, 126
      %v4005 = vpop.permute.xlu0 %4004
      %4006 = vrot.lane.b32.xlu0 %v3997, 126
      %v4007 = vpop.permute.xlu0 %4006
      %4008 = vrot.lane.b32.xlu0 %v3998, 126
      %v4009 = vpop.permute.xlu0 %4008
      %4010 = vrot.lane.b32.xlu0 %v3999, 126
      %v4011 = vpop.permute.xlu0 %4010
      %v4012 = vrot.slane %v4005, 4
      %v4013 = vrot.slane %v4007, 4
      %v4014 = vrot.slane %v4009, 4
      %v4015 = vrot.slane %v4011, 4
      %v4016 = vsel %vm404, %v4005, %v4012
      %v4017 = vsel %vm404, %v4007, %v4013
      %v4018 = vsel %vm404, %v4009, %v4014
      %v4019 = vsel %vm404, %v4011, %v4015
      %4024 = vst [vmem:[#allocation4 + $0x20] sm:$0xf] %v4016
      %4025 = vst [vmem:[#allocation4 + $0x24] sm:$0xf] %v4017
      %4026 = vst [vmem:[#allocation4 + $0x28] sm:$0xf] %v4018
      %4027 = vst [vmem:[#allocation4 + $0x2c] sm:$0xf] %v4019
      %v4028 = vld [vmem:[#allocation3] sm:$0xff]
      %v4029 = vld [vmem:[#allocation3 + $0x8] sm:$0xff]
      %v4030 = vld [vmem:[#allocation3 + $0x10] sm:$0xff]
      %v4031 = vld [vmem:[#allocation3 + $0x18] sm:$0xff]
      %4036 = vrot.lane.b32.xlu0 %v4028, 125
      %v4037 = vpop.permute.xlu0 %4036
      %4038 = vrot.lane.b32.xlu0 %v4029, 125
      %v4039 = vpop.permute.xlu0 %4038
      %4040 = vrot.lane.b32.xlu0 %v4030, 125
      %v4041 = vpop.permute.xlu0 %4040
      %4042 = vrot.lane.b32.xlu0 %v4031, 125
      %v4043 = vpop.permute.xlu0 %4042
      %v4044 = vrot.slane %v4037, 4
      %v4045 = vrot.slane %v4039, 4
      %v4046 = vrot.slane %v4041, 4
      %v4047 = vrot.slane %v4043, 4
      %v4048 = vsel %vm469, %v4037, %v4044
      %v4049 = vsel %vm469, %v4039, %v4045
      %v4050 = vsel %vm469, %v4041, %v4046
      %v4051 = vsel %vm469, %v4043, %v4047
      %4056 = vst [vmem:[#allocation4 + $0x30] sm:$0xf] %v4048
      %4057 = vst [vmem:[#allocation4 + $0x34] sm:$0xf] %v4049
      %4058 = vst [vmem:[#allocation4 + $0x38] sm:$0xf] %v4050
      %4059 = vst [vmem:[#allocation4 + $0x3c] sm:$0xf] %v4051
      %v4060 = vld [vmem:[#allocation3] sm:$0xff]
      %v4061 = vld [vmem:[#allocation3 + $0x8] sm:$0xff]
      %v4062 = vld [vmem:[#allocation3 + $0x10] sm:$0xff]
      %v4063 = vld [vmem:[#allocation3 + $0x18] sm:$0xff]
      %4068 = vrot.lane.b32.xlu0 %v4060, 124
      %v4069 = vpop.permute.xlu0 %4068
      %4070 = vrot.lane.b32.xlu0 %v4061, 124
      %v4071 = vpop.permute.xlu0 %4070
      %4072 = vrot.lane.b32.xlu0 %v4062, 124
      %v4073 = vpop.permute.xlu0 %4072
      %4074 = vrot.lane.b32.xlu0 %v4063, 124
      %v4075 = vpop.permute.xlu0 %4074
      %v4076 = vrot.slane %v4069, 4
      %v4077 = vrot.slane %v4071, 4
      %v4078 = vrot.slane %v4073, 4
      %v4079 = vrot.slane %v4075, 4
      %v4080 = vsel %vm534, %v4069, %v4076
      %v4081 = vsel %vm534, %v4071, %v4077
      %v4082 = vsel %vm534, %v4073, %v4078
      %v4083 = vsel %vm534, %v4075, %v4079
      %4088 = vst [vmem:[#allocation4 + $0x40] sm:$0xf] %v4080
      %4089 = vst [vmem:[#allocation4 + $0x44] sm:$0xf] %v4081
      %4090 = vst [vmem:[#allocation4 + $0x48] sm:$0xf] %v4082
      %4091 = vst [vmem:[#allocation4 + $0x4c] sm:$0xf] %v4083
      %v4092 = vld [vmem:[#allocation3] sm:$0xff]
      %v4093 = vld [vmem:[#allocation3 + $0x8] sm:$0xff]
      %v4094 = vld [vmem:[#allocation3 + $0x10] sm:$0xff]
      %v4095 = vld [vmem:[#allocation3 + $0x18] sm:$0xff]
      %4100 = vrot.lane.b32.xlu0 %v4092, 112
      %v4101 = vpop.permute.xlu0 %4100
      %4102 = vrot.lane.b32.xlu0 %v4093, 112
      %v4103 = vpop.permute.xlu0 %4102
      %4104 = vrot.lane.b32.xlu0 %v4094, 112
      %v4105 = vpop.permute.xlu0 %4104
      %4106 = vrot.lane.b32.xlu0 %v4095, 112
      %v4107 = vpop.permute.xlu0 %4106
      %v4108 = vrot.slane %v4101, 4
      %v4109 = vrot.slane %v4103, 4
      %v4110 = vrot.slane %v4105, 4
      %v4111 = vrot.slane %v4107, 4
      %v4112 = vsel %vm599, %v4101, %v4108
      %v4113 = vsel %vm599, %v4103, %v4109
      %v4114 = vsel %vm599, %v4105, %v4110
      %v4115 = vsel %vm599, %v4107, %v4111
      %4120 = vst [vmem:[#allocation4 + $0x50] sm:$0xf] %v4112
      %4121 = vst [vmem:[#allocation4 + $0x54] sm:$0xf] %v4113
      %4122 = vst [vmem:[#allocation4 + $0x58] sm:$0xf] %v4114
      %4123 = vst [vmem:[#allocation4 + $0x5c] sm:$0xf] %v4115
      %v4124 = vld [vmem:[#allocation3] sm:$0xff]
      %v4125 = vld [vmem:[#allocation3 + $0x8] sm:$0xff]
      %v4126 = vld [vmem:[#allocation3 + $0x10] sm:$0xff]
      %v4127 = vld [vmem:[#allocation3 + $0x18] sm:$0xff]
      %4132 = vrot.lane.b32.xlu0 %v4124, 111
      %v4133 = vpop.permute.xlu0 %4132
      %4134 = vrot.lane.b32.xlu0 %v4125, 111
      %v4135 = vpop.permute.xlu0 %4134
      %4136 = vrot.lane.b32.xlu0 %v4126, 111
      %v4137 = vpop.permute.xlu0 %4136
      %4138 = vrot.lane.b32.xlu0 %v4127, 111
      %v4139 = vpop.permute.xlu0 %4138
      %v4140 = vrot.slane %v4133, 4
      %v4141 = vrot.slane %v4135, 4
      %v4142 = vrot.slane %v4137, 4
      %v4143 = vrot.slane %v4139, 4
      %v4144 = vsel %vm664, %v4133, %v4140
      %v4145 = vsel %vm664, %v4135, %v4141
      %v4146 = vsel %vm664, %v4137, %v4142
      %v4147 = vsel %vm664, %v4139, %v4143
      %4152 = vst [vmem:[#allocation4 + $0x60] sm:$0xf] %v4144
      %4153 = vst [vmem:[#allocation4 + $0x64] sm:$0xf] %v4145
      %4154 = vst [vmem:[#allocation4 + $0x68] sm:$0xf] %v4146
      %4155 = vst [vmem:[#allocation4 + $0x6c] sm:$0xf] %v4147
      %v4156 = vld [vmem:[#allocation3] sm:$0xff]
      %v4157 = vld [vmem:[#allocation3 + $0x8] sm:$0xff]
      %v4158 = vld [vmem:[#allocation3 + $0x10] sm:$0xff]
      %v4159 = vld [vmem:[#allocation3 + $0x18] sm:$0xff]
      %4164 = vrot.lane.b32.xlu0 %v4156, 110
      %v4165 = vpop.permute.xlu0 %4164
      %4166 = vrot.lane.b32.xlu0 %v4157, 110
      %v4167 = vpop.permute.xlu0 %4166
      %4168 = vrot.lane.b32.xlu0 %v4158, 110
      %v4169 = vpop.permute.xlu0 %4168
      %4170 = vrot.lane.b32.xlu0 %v4159, 110
      %v4171 = vpop.permute.xlu0 %4170
      %v4172 = vrot.slane %v4165, 4
      %v4173 = vrot.slane %v4167, 4
      %v4174 = vrot.slane %v4169, 4
      %v4175 = vrot.slane %v4171, 4
      %v4176 = vsel %vm729, %v4165, %v4172
      %v4177 = vsel %vm729, %v4167, %v4173
      %v4178 = vsel %vm729, %v4169, %v4174
      %v4179 = vsel %vm729, %v4171, %v4175
      %4184 = vst [vmem:[#allocation4 + $0x70] sm:$0xf] %v4176
      %4185 = vst [vmem:[#allocation4 + $0x74] sm:$0xf] %v4177
      %4186 = vst [vmem:[#allocation4 + $0x78] sm:$0xf] %v4178
      %4187 = vst [vmem:[#allocation4 + $0x7c] sm:$0xf] %v4179
      %v4188 = vld [vmem:[#allocation3] sm:$0xff]
      %v4189 = vld [vmem:[#allocation3 + $0x8] sm:$0xff]
      %v4190 = vld [vmem:[#allocation3 + $0x10] sm:$0xff]
      %v4191 = vld [vmem:[#allocation3 + $0x18] sm:$0xff]
      %4196 = vrot.lane.b32.xlu0 %v4188, 109
      %v4197 = vpop.permute.xlu0 %4196
      %4198 = vrot.lane.b32.xlu0 %v4189, 109
      %v4199 = vpop.permute.xlu0 %4198
      %4200 = vrot.lane.b32.xlu0 %v4190, 109
      %v4201 = vpop.permute.xlu0 %4200
      %4202 = vrot.lane.b32.xlu0 %v4191, 109
      %v4203 = vpop.permute.xlu0 %4202
      %v4204 = vrot.slane %v4197, 4
      %v4205 = vrot.slane %v4199, 4
      %v4206 = vrot.slane %v4201, 4
      %v4207 = vrot.slane %v4203, 4
      %v4208 = vsel %vm794, %v4197, %v4204
      %v4209 = vsel %vm794, %v4199, %v4205
      %v4210 = vsel %vm794, %v4201, %v4206
      %v4211 = vsel %vm794, %v4203, %v4207
      %4216 = vst [vmem:[#allocation4 + $0x80] sm:$0xf] %v4208
      %4217 = vst [vmem:[#allocation4 + $0x84] sm:$0xf] %v4209
      %4218 = vst [vmem:[#allocation4 + $0x88] sm:$0xf] %v4210
      %4219 = vst [vmem:[#allocation4 + $0x8c] sm:$0xf] %v4211
      %v4220 = vld [vmem:[#allocation3] sm:$0xff]
      %v4221 = vld [vmem:[#allocation3 + $0x8] sm:$0xff]
      %v4222 = vld [vmem:[#allocation3 + $0x10] sm:$0xff]
      %v4223 = vld [vmem:[#allocation3 + $0x18] sm:$0xff]
      %4228 = vrot.lane.b32.xlu0 %v4220, 108
      %v4229 = vpop.permute.xlu0 %4228
      %4230 = vrot.lane.b32.xlu0 %v4221, 108
      %v4231 = vpop.permute.xlu0 %4230
      %4232 = vrot.lane.b32.xlu0 %v4222, 108
      %v4233 = vpop.permute.xlu0 %4232
      %4234 = vrot.lane.b32.xlu0 %v4223, 108
      %v4235 = vpop.permute.xlu0 %4234
      %v4236 = vrot.slane %v4229, 4
      %v4237 = vrot.slane %v4231, 4
      %v4238 = vrot.slane %v4233, 4
      %v4239 = vrot.slane %v4235, 4
      %v4240 = vsel %vm859, %v4229, %v4236
      %v4241 = vsel %vm859, %v4231, %v4237
      %v4242 = vsel %vm859, %v4233, %v4238
      %v4243 = vsel %vm859, %v4235, %v4239
      %4248 = vst [vmem:[#allocation4 + $0x90] sm:$0xf] %v4240
      %4249 = vst [vmem:[#allocation4 + $0x94] sm:$0xf] %v4241
      %4250 = vst [vmem:[#allocation4 + $0x98] sm:$0xf] %v4242
      %4251 = vst [vmem:[#allocation4 + $0x9c] sm:$0xf] %v4243
      %v4252 = vld [vmem:[#allocation3] sm:$0xff]
      %v4253 = vld [vmem:[#allocation3 + $0x8] sm:$0xff]
      %v4254 = vld [vmem:[#allocation3 + $0x10] sm:$0xff]
      %v4255 = vld [vmem:[#allocation3 + $0x18] sm:$0xff]
      %4260 = vrot.lane.b32.xlu0 %v4252, 96
      %v4261 = vpop.permute.xlu0 %4260
      %4262 = vrot.lane.b32.xlu0 %v4253, 96
      %v4263 = vpop.permute.xlu0 %4262
      %4264 = vrot.lane.b32.xlu0 %v4254, 96
      %v4265 = vpop.permute.xlu0 %4264
      %4266 = vrot.lane.b32.xlu0 %v4255, 96
      %v4267 = vpop.permute.xlu0 %4266
      %v4268 = vrot.slane %v4261, 4
      %v4269 = vrot.slane %v4263, 4
      %v4270 = vrot.slane %v4265, 4
      %v4271 = vrot.slane %v4267, 4
      %v4272 = vsel %vm924, %v4261, %v4268
      %v4273 = vsel %vm924, %v4263, %v4269
      %v4274 = vsel %vm924, %v4265, %v4270
      %v4275 = vsel %vm924, %v4267, %v4271
      %4280 = vst [vmem:[#allocation4 + $0xa0] sm:$0xf] %v4272
      %4281 = vst [vmem:[#allocation4 + $0xa4] sm:$0xf] %v4273
      %4282 = vst [vmem:[#allocation4 + $0xa8] sm:$0xf] %v4274
      %4283 = vst [vmem:[#allocation4 + $0xac] sm:$0xf] %v4275
      %v4284 = vld [vmem:[#allocation3] sm:$0xff]
      %v4285 = vld [vmem:[#allocation3 + $0x8] sm:$0xff]
      %v4286 = vld [vmem:[#allocation3 + $0x10] sm:$0xff]
      %v4287 = vld [vmem:[#allocation3 + $0x18] sm:$0xff]
      %4292 = vrot.lane.b32.xlu0 %v4284, 95
      %v4293 = vpop.permute.xlu0 %4292
      %4294 = vrot.lane.b32.xlu0 %v4285, 95
      %v4295 = vpop.permute.xlu0 %4294
      %4296 = vrot.lane.b32.xlu0 %v4286, 95
      %v4297 = vpop.permute.xlu0 %4296
      %4298 = vrot.lane.b32.xlu0 %v4287, 95
      %v4299 = vpop.permute.xlu0 %4298
      %v4300 = vrot.slane %v4293, 4
      %v4301 = vrot.slane %v4295, 4
      %v4302 = vrot.slane %v4297, 4
      %v4303 = vrot.slane %v4299, 4
      %v4304 = vsel %vm989, %v4293, %v4300
      %v4305 = vsel %vm989, %v4295, %v4301
      %v4306 = vsel %vm989, %v4297, %v4302
      %v4307 = vsel %vm989, %v4299, %v4303
      %4312 = vst [vmem:[#allocation4 + $0xb0] sm:$0xf] %v4304
      %4313 = vst [vmem:[#allocation4 + $0xb4] sm:$0xf] %v4305
      %4314 = vst [vmem:[#allocation4 + $0xb8] sm:$0xf] %v4306
      %4315 = vst [vmem:[#allocation4 + $0xbc] sm:$0xf] %v4307
      %v4316 = vld [vmem:[#allocation3] sm:$0xff]
      %v4317 = vld [vmem:[#allocation3 + $0x8] sm:$0xff]
      %v4318 = vld [vmem:[#allocation3 + $0x10] sm:$0xff]
      %v4319 = vld [vmem:[#allocation3 + $0x18] sm:$0xff]
      %4324 = vrot.lane.b32.xlu0 %v4316, 94
      %v4325 = vpop.permute.xlu0 %4324
      %4326 = vrot.lane.b32.xlu0 %v4317, 94
      %v4327 = vpop.permute.xlu0 %4326
      %4328 = vrot.lane.b32.xlu0 %v4318, 94
      %v4329 = vpop.permute.xlu0 %4328
      %4330 = vrot.lane.b32.xlu0 %v4319, 94
      %v4331 = vpop.permute.xlu0 %4330
      %v4332 = vrot.slane %v4325, 4
      %v4333 = vrot.slane %v4327, 4
      %v4334 = vrot.slane %v4329, 4
      %v4335 = vrot.slane %v4331, 4
      %v4336 = vsel %vm1054, %v4325, %v4332
      %v4337 = vsel %vm1054, %v4327, %v4333
      %v4338 = vsel %vm1054, %v4329, %v4334
      %v4339 = vsel %vm1054, %v4331, %v4335
      %4344 = vst [vmem:[#allocation4 + $0xc0] sm:$0xf] %v4336
      %4345 = vst [vmem:[#allocation4 + $0xc4] sm:$0xf] %v4337
      %4346 = vst [vmem:[#allocation4 + $0xc8] sm:$0xf] %v4338
      %4347 = vst [vmem:[#allocation4 + $0xcc] sm:$0xf] %v4339
      %v4348 = vld [vmem:[#allocation3] sm:$0xff]
      %v4349 = vld [vmem:[#allocation3 + $0x8] sm:$0xff]
      %v4350 = vld [vmem:[#allocation3 + $0x10] sm:$0xff]
      %v4351 = vld [vmem:[#allocation3 + $0x18] sm:$0xff]
      %4356 = vrot.lane.b32.xlu0 %v4348, 93
      %v4357 = vpop.permute.xlu0 %4356
      %4358 = vrot.lane.b32.xlu0 %v4349, 93
      %v4359 = vpop.permute.xlu0 %4358
      %4360 = vrot.lane.b32.xlu0 %v4350, 93
      %v4361 = vpop.permute.xlu0 %4360
      %4362 = vrot.lane.b32.xlu0 %v4351, 93
      %v4363 = vpop.permute.xlu0 %4362
      %v4364 = vrot.slane %v4357, 4
      %v4365 = vrot.slane %v4359, 4
      %v4366 = vrot.slane %v4361, 4
      %v4367 = vrot.slane %v4363, 4
      %v4368 = vsel %vm1119, %v4357, %v4364
      %v4369 = vsel %vm1119, %v4359, %v4365
      %v4370 = vsel %vm1119, %v4361, %v4366
      %v4371 = vsel %vm1119, %v4363, %v4367
      %4376 = vst [vmem:[#allocation4 + $0xd0] sm:$0xf] %v4368
      %4377 = vst [vmem:[#allocation4 + $0xd4] sm:$0xf] %v4369
      %4378 = vst [vmem:[#allocation4 + $0xd8] sm:$0xf] %v4370
      %4379 = vst [vmem:[#allocation4 + $0xdc] sm:$0xf] %v4371
      %v4380 = vld [vmem:[#allocation3] sm:$0xff]
      %v4381 = vld [vmem:[#allocation3 + $0x8] sm:$0xff]
      %v4382 = vld [vmem:[#allocation3 + $0x10] sm:$0xff]
      %v4383 = vld [vmem:[#allocation3 + $0x18] sm:$0xff]
      %4388 = vrot.lane.b32.xlu0 %v4380, 92
      %v4389 = vpop.permute.xlu0 %4388
      %4390 = vrot.lane.b32.xlu0 %v4381, 92
      %v4391 = vpop.permute.xlu0 %4390
      %4392 = vrot.lane.b32.xlu0 %v4382, 92
      %v4393 = vpop.permute.xlu0 %4392
      %4394 = vrot.lane.b32.xlu0 %v4383, 92
      %v4395 = vpop.permute.xlu0 %4394
      %v4396 = vrot.slane %v4389, 4
      %v4397 = vrot.slane %v4391, 4
      %v4398 = vrot.slane %v4393, 4
      %v4399 = vrot.slane %v4395, 4
      %v4400 = vsel %vm1184, %v4389, %v4396
      %v4401 = vsel %vm1184, %v4391, %v4397
      %v4402 = vsel %vm1184, %v4393, %v4398
      %v4403 = vsel %vm1184, %v4395, %v4399
      %4408 = vst [vmem:[#allocation4 + $0xe0] sm:$0xf] %v4400
      %4409 = vst [vmem:[#allocation4 + $0xe4] sm:$0xf] %v4401
      %4410 = vst [vmem:[#allocation4 + $0xe8] sm:$0xf] %v4402
      %4411 = vst [vmem:[#allocation4 + $0xec] sm:$0xf] %v4403
      %v4412 = vld [vmem:[#allocation3] sm:$0xff]
      %v4413 = vld [vmem:[#allocation3 + $0x8] sm:$0xff]
      %v4414 = vld [vmem:[#allocation3 + $0x10] sm:$0xff]
      %v4415 = vld [vmem:[#allocation3 + $0x18] sm:$0xff]
      %4420 = vrot.lane.b32.xlu0 %v4412, 80
      %v4421 = vpop.permute.xlu0 %4420
      %4422 = vrot.lane.b32.xlu0 %v4413, 80
      %v4423 = vpop.permute.xlu0 %4422
      %4424 = vrot.lane.b32.xlu0 %v4414, 80
      %v4425 = vpop.permute.xlu0 %4424
      %4426 = vrot.lane.b32.xlu0 %v4415, 80
      %v4427 = vpop.permute.xlu0 %4426
      %v4428 = vrot.slane %v4421, 4
      %v4429 = vrot.slane %v4423, 4
      %v4430 = vrot.slane %v4425, 4
      %v4431 = vrot.slane %v4427, 4
      %v4432 = vsel %vm1249, %v4421, %v4428
      %v4433 = vsel %vm1249, %v4423, %v4429
      %v4434 = vsel %vm1249, %v4425, %v4430
      %v4435 = vsel %vm1249, %v4427, %v4431
      %4440 = vst [vmem:[#allocation4 + $0xf0] sm:$0xf] %v4432
      %4441 = vst [vmem:[#allocation4 + $0xf4] sm:$0xf] %v4433
      %4442 = vst [vmem:[#allocation4 + $0xf8] sm:$0xf] %v4434
      %4443 = vst [vmem:[#allocation4 + $0xfc] sm:$0xf] %v4435
      %v4444 = vld [vmem:[#allocation3] sm:$0xff]
      %v4445 = vld [vmem:[#allocation3 + $0x8] sm:$0xff]
      %v4446 = vld [vmem:[#allocation3 + $0x10] sm:$0xff]
      %v4447 = vld [vmem:[#allocation3 + $0x18] sm:$0xff]
      %4452 = vrot.lane.b32.xlu0 %v4444, 79
      %v4453 = vpop.permute.xlu0 %4452
      %4454 = vrot.lane.b32.xlu0 %v4445, 79
      %v4455 = vpop.permute.xlu0 %4454
      %4456 = vrot.lane.b32.xlu0 %v4446, 79
      %v4457 = vpop.permute.xlu0 %4456
      %4458 = vrot.lane.b32.xlu0 %v4447, 79
      %v4459 = vpop.permute.xlu0 %4458
      %v4460 = vrot.slane %v4453, 4
      %v4461 = vrot.slane %v4455, 4
      %v4462 = vrot.slane %v4457, 4
      %v4463 = vrot.slane %v4459, 4
      %v4464 = vsel %vm1314, %v4453, %v4460
      %v4465 = vsel %vm1314, %v4455, %v4461
      %v4466 = vsel %vm1314, %v4457, %v4462
      %v4467 = vsel %vm1314, %v4459, %v4463
      %4472 = vst [vmem:[#allocation4 + $0x100] sm:$0xf] %v4464
      %4473 = vst [vmem:[#allocation4 + $0x104] sm:$0xf] %v4465
      %4474 = vst [vmem:[#allocation4 + $0x108] sm:$0xf] %v4466
      %4475 = vst [vmem:[#allocation4 + $0x10c] sm:$0xf] %v4467
      %v4476 = vld [vmem:[#allocation3] sm:$0xff]
      %v4477 = vld [vmem:[#allocation3 + $0x8] sm:$0xff]
      %v4478 = vld [vmem:[#allocation3 + $0x10] sm:$0xff]
      %v4479 = vld [vmem:[#allocation3 + $0x18] sm:$0xff]
      %4484 = vrot.lane.b32.xlu0 %v4476, 78
      %v4485 = vpop.permute.xlu0 %4484
      %4486 = vrot.lane.b32.xlu0 %v4477, 78
      %v4487 = vpop.permute.xlu0 %4486
      %4488 = vrot.lane.b32.xlu0 %v4478, 78
      %v4489 = vpop.permute.xlu0 %4488
      %4490 = vrot.lane.b32.xlu0 %v4479, 78
      %v4491 = vpop.permute.xlu0 %4490
      %v4492 = vrot.slane %v4485, 4
      %v4493 = vrot.slane %v4487, 4
      %v4494 = vrot.slane %v4489, 4
      %v4495 = vrot.slane %v4491, 4
      %v4496 = vsel %vm1379, %v4485, %v4492
      %v4497 = vsel %vm1379, %v4487, %v4493
      %v4498 = vsel %vm1379, %v4489, %v4494
      %v4499 = vsel %vm1379, %v4491, %v4495
      %4504 = vst [vmem:[#allocation4 + $0x110] sm:$0xf] %v4496
      %4505 = vst [vmem:[#allocation4 + $0x114] sm:$0xf] %v4497
      %4506 = vst [vmem:[#allocation4 + $0x118] sm:$0xf] %v4498
      %4507 = vst [vmem:[#allocation4 + $0x11c] sm:$0xf] %v4499
      %v4508 = vld [vmem:[#allocation3] sm:$0xff]
      %v4509 = vld [vmem:[#allocation3 + $0x8] sm:$0xff]
      %v4510 = vld [vmem:[#allocation3 + $0x10] sm:$0xff]
      %v4511 = vld [vmem:[#allocation3 + $0x18] sm:$0xff]
      %4516 = vrot.lane.b32.xlu0 %v4508, 77
      %v4517 = vpop.permute.xlu0 %4516
      %4518 = vrot.lane.b32.xlu0 %v4509, 77
      %v4519 = vpop.permute.xlu0 %4518
      %4520 = vrot.lane.b32.xlu0 %v4510, 77
      %v4521 = vpop.permute.xlu0 %4520
      %4522 = vrot.lane.b32.xlu0 %v4511, 77
      %v4523 = vpop.permute.xlu0 %4522
      %v4524 = vrot.slane %v4517, 4
      %v4525 = vrot.slane %v4519, 4
      %v4526 = vrot.slane %v4521, 4
      %v4527 = vrot.slane %v4523, 4
      %v4528 = vsel %vm1444, %v4517, %v4524
      %v4529 = vsel %vm1444, %v4519, %v4525
      %v4530 = vsel %vm1444, %v4521, %v4526
      %v4531 = vsel %vm1444, %v4523, %v4527
      %4536 = vst [vmem:[#allocation4 + $0x120] sm:$0xf] %v4528
      %4537 = vst [vmem:[#allocation4 + $0x124] sm:$0xf] %v4529
      %4538 = vst [vmem:[#allocation4 + $0x128] sm:$0xf] %v4530
      %4539 = vst [vmem:[#allocation4 + $0x12c] sm:$0xf] %v4531
      %v4540 = vld [vmem:[#allocation3] sm:$0xff]
      %v4541 = vld [vmem:[#allocation3 + $0x8] sm:$0xff]
      %v4542 = vld [vmem:[#allocation3 + $0x10] sm:$0xff]
      %v4543 = vld [vmem:[#allocation3 + $0x18] sm:$0xff]
      %4548 = vrot.lane.b32.xlu0 %v4540, 76
      %v4549 = vpop.permute.xlu0 %4548
      %4550 = vrot.lane.b32.xlu0 %v4541, 76
      %v4551 = vpop.permute.xlu0 %4550
      %4552 = vrot.lane.b32.xlu0 %v4542, 76
      %v4553 = vpop.permute.xlu0 %4552
      %4554 = vrot.lane.b32.xlu0 %v4543, 76
      %v4555 = vpop.permute.xlu0 %4554
      %v4556 = vrot.slane %v4549, 4
      %v4557 = vrot.slane %v4551, 4
      %v4558 = vrot.slane %v4553, 4
      %v4559 = vrot.slane %v4555, 4
      %v4560 = vsel %vm1509, %v4549, %v4556
      %v4561 = vsel %vm1509, %v4551, %v4557
      %v4562 = vsel %vm1509, %v4553, %v4558
      %v4563 = vsel %vm1509, %v4555, %v4559
      %4568 = vst [vmem:[#allocation4 + $0x130] sm:$0xf] %v4560
      %4569 = vst [vmem:[#allocation4 + $0x134] sm:$0xf] %v4561
      %4570 = vst [vmem:[#allocation4 + $0x138] sm:$0xf] %v4562
      %4571 = vst [vmem:[#allocation4 + $0x13c] sm:$0xf] %v4563
      %v4572 = vld [vmem:[#allocation3] sm:$0xff]
      %v4573 = vld [vmem:[#allocation3 + $0x8] sm:$0xff]
      %v4574 = vld [vmem:[#allocation3 + $0x10] sm:$0xff]
      %v4575 = vld [vmem:[#allocation3 + $0x18] sm:$0xff]
      %4580 = vrot.lane.b32.xlu0 %v4572, 64
      %v4581 = vpop.permute.xlu0 %4580
      %4582 = vrot.lane.b32.xlu0 %v4573, 64
      %v4583 = vpop.permute.xlu0 %4582
      %4584 = vrot.lane.b32.xlu0 %v4574, 64
      %v4585 = vpop.permute.xlu0 %4584
      %4586 = vrot.lane.b32.xlu0 %v4575, 64
      %v4587 = vpop.permute.xlu0 %4586
      %v4588 = vrot.slane %v4581, 4
      %v4589 = vrot.slane %v4583, 4
      %v4590 = vrot.slane %v4585, 4
      %v4591 = vrot.slane %v4587, 4
      %v4592 = vsel %vm1574, %v4581, %v4588
      %v4593 = vsel %vm1574, %v4583, %v4589
      %v4594 = vsel %vm1574, %v4585, %v4590
      %v4595 = vsel %vm1574, %v4587, %v4591
      %4600 = vst [vmem:[#allocation4 + $0x140] sm:$0xf] %v4592
      %4601 = vst [vmem:[#allocation4 + $0x144] sm:$0xf] %v4593
      %4602 = vst [vmem:[#allocation4 + $0x148] sm:$0xf] %v4594
      %4603 = vst [vmem:[#allocation4 + $0x14c] sm:$0xf] %v4595
      %v4604 = vld [vmem:[#allocation3] sm:$0xff]
      %v4605 = vld [vmem:[#allocation3 + $0x8] sm:$0xff]
      %v4606 = vld [vmem:[#allocation3 + $0x10] sm:$0xff]
      %v4607 = vld [vmem:[#allocation3 + $0x18] sm:$0xff]
      %4612 = vrot.lane.b32.xlu0 %v4604, 63
      %v4613 = vpop.permute.xlu0 %4612
      %4614 = vrot.lane.b32.xlu0 %v4605, 63
      %v4615 = vpop.permute.xlu0 %4614
      %4616 = vrot.lane.b32.xlu0 %v4606, 63
      %v4617 = vpop.permute.xlu0 %4616
      %4618 = vrot.lane.b32.xlu0 %v4607, 63
      %v4619 = vpop.permute.xlu0 %4618
      %v4620 = vrot.slane %v4613, 4
      %v4621 = vrot.slane %v4615, 4
      %v4622 = vrot.slane %v4617, 4
      %v4623 = vrot.slane %v4619, 4
      %v4624 = vsel %vm1681, %v4613, %v4620
      %v4625 = vsel %vm1681, %v4615, %v4621
      %v4626 = vsel %vm1681, %v4617, %v4622
      %v4627 = vsel %vm1681, %v4619, %v4623
      %4632 = vst [vmem:[#allocation4 + $0x150] sm:$0xf] %v4624
      %4633 = vst [vmem:[#allocation4 + $0x154] sm:$0xf] %v4625
      %4634 = vst [vmem:[#allocation4 + $0x158] sm:$0xf] %v4626
      %4635 = vst [vmem:[#allocation4 + $0x15c] sm:$0xf] %v4627
      %v4636 = vld [vmem:[#allocation3] sm:$0xff]
      %v4637 = vld [vmem:[#allocation3 + $0x8] sm:$0xff]
      %v4638 = vld [vmem:[#allocation3 + $0x10] sm:$0xff]
      %v4639 = vld [vmem:[#allocation3 + $0x18] sm:$0xff]
      %4644 = vrot.lane.b32.xlu0 %v4636, 62
      %v4645 = vpop.permute.xlu0 %4644
      %4646 = vrot.lane.b32.xlu0 %v4637, 62
      %v4647 = vpop.permute.xlu0 %4646
      %4648 = vrot.lane.b32.xlu0 %v4638, 62
      %v4649 = vpop.permute.xlu0 %4648
      %4650 = vrot.lane.b32.xlu0 %v4639, 62
      %v4651 = vpop.permute.xlu0 %4650
      %v4652 = vrot.slane %v4645, 4
      %v4653 = vrot.slane %v4647, 4
      %v4654 = vrot.slane %v4649, 4
      %v4655 = vrot.slane %v4651, 4
      %v4656 = vsel %vm1794, %v4645, %v4652
      %v4657 = vsel %vm1794, %v4647, %v4653
      %v4658 = vsel %vm1794, %v4649, %v4654
      %v4659 = vsel %vm1794, %v4651, %v4655
      %4664 = vst [vmem:[#allocation4 + $0x160] sm:$0xf] %v4656
      %4665 = vst [vmem:[#allocation4 + $0x164] sm:$0xf] %v4657
      %4666 = vst [vmem:[#allocation4 + $0x168] sm:$0xf] %v4658
      %4667 = vst [vmem:[#allocation4 + $0x16c] sm:$0xf] %v4659
      %v4668 = vld [vmem:[#allocation3] sm:$0xff]
      %v4669 = vld [vmem:[#allocation3 + $0x8] sm:$0xff]
      %v4670 = vld [vmem:[#allocation3 + $0x10] sm:$0xff]
      %v4671 = vld [vmem:[#allocation3 + $0x18] sm:$0xff]
      %4676 = vrot.lane.b32.xlu0 %v4668, 61
      %v4677 = vpop.permute.xlu0 %4676
      %4678 = vrot.lane.b32.xlu0 %v4669, 61
      %v4679 = vpop.permute.xlu0 %4678
      %4680 = vrot.lane.b32.xlu0 %v4670, 61
      %v4681 = vpop.permute.xlu0 %4680
      %4682 = vrot.lane.b32.xlu0 %v4671, 61
      %v4683 = vpop.permute.xlu0 %4682
      %v4684 = vrot.slane %v4677, 4
      %v4685 = vrot.slane %v4679, 4
      %v4686 = vrot.slane %v4681, 4
      %v4687 = vrot.slane %v4683, 4
      %v4688 = vsel %vm1907, %v4677, %v4684
      %v4689 = vsel %vm1907, %v4679, %v4685
      %v4690 = vsel %vm1907, %v4681, %v4686
      %v4691 = vsel %vm1907, %v4683, %v4687
      %4696 = vst [vmem:[#allocation4 + $0x170] sm:$0xf] %v4688
      %4697 = vst [vmem:[#allocation4 + $0x174] sm:$0xf] %v4689
      %4698 = vst [vmem:[#allocation4 + $0x178] sm:$0xf] %v4690
      %4699 = vst [vmem:[#allocation4 + $0x17c] sm:$0xf] %v4691
      %v4700 = vld [vmem:[#allocation3] sm:$0xff]
      %v4701 = vld [vmem:[#allocation3 + $0x8] sm:$0xff]
      %v4702 = vld [vmem:[#allocation3 + $0x10] sm:$0xff]
      %v4703 = vld [vmem:[#allocation3 + $0x18] sm:$0xff]
      %4708 = vrot.lane.b32.xlu0 %v4700, 60
      %v4709 = vpop.permute.xlu0 %4708
      %4710 = vrot.lane.b32.xlu0 %v4701, 60
      %v4711 = vpop.permute.xlu0 %4710
      %4712 = vrot.lane.b32.xlu0 %v4702, 60
      %v4713 = vpop.permute.xlu0 %4712
      %4714 = vrot.lane.b32.xlu0 %v4703, 60
      %v4715 = vpop.permute.xlu0 %4714
      %v4716 = vrot.slane %v4709, 4
      %v4717 = vrot.slane %v4711, 4
      %v4718 = vrot.slane %v4713, 4
      %v4719 = vrot.slane %v4715, 4
      %v4720 = vsel %vm2020, %v4709, %v4716
      %v4721 = vsel %vm2020, %v4711, %v4717
      %v4722 = vsel %vm2020, %v4713, %v4718
      %v4723 = vsel %vm2020, %v4715, %v4719
      %4728 = vst [vmem:[#allocation4 + $0x180] sm:$0xf] %v4720
      %4729 = vst [vmem:[#allocation4 + $0x184] sm:$0xf] %v4721
      %4730 = vst [vmem:[#allocation4 + $0x188] sm:$0xf] %v4722
      %4731 = vst [vmem:[#allocation4 + $0x18c] sm:$0xf] %v4723
      %v4732 = vld [vmem:[%s3] sm:$0xff]
      %v4733 = vld [vmem:[%s3 + $0x8] sm:$0xff]
      %v4734 = vld [vmem:[%s3 + $0x10] sm:$0xff]
      %v4735 = vld [vmem:[%s3 + $0x18] sm:$0xf]
      %v4736 = vld [vmem:[%s3 + $0x1c] sm:$0xff]
      %v4737 = vld [vmem:[%s3 + $0x24] sm:$0xff]
      %v4738 = vld [vmem:[%s3 + $0x2c] sm:$0xff]
      %v4739 = vld [vmem:[%s3 + $0x34] sm:$0xf]
      %v4740 = vld [vmem:[#allocation4] sm:$0xf]
      %v4741 = vld [vmem:[#allocation4 + $0x4] sm:$0xf]
      %v4742 = vld [vmem:[#allocation4 + $0x8] sm:$0xf]
      %v4743 = vld [vmem:[#allocation4 + $0xc] sm:$0xf]
      %v4744 = vld [vmem:[#allocation4 + $0x10] sm:$0xf]
      %v4745 = vld [vmem:[#allocation4 + $0x14] sm:$0xf]
      %v4746 = vld [vmem:[#allocation4 + $0x18] sm:$0xf]
      %v4747 = vld [vmem:[#allocation4 + $0x1c] sm:$0xf]
      %v4748 = vld [vmem:[#allocation4 + $0x20] sm:$0xf]
      %v4749 = vld [vmem:[#allocation4 + $0x24] sm:$0xf]
      %v4750 = vld [vmem:[#allocation4 + $0x28] sm:$0xf]
      %v4751 = vld [vmem:[#allocation4 + $0x2c] sm:$0xf]
      %v4752 = vld [vmem:[#allocation4 + $0x30] sm:$0xf]
      %v4753 = vld [vmem:[#allocation4 + $0x34] sm:$0xf]
      %v4754 = vld [vmem:[#allocation4 + $0x38] sm:$0xf]
      %v4755 = vld [vmem:[#allocation4 + $0x3c] sm:$0xf]
      %v4756 = vld [vmem:[#allocation4 + $0x40] sm:$0xf]
      %v4757 = vld [vmem:[#allocation4 + $0x44] sm:$0xf]
      %v4758 = vld [vmem:[#allocation4 + $0x48] sm:$0xf]
      %v4759 = vld [vmem:[#allocation4 + $0x4c] sm:$0xf]
      %v4760 = vld [vmem:[#allocation4 + $0x50] sm:$0xf]
      %v4761 = vld [vmem:[#allocation4 + $0x54] sm:$0xf]
      %v4762 = vld [vmem:[#allocation4 + $0x58] sm:$0xf]
      %v4763 = vld [vmem:[#allocation4 + $0x5c] sm:$0xf]
      %v4764 = vld [vmem:[#allocation4 + $0x60] sm:$0xf]
      %v4765 = vld [vmem:[#allocation4 + $0x64] sm:$0xf]
      %v4766 = vld [vmem:[#allocation4 + $0x68] sm:$0xf]
      %v4767 = vld [vmem:[#allocation4 + $0x6c] sm:$0xf]
      %v4768 = vld [vmem:[#allocation4 + $0x70] sm:$0xf]
      %v4769 = vld [vmem:[#allocation4 + $0x74] sm:$0xf]
      %v4770 = vld [vmem:[#allocation4 + $0x78] sm:$0xf]
      %v4771 = vld [vmem:[#allocation4 + $0x7c] sm:$0xf]
      %v4772 = vld [vmem:[#allocation4 + $0x80] sm:$0xf]
      %v4773 = vld [vmem:[#allocation4 + $0x84] sm:$0xf]
      %v4774 = vld [vmem:[#allocation4 + $0x88] sm:$0xf]
      %v4775 = vld [vmem:[#allocation4 + $0x8c] sm:$0xf]
      %v4776 = vld [vmem:[#allocation4 + $0x90] sm:$0xf]
      %v4777 = vld [vmem:[#allocation4 + $0x94] sm:$0xf]
      %v4778 = vld [vmem:[#allocation4 + $0x98] sm:$0xf]
      %v4779 = vld [vmem:[#allocation4 + $0x9c] sm:$0xf]
      %v4780 = vld [vmem:[#allocation4 + $0xa0] sm:$0xf]
      %v4781 = vld [vmem:[#allocation4 + $0xa4] sm:$0xf]
      %v4782 = vld [vmem:[#allocation4 + $0xa8] sm:$0xf]
      %v4783 = vld [vmem:[#allocation4 + $0xac] sm:$0xf]
      %v4784 = vld [vmem:[#allocation4 + $0xb0] sm:$0xf]
      %v4785 = vld [vmem:[#allocation4 + $0xb4] sm:$0xf]
      %v4786 = vld [vmem:[#allocation4 + $0xb8] sm:$0xf]
      %v4787 = vld [vmem:[#allocation4 + $0xbc] sm:$0xf]
      %v4788 = vld [vmem:[#allocation4 + $0xc0] sm:$0xf]
      %v4789 = vld [vmem:[#allocation4 + $0xc4] sm:$0xf]
      %v4790 = vld [vmem:[#allocation4 + $0xc8] sm:$0xf]
      %v4791 = vld [vmem:[#allocation4 + $0xcc] sm:$0xf]
      %v4792 = vld [vmem:[#allocation4 + $0xd0] sm:$0xf]
      %v4793 = vld [vmem:[#allocation4 + $0xd4] sm:$0xf]
      %v4794 = vld [vmem:[#allocation4 + $0xd8] sm:$0xf]
      %v4795 = vld [vmem:[#allocation4 + $0xdc] sm:$0xf]
      %v4796 = vld [vmem:[#allocation4 + $0xe0] sm:$0xf]
      %v4797 = vld [vmem:[#allocation4 + $0xe4] sm:$0xf]
      %v4798 = vld [vmem:[#allocation4 + $0xe8] sm:$0xf]
      %v4799 = vld [vmem:[#allocation4 + $0xec] sm:$0xf]
      %v4800 = vld [vmem:[#allocation4 + $0xf0] sm:$0xf]
      %v4801 = vld [vmem:[#allocation4 + $0xf4] sm:$0xf]
      %v4802 = vld [vmem:[#allocation4 + $0xf8] sm:$0xf]
      %v4803 = vld [vmem:[#allocation4 + $0xfc] sm:$0xf]
      %v4804 = vld [vmem:[#allocation4 + $0x100] sm:$0xf]
      %v4805 = vld [vmem:[#allocation4 + $0x104] sm:$0xf]
      %v4806 = vld [vmem:[#allocation4 + $0x108] sm:$0xf]
      %v4807 = vld [vmem:[#allocation4 + $0x10c] sm:$0xf]
      %v4808 = vld [vmem:[#allocation4 + $0x110] sm:$0xf]
      %v4809 = vld [vmem:[#allocation4 + $0x114] sm:$0xf]
      %v4810 = vld [vmem:[#allocation4 + $0x118] sm:$0xf]
      %v4811 = vld [vmem:[#allocation4 + $0x11c] sm:$0xf]
      %v4812 = vld [vmem:[#allocation4 + $0x120] sm:$0xf]
      %v4813 = vld [vmem:[#allocation4 + $0x124] sm:$0xf]
      %v4814 = vld [vmem:[#allocation4 + $0x128] sm:$0xf]
      %v4815 = vld [vmem:[#allocation4 + $0x12c] sm:$0xf]
      %v4816 = vld [vmem:[#allocation4 + $0x130] sm:$0xf]
      %v4817 = vld [vmem:[#allocation4 + $0x134] sm:$0xf]
      %v4818 = vld [vmem:[#allocation4 + $0x138] sm:$0xf]
      %v4819 = vld [vmem:[#allocation4 + $0x13c] sm:$0xf]
      %v4820 = vld [vmem:[#allocation4 + $0x140] sm:$0xf]
      %v4821 = vld [vmem:[#allocation4 + $0x144] sm:$0xf]
      %v4822 = vld [vmem:[#allocation4 + $0x148] sm:$0xf]
      %v4823 = vld [vmem:[#allocation4 + $0x14c] sm:$0xf]
      %v4824 = vld [vmem:[#allocation4 + $0x150] sm:$0xf]
      %v4825 = vld [vmem:[#allocation4 + $0x154] sm:$0xf]
      %v4826 = vld [vmem:[#allocation4 + $0x158] sm:$0xf]
      %v4827 = vld [vmem:[#allocation4 + $0x15c] sm:$0xf]
      %v4828 = vld [vmem:[#allocation4 + $0x160] sm:$0xf]
      %v4829 = vld [vmem:[#allocation4 + $0x164] sm:$0xf]
      %v4830 = vld [vmem:[#allocation4 + $0x168] sm:$0xf]
      %v4831 = vld [vmem:[#allocation4 + $0x16c] sm:$0xf]
      %v4832 = vld [vmem:[#allocation4 + $0x170] sm:$0xf]
      %v4833 = vld [vmem:[#allocation4 + $0x174] sm:$0xf]
      %v4834 = vld [vmem:[#allocation4 + $0x178] sm:$0xf]
      %v4835 = vld [vmem:[#allocation4 + $0x17c] sm:$0xf]
      %v4836 = vld [vmem:[#allocation4 + $0x180] sm:$0xf]
      %v4837 = vld [vmem:[#allocation4 + $0x184] sm:$0xf]
      %v4838 = vld [vmem:[#allocation4 + $0x188] sm:$0xf]
      %v4839 = vld [vmem:[#allocation4 + $0x18c] sm:$0xf]
      %v4840 = vld [vmem:[%s4] sm:$0xff]
      %v4841 = vld [vmem:[%s4 + $0x8] sm:$0xff]
      %4843 = vset.pattern.permute.xlu0 0
      %4844 = vperm.xlu0 %4843, %v4840
      %v4845 = vpop.permute.xlu0 %4844
      %4848 = vset.pattern.permute.xlu0 0
      %4849 = vperm.xlu0 %4848, %v4841
      %v4850 = vpop.permute.xlu0 %4849
      %v4860 = vunpack.c.l.b16 %v4732
      %v4861 = vunpack.c.h.b16 %v4732
      %v4862 = vunpack.c.l.b16 %v4733
      %v4863 = vunpack.c.h.b16 %v4733
      %v4864 = vunpack.c.l.b16 %v4734
      %v4865 = vunpack.c.h.b16 %v4734
      %v4866 = vunpack.c.l.b16 %v4735
      %v4867 = vunpack.c.l.b16 %v4736
      %v4868 = vunpack.c.h.b16 %v4736
      %v4869 = vunpack.c.l.b16 %v4737
      %v4870 = vunpack.c.h.b16 %v4737
      %v4871 = vunpack.c.l.b16 %v4738
      %v4872 = vunpack.c.h.b16 %v4738
      %v4873 = vunpack.c.l.b16 %v4739
      %v4874 = vpack.c.b16 %v4867, %v4860
      %v4875 = vpack.c.b16 %v4868, %v4861
      %v4876 = vpack.c.b16 %v4869, %v4862
      %v4877 = vpack.c.b16 %v4870, %v4863
      %v4878 = vpack.c.b16 %v4871, %v4864
      %v4879 = vpack.c.b16 %v4872, %v4865
      %v4880 = vpack.c.b16 %v4873, %v4866
      %v4987 = vunpack.c.l.b16 %v4740
      %v4988 = vunpack.c.l.b16 %v4741
      %v4989 = vunpack.c.l.b16 %v4742
      %v4990 = vunpack.c.l.b16 %v4743
      %v4991 = vunpack.c.l.b16 %v4744
      %v4992 = vunpack.c.l.b16 %v4745
      %v4993 = vunpack.c.l.b16 %v4746
      %v4994 = vunpack.c.l.b16 %v4747
      %v4995 = vunpack.c.l.b16 %v4748
      %v4996 = vunpack.c.l.b16 %v4749
      %v4997 = vunpack.c.l.b16 %v4750
      %v4998 = vunpack.c.l.b16 %v4751
      %v4999 = vunpack.c.l.b16 %v4752
      %v5000 = vunpack.c.l.b16 %v4753
      %v5001 = vunpack.c.l.b16 %v4754
      %v5002 = vunpack.c.l.b16 %v4755
      %v5003 = vunpack.c.l.b16 %v4756
      %v5004 = vunpack.c.l.b16 %v4757
      %v5005 = vunpack.c.l.b16 %v4758
      %v5006 = vunpack.c.l.b16 %v4759
      %v5007 = vunpack.c.l.b16 %v4760
      %v5008 = vunpack.c.l.b16 %v4761
      %v5009 = vunpack.c.l.b16 %v4762
      %v5010 = vunpack.c.l.b16 %v4763
      %v5011 = vunpack.c.l.b16 %v4764
      %v5012 = vunpack.c.l.b16 %v4765
      %v5013 = vunpack.c.l.b16 %v4766
      %v5014 = vunpack.c.l.b16 %v4767
      %v5015 = vunpack.c.l.b16 %v4768
      %v5016 = vunpack.c.l.b16 %v4769
      %v5017 = vunpack.c.l.b16 %v4770
      %v5018 = vunpack.c.l.b16 %v4771
      %v5019 = vunpack.c.l.b16 %v4772
      %v5020 = vunpack.c.l.b16 %v4773
      %v5021 = vunpack.c.l.b16 %v4774
      %v5022 = vunpack.c.l.b16 %v4775
      %v5023 = vunpack.c.l.b16 %v4776
      %v5024 = vunpack.c.l.b16 %v4777
      %v5025 = vunpack.c.l.b16 %v4778
      %v5026 = vunpack.c.l.b16 %v4779
      %v5027 = vunpack.c.l.b16 %v4780
      %v5028 = vunpack.c.l.b16 %v4781
      %v5029 = vunpack.c.l.b16 %v4782
      %v5030 = vunpack.c.l.b16 %v4783
      %v5031 = vunpack.c.l.b16 %v4784
      %v5032 = vunpack.c.l.b16 %v4785
      %v5033 = vunpack.c.l.b16 %v4786
      %v5034 = vunpack.c.l.b16 %v4787
      %v5035 = vunpack.c.l.b16 %v4788
      %v5036 = vunpack.c.l.b16 %v4789
      %v5037 = vunpack.c.l.b16 %v4790
      %v5038 = vunpack.c.l.b16 %v4791
      %v5039 = vunpack.c.l.b16 %v4792
      %v5040 = vunpack.c.l.b16 %v4793
      %v5041 = vunpack.c.l.b16 %v4794
      %v5042 = vunpack.c.l.b16 %v4795
      %v5043 = vunpack.c.l.b16 %v4796
      %v5044 = vunpack.c.l.b16 %v4797
      %v5045 = vunpack.c.l.b16 %v4798
      %v5046 = vunpack.c.l.b16 %v4799
      %v5047 = vunpack.c.l.b16 %v4800
      %v5048 = vunpack.c.l.b16 %v4801
      %v5049 = vunpack.c.l.b16 %v4802
      %v5050 = vunpack.c.l.b16 %v4803
      %v5051 = vunpack.c.l.b16 %v4804
      %v5052 = vunpack.c.l.b16 %v4805
      %v5053 = vunpack.c.l.b16 %v4806
      %v5054 = vunpack.c.l.b16 %v4807
      %v5055 = vunpack.c.l.b16 %v4808
      %v5056 = vunpack.c.l.b16 %v4809
      %v5057 = vunpack.c.l.b16 %v4810
      %v5058 = vunpack.c.l.b16 %v4811
      %v5059 = vunpack.c.l.b16 %v4812
      %v5060 = vunpack.c.l.b16 %v4813
      %v5061 = vunpack.c.l.b16 %v4814
      %v5062 = vunpack.c.l.b16 %v4815
      %v5063 = vunpack.c.l.b16 %v4816
      %v5064 = vunpack.c.l.b16 %v4817
      %v5065 = vunpack.c.l.b16 %v4818
      %v5066 = vunpack.c.l.b16 %v4819
      %v5067 = vunpack.c.l.b16 %v4820
      %v5068 = vunpack.c.l.b16 %v4821
      %v5069 = vunpack.c.l.b16 %v4822
      %v5070 = vunpack.c.l.b16 %v4823
      %v5071 = vunpack.c.l.b16 %v4824
      %v5072 = vunpack.c.l.b16 %v4825
      %v5073 = vunpack.c.l.b16 %v4826
      %v5074 = vunpack.c.l.b16 %v4827
      %v5075 = vunpack.c.l.b16 %v4828
      %v5076 = vunpack.c.l.b16 %v4829
      %v5077 = vunpack.c.l.b16 %v4830
      %v5078 = vunpack.c.l.b16 %v4831
      %v5079 = vunpack.c.l.b16 %v4832
      %v5080 = vunpack.c.l.b16 %v4833
      %v5081 = vunpack.c.l.b16 %v4834
      %v5082 = vunpack.c.l.b16 %v4835
      %v5083 = vunpack.c.l.b16 %v4836
      %v5084 = vunpack.c.l.b16 %v4837
      %v5085 = vunpack.c.l.b16 %v4838
      %v5086 = vunpack.c.l.b16 %v4839
      %v5087 = vpack.c.b16 %v4988, %v4987
      %v5088 = vpack.c.b16 %v4990, %v4989
      %v5089 = vpack.c.b16 %v4992, %v4991
      %v5090 = vpack.c.b16 %v4994, %v4993
      %v5091 = vpack.c.b16 %v4996, %v4995
      %v5092 = vpack.c.b16 %v4998, %v4997
      %v5093 = vpack.c.b16 %v5000, %v4999
      %v5094 = vpack.c.b16 %v5002, %v5001
      %v5095 = vpack.c.b16 %v5004, %v5003
      %v5096 = vpack.c.b16 %v5006, %v5005
      %v5097 = vpack.c.b16 %v5008, %v5007
      %v5098 = vpack.c.b16 %v5010, %v5009
      %v5099 = vpack.c.b16 %v5012, %v5011
      %v5100 = vpack.c.b16 %v5014, %v5013
      %v5101 = vpack.c.b16 %v5016, %v5015
      %v5102 = vpack.c.b16 %v5018, %v5017
      %v5103 = vpack.c.b16 %v5020, %v5019
      %v5104 = vpack.c.b16 %v5022, %v5021
      %v5105 = vpack.c.b16 %v5024, %v5023
      %v5106 = vpack.c.b16 %v5026, %v5025
      %v5107 = vpack.c.b16 %v5028, %v5027
      %v5108 = vpack.c.b16 %v5030, %v5029
      %v5109 = vpack.c.b16 %v5032, %v5031
      %v5110 = vpack.c.b16 %v5034, %v5033
      %v5111 = vpack.c.b16 %v5036, %v5035
      %v5112 = vpack.c.b16 %v5038, %v5037
      %v5113 = vpack.c.b16 %v5040, %v5039
      %v5114 = vpack.c.b16 %v5042, %v5041
      %v5115 = vpack.c.b16 %v5044, %v5043
      %v5116 = vpack.c.b16 %v5046, %v5045
      %v5117 = vpack.c.b16 %v5048, %v5047
      %v5118 = vpack.c.b16 %v5050, %v5049
      %v5119 = vpack.c.b16 %v5052, %v5051
      %v5120 = vpack.c.b16 %v5054, %v5053
      %v5121 = vpack.c.b16 %v5056, %v5055
      %v5122 = vpack.c.b16 %v5058, %v5057
      %v5123 = vpack.c.b16 %v5060, %v5059
      %v5124 = vpack.c.b16 %v5062, %v5061
      %v5125 = vpack.c.b16 %v5064, %v5063
      %v5126 = vpack.c.b16 %v5066, %v5065
      %v5127 = vpack.c.b16 %v5068, %v5067
      %v5128 = vpack.c.b16 %v5070, %v5069
      %v5129 = vpack.c.b16 %v5072, %v5071
      %v5130 = vpack.c.b16 %v5074, %v5073
      %v5131 = vpack.c.b16 %v5076, %v5075
      %v5132 = vpack.c.b16 %v5078, %v5077
      %v5133 = vpack.c.b16 %v5080, %v5079
      %v5134 = vpack.c.b16 %v5082, %v5081
      %v5135 = vpack.c.b16 %v5084, %v5083
      %v5136 = vpack.c.b16 %v5086, %v5085
      %vm5187 = vcmask 261120
      %v5189 = vsel %vm5187, %v4880, 0
      %5191 = vmatpush.bf16.msra.mxu0 %v5094
      %5192 = vmatpush.bf16.msra.mxu0 %v5093
      %5193 = vmatpush.bf16.msra.mxu0 %v5092
      %5194 = vmatpush.bf16.msra.mxu0 %v5091
      %5195 = vmatpush.bf16.msra.mxu0 %v5090
      %5196 = vmatpush.bf16.msra.mxu0 %v5089
      %5197 = vmatpush.bf16.msra.mxu0 %v5088
      %5198 = vmatpush.bf16.msra.mxu0 %v5087
      %5199 = vmatmul.bf16.gmra.mxu0 %v4874
      %v5200 = vpop.f32.mrf.mxu0
      %v5201 = vadd.f32 %v4845, %v5200
      %v5202 = vpop.f32.mrf.mxu0
      %v5203 = vadd.f32 %v4850, %v5202
      %5204 = vdwg.mxu0
      %5205 = vmatpush.bf16.msra.mxu0 %v5102
      %5206 = vmatpush.bf16.msra.mxu0 %v5101
      %5207 = vmatpush.bf16.msra.mxu0 %v5100
      %5208 = vmatpush.bf16.msra.mxu0 %v5099
      %5209 = vmatpush.bf16.msra.mxu0 %v5098
      %5210 = vmatpush.bf16.msra.mxu0 %v5097
      %5211 = vmatpush.bf16.msra.mxu0 %v5096
      %5212 = vmatpush.bf16.msra.mxu0 %v5095
      %5213 = vmatmul.bf16.gmra.mxu0 %v4875
      %v5214 = vpop.f32.mrf.mxu0
      %v5215 = vadd.f32 %v5201, %v5214
      %v5216 = vpop.f32.mrf.mxu0
      %v5217 = vadd.f32 %v5203, %v5216
      %5218 = vdwg.mxu0
      %5219 = vmatpush.bf16.msra.mxu0 %v5110
      %5220 = vmatpush.bf16.msra.mxu0 %v5109
      %5221 = vmatpush.bf16.msra.mxu0 %v5108
      %5222 = vmatpush.bf16.msra.mxu0 %v5107
      %5223 = vmatpush.bf16.msra.mxu0 %v5106
      %5224 = vmatpush.bf16.msra.mxu0 %v5105
      %5225 = vmatpush.bf16.msra.mxu0 %v5104
      %5226 = vmatpush.bf16.msra.mxu0 %v5103
      %5227 = vmatmul.bf16.gmra.mxu0 %v4876
      %v5228 = vpop.f32.mrf.mxu0
      %v5229 = vadd.f32 %v5215, %v5228
      %v5230 = vpop.f32.mrf.mxu0
      %v5231 = vadd.f32 %v5217, %v5230
      %5232 = vdwg.mxu0
      %5233 = vmatpush.bf16.msra.mxu0 %v5118
      %5234 = vmatpush.bf16.msra.mxu0 %v5117
      %5235 = vmatpush.bf16.msra.mxu0 %v5116
      %5236 = vmatpush.bf16.msra.mxu0 %v5115
      %5237 = vmatpush.bf16.msra.mxu0 %v5114
      %5238 = vmatpush.bf16.msra.mxu0 %v5113
      %5239 = vmatpush.bf16.msra.mxu0 %v5112
      %5240 = vmatpush.bf16.msra.mxu0 %v5111
      %5241 = vmatmul.bf16.gmra.mxu0 %v4877
      %v5242 = vpop.f32.mrf.mxu0
      %v5243 = vadd.f32 %v5229, %v5242
      %v5244 = vpop.f32.mrf.mxu0
      %v5245 = vadd.f32 %v5231, %v5244
      %5246 = vdwg.mxu0
      %5247 = vmatpush.bf16.msra.mxu0 %v5126
      %5248 = vmatpush.bf16.msra.mxu0 %v5125
      %5249 = vmatpush.bf16.msra.mxu0 %v5124
      %5250 = vmatpush.bf16.msra.mxu0 %v5123
      %5251 = vmatpush.bf16.msra.mxu0 %v5122
      %5252 = vmatpush.bf16.msra.mxu0 %v5121
      %5253 = vmatpush.bf16.msra.mxu0 %v5120
      %5254 = vmatpush.bf16.msra.mxu0 %v5119
      %5255 = vmatmul.bf16.gmra.mxu0 %v4878
      %v5256 = vpop.f32.mrf.mxu0
      %v5257 = vadd.f32 %v5243, %v5256
      %v5258 = vpop.f32.mrf.mxu0
      %v5259 = vadd.f32 %v5245, %v5258
      %5260 = vdwg.mxu0
      %5261 = vmatpush.bf16.msra.mxu0 %v5134
      %5262 = vmatpush.bf16.msra.mxu0 %v5133
      %5263 = vmatpush.bf16.msra.mxu0 %v5132
      %5264 = vmatpush.bf16.msra.mxu0 %v5131
      %5265 = vmatpush.bf16.msra.mxu0 %v5130
      %5266 = vmatpush.bf16.msra.mxu0 %v5129
      %5267 = vmatpush.bf16.msra.mxu0 %v5128
      %5268 = vmatpush.bf16.msra.mxu0 %v5127
      %5269 = vmatmul.bf16.gmra.mxu0 %v4879
      %v5270 = vpop.f32.mrf.mxu0
      %v5271 = vadd.f32 %v5257, %v5270
      %v5272 = vpop.f32.mrf.mxu0
      %v5273 = vadd.f32 %v5259, %v5272
      %5274 = vdwg.mxu0
      %5275 = vmatpush.bf16.msra.mxu0 0
      %5276 = vmatpush.bf16.msra.mxu0 0
      %5277 = vmatpush.bf16.msra.mxu0 0
      %5278 = vmatpush.bf16.msra.mxu0 0
      %5279 = vmatpush.bf16.msra.mxu0 0
      %5280 = vmatpush.bf16.msra.mxu0 0
      %5281 = vmatpush.bf16.msra.mxu0 %v5136
      %5282 = vmatpush.bf16.msra.mxu0 %v5135
      %5283 = vmatmul.bf16.gmra.mxu0 %v5189
      %v5284 = vpop.f32.mrf.mxu0
      %v5285 = vadd.f32 %v5271, %v5284
      %v5286 = vpop.f32.mrf.mxu0
      %v5287 = vadd.f32 %v5273, %v5286
      %5288 = vdwg.mxu0
      %v5289 = vmax.f32 %v5285, 0.0
      %v5290 = vmax.f32 %v5287, 0.0
      %v5291 = vpack.c.bf16 %v5289, %v5289
      %v5292 = vpack.c.bf16 %v5290, %v5290
      %5293 = vst [vmem:[#allocation5] sm:$0xf] %v5291
      %5294 = vst [vmem:[#allocation5 + $0x8] sm:$0xf] %v5292
      %vm5295 = vcmask 27648
      %5296 = vst.msk [vmem:[#allocation5 + $0x4] sm:$0xf] %vm5295, 0
      %5297 = vst.msk [vmem:[#allocation5 + $0xc] sm:$0xf] %vm5295, 0
      %v5298 = vld [vmem:[#allocation5] sm:$0xf]
      %v5299 = vld [vmem:[#allocation5 + $0x8] sm:$0xf]
      %vm5300 = vcmask 519168
      %5301 = vst.msk [vmem:[#allocation6] sm:$0xf] %vm5300, %v5298
      %5302 = vst.msk [vmem:[#allocation6 + $0x4] sm:$0xf] %vm5300, %v5299
      %v5303 = vld [vmem:[#allocation5] sm:$0xf]
      %v5304 = vld [vmem:[#allocation5 + $0x8] sm:$0xf]
      %5307 = vrot.lane.b32.xlu0 %v5303, 127
      %v5308 = vpop.permute.xlu0 %5307
      %5309 = vrot.lane.b32.xlu0 %v5304, 127
      %v5310 = vpop.permute.xlu0 %5309
      %5313 = vst.msk [vmem:[#allocation6 + $0x8] sm:$0xf] %vm5300, %v5308
      %5314 = vst.msk [vmem:[#allocation6 + $0xc] sm:$0xf] %vm5300, %v5310
      %v5315 = vld [vmem:[#allocation5] sm:$0xf]
      %v5316 = vld [vmem:[#allocation5 + $0x8] sm:$0xf]
      %5319 = vrot.lane.b32.xlu0 %v5315, 126
      %v5320 = vpop.permute.xlu0 %5319
      %5321 = vrot.lane.b32.xlu0 %v5316, 126
      %v5322 = vpop.permute.xlu0 %5321
      %5325 = vst.msk [vmem:[#allocation6 + $0x10] sm:$0xf] %vm5300, %v5320
      %5326 = vst.msk [vmem:[#allocation6 + $0x14] sm:$0xf] %vm5300, %v5322
      %v5327 = vld [vmem:[#allocation5] sm:$0xf]
      %v5328 = vld [vmem:[#allocation5 + $0x8] sm:$0xf]
      %5331 = vrot.lane.b32.xlu0 %v5327, 125
      %v5332 = vpop.permute.xlu0 %5331
      %5333 = vrot.lane.b32.xlu0 %v5328, 125
      %v5334 = vpop.permute.xlu0 %5333
      %5337 = vst.msk [vmem:[#allocation6 + $0x18] sm:$0xf] %vm5300, %v5332
      %5338 = vst.msk [vmem:[#allocation6 + $0x1c] sm:$0xf] %vm5300, %v5334
      %v5339 = vld [vmem:[#allocation5] sm:$0xf]
      %v5340 = vld [vmem:[#allocation5 + $0x8] sm:$0xf]
      %5343 = vrot.lane.b32.xlu0 %v5339, 124
      %v5344 = vpop.permute.xlu0 %5343
      %5345 = vrot.lane.b32.xlu0 %v5340, 124
      %v5346 = vpop.permute.xlu0 %5345
      %5349 = vst.msk [vmem:[#allocation6 + $0x20] sm:$0xf] %vm5300, %v5344
      %5350 = vst.msk [vmem:[#allocation6 + $0x24] sm:$0xf] %vm5300, %v5346
      %v5351 = vld [vmem:[#allocation5] sm:$0xf]
      %v5352 = vld [vmem:[#allocation5 + $0x8] sm:$0xf]
      %5355 = vrot.lane.b32.xlu0 %v5351, 112
      %v5356 = vpop.permute.xlu0 %5355
      %5357 = vrot.lane.b32.xlu0 %v5352, 112
      %v5358 = vpop.permute.xlu0 %5357
      %5361 = vst.msk [vmem:[#allocation6 + $0x28] sm:$0xf] %vm5300, %v5356
      %5362 = vst.msk [vmem:[#allocation6 + $0x2c] sm:$0xf] %vm5300, %v5358
      %v5363 = vld [vmem:[#allocation5] sm:$0xf]
      %v5364 = vld [vmem:[#allocation5 + $0x8] sm:$0xf]
      %5367 = vrot.lane.b32.xlu0 %v5363, 111
      %v5368 = vpop.permute.xlu0 %5367
      %5369 = vrot.lane.b32.xlu0 %v5364, 111
      %v5370 = vpop.permute.xlu0 %5369
      %5373 = vst.msk [vmem:[#allocation6 + $0x30] sm:$0xf] %vm5300, %v5368
      %5374 = vst.msk [vmem:[#allocation6 + $0x34] sm:$0xf] %vm5300, %v5370
      %v5375 = vld [vmem:[#allocation5] sm:$0xf]
      %v5376 = vld [vmem:[#allocation5 + $0x8] sm:$0xf]
      %5379 = vrot.lane.b32.xlu0 %v5375, 110
      %v5380 = vpop.permute.xlu0 %5379
      %5381 = vrot.lane.b32.xlu0 %v5376, 110
      %v5382 = vpop.permute.xlu0 %5381
      %5385 = vst.msk [vmem:[#allocation6 + $0x38] sm:$0xf] %vm5300, %v5380
      %5386 = vst.msk [vmem:[#allocation6 + $0x3c] sm:$0xf] %vm5300, %v5382
      %v5387 = vld [vmem:[#allocation5] sm:$0xf]
      %v5388 = vld [vmem:[#allocation5 + $0x8] sm:$0xf]
      %5391 = vrot.lane.b32.xlu0 %v5387, 109
      %v5392 = vpop.permute.xlu0 %5391
      %5393 = vrot.lane.b32.xlu0 %v5388, 109
      %v5394 = vpop.permute.xlu0 %5393
      %5397 = vst.msk [vmem:[#allocation6 + $0x40] sm:$0xf] %vm5300, %v5392
      %5398 = vst.msk [vmem:[#allocation6 + $0x44] sm:$0xf] %vm5300, %v5394
      %v5399 = vld [vmem:[#allocation5] sm:$0xf]
      %v5400 = vld [vmem:[#allocation5 + $0x8] sm:$0xf]
      %5403 = vrot.lane.b32.xlu0 %v5399, 108
      %v5404 = vpop.permute.xlu0 %5403
      %5405 = vrot.lane.b32.xlu0 %v5400, 108
      %v5406 = vpop.permute.xlu0 %5405
      %5409 = vst.msk [vmem:[#allocation6 + $0x48] sm:$0xf] %vm5300, %v5404
      %5410 = vst.msk [vmem:[#allocation6 + $0x4c] sm:$0xf] %vm5300, %v5406
      %v5411 = vld [vmem:[#allocation5] sm:$0xf]
      %v5412 = vld [vmem:[#allocation5 + $0x8] sm:$0xf]
      %5415 = vrot.lane.b32.xlu0 %v5411, 96
      %v5416 = vpop.permute.xlu0 %5415
      %5417 = vrot.lane.b32.xlu0 %v5412, 96
      %v5418 = vpop.permute.xlu0 %5417
      %5421 = vst.msk [vmem:[#allocation6 + $0x50] sm:$0xf] %vm5300, %v5416
      %5422 = vst.msk [vmem:[#allocation6 + $0x54] sm:$0xf] %vm5300, %v5418
      %v5423 = vld [vmem:[#allocation5] sm:$0xf]
      %v5424 = vld [vmem:[#allocation5 + $0x8] sm:$0xf]
      %5427 = vrot.lane.b32.xlu0 %v5423, 95
      %v5428 = vpop.permute.xlu0 %5427
      %5429 = vrot.lane.b32.xlu0 %v5424, 95
      %v5430 = vpop.permute.xlu0 %5429
      %5433 = vst.msk [vmem:[#allocation6 + $0x58] sm:$0xf] %vm5300, %v5428
      %5434 = vst.msk [vmem:[#allocation6 + $0x5c] sm:$0xf] %vm5300, %v5430
      %v5435 = vld [vmem:[#allocation5] sm:$0xf]
      %v5436 = vld [vmem:[#allocation5 + $0x8] sm:$0xf]
      %5439 = vrot.lane.b32.xlu0 %v5435, 94
      %v5440 = vpop.permute.xlu0 %5439
      %5441 = vrot.lane.b32.xlu0 %v5436, 94
      %v5442 = vpop.permute.xlu0 %5441
      %5445 = vst.msk [vmem:[#allocation6 + $0x60] sm:$0xf] %vm5300, %v5440
      %5446 = vst.msk [vmem:[#allocation6 + $0x64] sm:$0xf] %vm5300, %v5442
      %v5447 = vld [vmem:[#allocation5] sm:$0xf]
      %v5448 = vld [vmem:[#allocation5 + $0x8] sm:$0xf]
      %5451 = vrot.lane.b32.xlu0 %v5447, 93
      %v5452 = vpop.permute.xlu0 %5451
      %5453 = vrot.lane.b32.xlu0 %v5448, 93
      %v5454 = vpop.permute.xlu0 %5453
      %5457 = vst.msk [vmem:[#allocation6 + $0x68] sm:$0xf] %vm5300, %v5452
      %5458 = vst.msk [vmem:[#allocation6 + $0x6c] sm:$0xf] %vm5300, %v5454
      %v5459 = vld [vmem:[#allocation5] sm:$0xf]
      %v5460 = vld [vmem:[#allocation5 + $0x8] sm:$0xf]
      %5463 = vrot.lane.b32.xlu0 %v5459, 92
      %v5464 = vpop.permute.xlu0 %5463
      %5465 = vrot.lane.b32.xlu0 %v5460, 92
      %v5466 = vpop.permute.xlu0 %5465
      %5469 = vst.msk [vmem:[#allocation6 + $0x70] sm:$0xf] %vm5300, %v5464
      %5470 = vst.msk [vmem:[#allocation6 + $0x74] sm:$0xf] %vm5300, %v5466
      %v5471 = vld [vmem:[#allocation5] sm:$0xf]
      %v5472 = vld [vmem:[#allocation5 + $0x8] sm:$0xf]
      %5475 = vrot.lane.b32.xlu0 %v5471, 80
      %v5476 = vpop.permute.xlu0 %5475
      %5477 = vrot.lane.b32.xlu0 %v5472, 80
      %v5478 = vpop.permute.xlu0 %5477
      %5481 = vst.msk [vmem:[#allocation6 + $0x78] sm:$0xf] %vm5300, %v5476
      %5482 = vst.msk [vmem:[#allocation6 + $0x7c] sm:$0xf] %vm5300, %v5478
      %v5483 = vld [vmem:[#allocation5] sm:$0xf]
      %v5484 = vld [vmem:[#allocation5 + $0x8] sm:$0xf]
      %5487 = vrot.lane.b32.xlu0 %v5483, 79
      %v5488 = vpop.permute.xlu0 %5487
      %5489 = vrot.lane.b32.xlu0 %v5484, 79
      %v5490 = vpop.permute.xlu0 %5489
      %5493 = vst.msk [vmem:[#allocation6 + $0x80] sm:$0xf] %vm5300, %v5488
      %5494 = vst.msk [vmem:[#allocation6 + $0x84] sm:$0xf] %vm5300, %v5490
      %v5495 = vld [vmem:[#allocation5] sm:$0xf]
      %v5496 = vld [vmem:[#allocation5 + $0x8] sm:$0xf]
      %5499 = vrot.lane.b32.xlu0 %v5495, 78
      %v5500 = vpop.permute.xlu0 %5499
      %5501 = vrot.lane.b32.xlu0 %v5496, 78
      %v5502 = vpop.permute.xlu0 %5501
      %5505 = vst.msk [vmem:[#allocation6 + $0x88] sm:$0xf] %vm5300, %v5500
      %5506 = vst.msk [vmem:[#allocation6 + $0x8c] sm:$0xf] %vm5300, %v5502
      %v5507 = vld [vmem:[#allocation5] sm:$0xf]
      %v5508 = vld [vmem:[#allocation5 + $0x8] sm:$0xf]
      %5511 = vrot.lane.b32.xlu0 %v5507, 77
      %v5512 = vpop.permute.xlu0 %5511
      %5513 = vrot.lane.b32.xlu0 %v5508, 77
      %v5514 = vpop.permute.xlu0 %5513
      %5517 = vst.msk [vmem:[#allocation6 + $0x90] sm:$0xf] %vm5300, %v5512
      %5518 = vst.msk [vmem:[#allocation6 + $0x94] sm:$0xf] %vm5300, %v5514
      %v5519 = vld [vmem:[#allocation5] sm:$0xf]
      %v5520 = vld [vmem:[#allocation5 + $0x8] sm:$0xf]
      %5523 = vrot.lane.b32.xlu0 %v5519, 76
      %v5524 = vpop.permute.xlu0 %5523
      %5525 = vrot.lane.b32.xlu0 %v5520, 76
      %v5526 = vpop.permute.xlu0 %5525
      %5529 = vst.msk [vmem:[#allocation6 + $0x98] sm:$0xf] %vm5300, %v5524
      %5530 = vst.msk [vmem:[#allocation6 + $0x9c] sm:$0xf] %vm5300, %v5526
      %v5531 = vld [vmem:[#allocation5] sm:$0xf]
      %v5532 = vld [vmem:[#allocation5 + $0x8] sm:$0xf]
      %5535 = vrot.lane.b32.xlu0 %v5531, 64
      %v5536 = vpop.permute.xlu0 %5535
      %5537 = vrot.lane.b32.xlu0 %v5532, 64
      %v5538 = vpop.permute.xlu0 %5537
      %5541 = vst.msk [vmem:[#allocation6 + $0xa0] sm:$0xf] %vm5300, %v5536
      %5542 = vst.msk [vmem:[#allocation6 + $0xa4] sm:$0xf] %vm5300, %v5538
      %v5543 = vld [vmem:[#allocation5] sm:$0xff]
      %v5544 = vld [vmem:[#allocation5 + $0x8] sm:$0xff]
      %5547 = vrot.lane.b32.xlu0 %v5543, 63
      %v5548 = vpop.permute.xlu0 %5547
      %5549 = vrot.lane.b32.xlu0 %v5544, 63
      %v5550 = vpop.permute.xlu0 %5549
      %v5551 = vrot.slane %v5548, 4
      %v5552 = vrot.slane %v5550, 4
      %v5553 = vsel %vm1681, %v5548, %v5551
      %v5554 = vsel %vm1681, %v5550, %v5552
      %5557 = vst.msk [vmem:[#allocation6 + $0xa8] sm:$0xf] %vm5300, %v5553
      %5558 = vst.msk [vmem:[#allocation6 + $0xac] sm:$0xf] %vm5300, %v5554
      %v5559 = vld [vmem:[#allocation5] sm:$0xff]
      %v5560 = vld [vmem:[#allocation5 + $0x8] sm:$0xff]
      %5563 = vrot.lane.b32.xlu0 %v5559, 62
      %v5564 = vpop.permute.xlu0 %5563
      %5565 = vrot.lane.b32.xlu0 %v5560, 62
      %v5566 = vpop.permute.xlu0 %5565
      %v5567 = vrot.slane %v5564, 4
      %v5568 = vrot.slane %v5566, 4
      %v5569 = vsel %vm1794, %v5564, %v5567
      %v5570 = vsel %vm1794, %v5566, %v5568
      %5573 = vst.msk [vmem:[#allocation6 + $0xb0] sm:$0xf] %vm5300, %v5569
      %5574 = vst.msk [vmem:[#allocation6 + $0xb4] sm:$0xf] %vm5300, %v5570
      %v5575 = vld [vmem:[#allocation5] sm:$0xff]
      %v5576 = vld [vmem:[#allocation5 + $0x8] sm:$0xff]
      %5579 = vrot.lane.b32.xlu0 %v5575, 61
      %v5580 = vpop.permute.xlu0 %5579
      %5581 = vrot.lane.b32.xlu0 %v5576, 61
      %v5582 = vpop.permute.xlu0 %5581
      %v5583 = vrot.slane %v5580, 4
      %v5584 = vrot.slane %v5582, 4
      %v5585 = vsel %vm1907, %v5580, %v5583
      %v5586 = vsel %vm1907, %v5582, %v5584
      %5589 = vst.msk [vmem:[#allocation6 + $0xb8] sm:$0xf] %vm5300, %v5585
      %5590 = vst.msk [vmem:[#allocation6 + $0xbc] sm:$0xf] %vm5300, %v5586
      %v5591 = vld [vmem:[#allocation5] sm:$0xff]
      %v5592 = vld [vmem:[#allocation5 + $0x8] sm:$0xff]
      %5595 = vrot.lane.b32.xlu0 %v5591, 60
      %v5596 = vpop.permute.xlu0 %5595
      %5597 = vrot.lane.b32.xlu0 %v5592, 60
      %v5598 = vpop.permute.xlu0 %5597
      %v5599 = vrot.slane %v5596, 4
      %v5600 = vrot.slane %v5598, 4
      %v5601 = vsel %vm2020, %v5596, %v5599
      %v5602 = vsel %vm2020, %v5598, %v5600
      %5605 = vst.msk [vmem:[#allocation6 + $0xc0] sm:$0xf] %vm5300, %v5601
      %5606 = vst.msk [vmem:[#allocation6 + $0xc4] sm:$0xf] %vm5300, %v5602
      %v5607 = vld [vmem:[%s5] sm:$0xff]
      %v5608 = vld [vmem:[%s5 + $0x8] sm:$0xff]
      %v5609 = vld [vmem:[%s5 + $0x10] sm:$0xff]
      %v5610 = vld [vmem:[%s5 + $0x18] sm:$0xff]
      %v5611 = vld [vmem:[#allocation6] sm:$0xf]
      %v5612 = vld [vmem:[#allocation6 + $0x4] sm:$0xf]
      %v5613 = vld [vmem:[#allocation6 + $0x8] sm:$0xf]
      %v5614 = vld [vmem:[#allocation6 + $0xc] sm:$0xf]
      %v5615 = vld [vmem:[#allocation6 + $0x10] sm:$0xf]
      %v5616 = vld [vmem:[#allocation6 + $0x14] sm:$0xf]
      %v5617 = vld [vmem:[#allocation6 + $0x18] sm:$0xf]
      %v5618 = vld [vmem:[#allocation6 + $0x1c] sm:$0xf]
      %v5619 = vld [vmem:[#allocation6 + $0x20] sm:$0xf]
      %v5620 = vld [vmem:[#allocation6 + $0x24] sm:$0xf]
      %v5621 = vld [vmem:[#allocation6 + $0x28] sm:$0xf]
      %v5622 = vld [vmem:[#allocation6 + $0x2c] sm:$0xf]
      %v5623 = vld [vmem:[#allocation6 + $0x30] sm:$0xf]
      %v5624 = vld [vmem:[#allocation6 + $0x34] sm:$0xf]
      %v5625 = vld [vmem:[#allocation6 + $0x38] sm:$0xf]
      %v5626 = vld [vmem:[#allocation6 + $0x3c] sm:$0xf]
      %v5627 = vld [vmem:[#allocation6 + $0x40] sm:$0xf]
      %v5628 = vld [vmem:[#allocation6 + $0x44] sm:$0xf]
      %v5629 = vld [vmem:[#allocation6 + $0x48] sm:$0xf]
      %v5630 = vld [vmem:[#allocation6 + $0x4c] sm:$0xf]
      %v5631 = vld [vmem:[#allocation6 + $0x50] sm:$0xf]
      %v5632 = vld [vmem:[#allocation6 + $0x54] sm:$0xf]
      %v5633 = vld [vmem:[#allocation6 + $0x58] sm:$0xf]
      %v5634 = vld [vmem:[#allocation6 + $0x5c] sm:$0xf]
      %v5635 = vld [vmem:[#allocation6 + $0x60] sm:$0xf]
      %v5636 = vld [vmem:[#allocation6 + $0x64] sm:$0xf]
      %v5637 = vld [vmem:[#allocation6 + $0x68] sm:$0xf]
      %v5638 = vld [vmem:[#allocation6 + $0x6c] sm:$0xf]
      %v5639 = vld [vmem:[#allocation6 + $0x70] sm:$0xf]
      %v5640 = vld [vmem:[#allocation6 + $0x74] sm:$0xf]
      %v5641 = vld [vmem:[#allocation6 + $0x78] sm:$0xf]
      %v5642 = vld [vmem:[#allocation6 + $0x7c] sm:$0xf]
      %v5643 = vld [vmem:[#allocation6 + $0x80] sm:$0xf]
      %v5644 = vld [vmem:[#allocation6 + $0x84] sm:$0xf]
      %v5645 = vld [vmem:[#allocation6 + $0x88] sm:$0xf]
      %v5646 = vld [vmem:[#allocation6 + $0x8c] sm:$0xf]
      %v5647 = vld [vmem:[#allocation6 + $0x90] sm:$0xf]
      %v5648 = vld [vmem:[#allocation6 + $0x94] sm:$0xf]
      %v5649 = vld [vmem:[#allocation6 + $0x98] sm:$0xf]
      %v5650 = vld [vmem:[#allocation6 + $0x9c] sm:$0xf]
      %v5651 = vld [vmem:[#allocation6 + $0xa0] sm:$0xf]
      %v5652 = vld [vmem:[#allocation6 + $0xa4] sm:$0xf]
      %v5653 = vld [vmem:[#allocation6 + $0xa8] sm:$0xf]
      %v5654 = vld [vmem:[#allocation6 + $0xac] sm:$0xf]
      %v5655 = vld [vmem:[#allocation6 + $0xb0] sm:$0xf]
      %v5656 = vld [vmem:[#allocation6 + $0xb4] sm:$0xf]
      %v5657 = vld [vmem:[#allocation6 + $0xb8] sm:$0xf]
      %v5658 = vld [vmem:[#allocation6 + $0xbc] sm:$0xf]
      %v5659 = vld [vmem:[#allocation6 + $0xc0] sm:$0xf]
      %v5660 = vld [vmem:[#allocation6 + $0xc4] sm:$0xf]
      %v5661 = vld [vmem:[%s6] sm:$0xff]
      %v5662 = vld [vmem:[%s6 + $0x8] sm:$0xff]
      %5664 = vset.pattern.permute.xlu0 0
      %5665 = vperm.xlu0 %5664, %v5661
      %v5666 = vpop.permute.xlu0 %5665
      %5669 = vset.pattern.permute.xlu0 0
      %5670 = vperm.xlu0 %5669, %v5662
      %v5671 = vpop.permute.xlu0 %5670
      %v5677 = vunpack.c.l.b16 %v5607
      %v5678 = vunpack.c.h.b16 %v5607
      %v5679 = vunpack.c.l.b16 %v5608
      %v5680 = vunpack.c.h.b16 %v5608
      %v5681 = vunpack.c.l.b16 %v5609
      %v5682 = vunpack.c.h.b16 %v5609
      %v5683 = vunpack.c.l.b16 %v5610
      %v5684 = vunpack.c.h.b16 %v5610
      %v5685 = vpack.c.b16 %v5681, %v5677
      %v5686 = vpack.c.b16 %v5682, %v5678
      %v5687 = vpack.c.b16 %v5683, %v5679
      %v5688 = vpack.c.b16 %v5684, %v5680
      %v5742 = vunpack.c.l.b16 %v5611
      %v5743 = vunpack.c.l.b16 %v5612
      %v5744 = vunpack.c.l.b16 %v5613
      %v5745 = vunpack.c.l.b16 %v5614
      %v5746 = vunpack.c.l.b16 %v5615
      %v5747 = vunpack.c.l.b16 %v5616
      %v5748 = vunpack.c.l.b16 %v5617
      %v5749 = vunpack.c.l.b16 %v5618
      %v5750 = vunpack.c.l.b16 %v5619
      %v5751 = vunpack.c.l.b16 %v5620
      %v5752 = vunpack.c.l.b16 %v5621
      %v5753 = vunpack.c.l.b16 %v5622
      %v5754 = vunpack.c.l.b16 %v5623
      %v5755 = vunpack.c.l.b16 %v5624
      %v5756 = vunpack.c.l.b16 %v5625
      %v5757 = vunpack.c.l.b16 %v5626
      %v5758 = vunpack.c.l.b16 %v5627
      %v5759 = vunpack.c.l.b16 %v5628
      %v5760 = vunpack.c.l.b16 %v5629
      %v5761 = vunpack.c.l.b16 %v5630
      %v5762 = vunpack.c.l.b16 %v5631
      %v5763 = vunpack.c.l.b16 %v5632
      %v5764 = vunpack.c.l.b16 %v5633
      %v5765 = vunpack.c.l.b16 %v5634
      %v5766 = vunpack.c.l.b16 %v5635
      %v5767 = vunpack.c.l.b16 %v5636
      %v5768 = vunpack.c.l.b16 %v5637
      %v5769 = vunpack.c.l.b16 %v5638
      %v5770 = vunpack.c.l.b16 %v5639
      %v5771 = vunpack.c.l.b16 %v5640
      %v5772 = vunpack.c.l.b16 %v5641
      %v5773 = vunpack.c.l.b16 %v5642
      %v5774 = vunpack.c.l.b16 %v5643
      %v5775 = vunpack.c.l.b16 %v5644
      %v5776 = vunpack.c.l.b16 %v5645
      %v5777 = vunpack.c.l.b16 %v5646
      %v5778 = vunpack.c.l.b16 %v5647
      %v5779 = vunpack.c.l.b16 %v5648
      %v5780 = vunpack.c.l.b16 %v5649
      %v5781 = vunpack.c.l.b16 %v5650
      %v5782 = vunpack.c.l.b16 %v5651
      %v5783 = vunpack.c.l.b16 %v5652
      %v5784 = vunpack.c.l.b16 %v5653
      %v5785 = vunpack.c.l.b16 %v5654
      %v5786 = vunpack.c.l.b16 %v5655
      %v5787 = vunpack.c.l.b16 %v5656
      %v5788 = vunpack.c.l.b16 %v5657
      %v5789 = vunpack.c.l.b16 %v5658
      %v5790 = vunpack.c.l.b16 %v5659
      %v5791 = vunpack.c.l.b16 %v5660
      %v5792 = vpack.c.b16 %v5743, %v5742
      %v5793 = vpack.c.b16 %v5745, %v5744
      %v5794 = vpack.c.b16 %v5747, %v5746
      %v5795 = vpack.c.b16 %v5749, %v5748
      %v5796 = vpack.c.b16 %v5751, %v5750
      %v5797 = vpack.c.b16 %v5753, %v5752
      %v5798 = vpack.c.b16 %v5755, %v5754
      %v5799 = vpack.c.b16 %v5757, %v5756
      %v5800 = vpack.c.b16 %v5759, %v5758
      %v5801 = vpack.c.b16 %v5761, %v5760
      %v5802 = vpack.c.b16 %v5763, %v5762
      %v5803 = vpack.c.b16 %v5765, %v5764
      %v5804 = vpack.c.b16 %v5767, %v5766
      %v5805 = vpack.c.b16 %v5769, %v5768
      %v5806 = vpack.c.b16 %v5771, %v5770
      %v5807 = vpack.c.b16 %v5773, %v5772
      %v5808 = vpack.c.b16 %v5775, %v5774
      %v5809 = vpack.c.b16 %v5777, %v5776
      %v5810 = vpack.c.b16 %v5779, %v5778
      %v5811 = vpack.c.b16 %v5781, %v5780
      %v5812 = vpack.c.b16 %v5783, %v5782
      %v5813 = vpack.c.b16 %v5785, %v5784
      %v5814 = vpack.c.b16 %v5787, %v5786
      %v5815 = vpack.c.b16 %v5789, %v5788
      %v5816 = vpack.c.b16 %v5791, %v5790
      %vm5842 = vcmask 130048
      %v5844 = vsel %vm5842, %v5688, 0
      %5846 = vmatpush.bf16.msra.mxu0 %v5799
      %5847 = vmatpush.bf16.msra.mxu0 %v5798
      %5848 = vmatpush.bf16.msra.mxu0 %v5797
      %5849 = vmatpush.bf16.msra.mxu0 %v5796
      %5850 = vmatpush.bf16.msra.mxu0 %v5795
      %5851 = vmatpush.bf16.msra.mxu0 %v5794
      %5852 = vmatpush.bf16.msra.mxu0 %v5793
      %5853 = vmatpush.bf16.msra.mxu0 %v5792
      %5854 = vmatmul.bf16.gmra.mxu0 %v5685
      %v5855 = vpop.f32.mrf.mxu0
      %v5856 = vadd.f32 %v5666, %v5855
      %v5857 = vpop.f32.mrf.mxu0
      %v5858 = vadd.f32 %v5671, %v5857
      %5859 = vdwg.mxu0
      %5860 = vmatpush.bf16.msra.mxu0 %v5807
      %5861 = vmatpush.bf16.msra.mxu0 %v5806
      %5862 = vmatpush.bf16.msra.mxu0 %v5805
      %5863 = vmatpush.bf16.msra.mxu0 %v5804
      %5864 = vmatpush.bf16.msra.mxu0 %v5803
      %5865 = vmatpush.bf16.msra.mxu0 %v5802
      %5866 = vmatpush.bf16.msra.mxu0 %v5801
      %5867 = vmatpush.bf16.msra.mxu0 %v5800
      %5868 = vmatmul.bf16.gmra.mxu0 %v5686
      %v5869 = vpop.f32.mrf.mxu0
      %v5870 = vadd.f32 %v5856, %v5869
      %v5871 = vpop.f32.mrf.mxu0
      %v5872 = vadd.f32 %v5858, %v5871
      %5873 = vdwg.mxu0
      %5874 = vmatpush.bf16.msra.mxu0 %v5815
      %5875 = vmatpush.bf16.msra.mxu0 %v5814
      %5876 = vmatpush.bf16.msra.mxu0 %v5813
      %5877 = vmatpush.bf16.msra.mxu0 %v5812
      %5878 = vmatpush.bf16.msra.mxu0 %v5811
      %5879 = vmatpush.bf16.msra.mxu0 %v5810
      %5880 = vmatpush.bf16.msra.mxu0 %v5809
      %5881 = vmatpush.bf16.msra.mxu0 %v5808
      %5882 = vmatmul.bf16.gmra.mxu0 %v5687
      %v5883 = vpop.f32.mrf.mxu0
      %v5884 = vadd.f32 %v5870, %v5883
      %v5885 = vpop.f32.mrf.mxu0
      %v5886 = vadd.f32 %v5872, %v5885
      %5887 = vdwg.mxu0
      %5888 = vmatpush.bf16.msra.mxu0 0
      %5889 = vmatpush.bf16.msra.mxu0 0
      %5890 = vmatpush.bf16.msra.mxu0 0
      %5891 = vmatpush.bf16.msra.mxu0 0
      %5892 = vmatpush.bf16.msra.mxu0 0
      %5893 = vmatpush.bf16.msra.mxu0 0
      %5894 = vmatpush.bf16.msra.mxu0 0
      %5895 = vmatpush.bf16.msra.mxu0 %v5816
      %5896 = vmatmul.bf16.gmra.mxu0 %v5844
      %v5897 = vpop.f32.mrf.mxu0
      %v5898 = vadd.f32 %v5884, %v5897
      %v5899 = vpop.f32.mrf.mxu0
      %v5900 = vadd.f32 %v5886, %v5899
      %5901 = vdwg.mxu0
      %v5902 = vxor.u32 %v5898, 2147483648
      %v5903 = vxor.u32 %v5900, 2147483648
      %v5904 = vmul.f32 %v5902, 1.442695
      %v5905 = vpow.pop %v5904
      %v5906 = vmul.f32 %v5903, 1.442695
      %v5907 = vpow.pop %v5906
      %v5908 = vadd.f32 %v5905, 1.0
      %v5909 = vadd.f32 %v5907, 1.0
      %v5910 = vrcp.pop %v5908
      %v5911 = vmul.f32 %v5908, %v5910
      %v5912 = vsub.f32 1.0, %v5911
      %v5913 = vmul.f32 %v5910, %v5912
      %v5914 = vadd.f32 %v5910, %v5913
      %vm5915 = vweird.f32 %v5908
      %vm5916 = vweird.f32 %v5910
      %vm5917 = vmor %vm5915, %vm5916
      %v5918 = vsel %vm5917, %v5910, %v5914
      %v5919 = vand.u32 2147483647, %v5908
      %vm5920 = vcmp.eq.f32.partialorder %v5919, 8.507059e+37
      %v5921 = vand.u32 %v5908, 2147483648
      %v5922 = vor.u32 1.1754944e-38, %v5921
      %v5923 = vsel %vm5920, %v5922, %v5918
      %v5924 = vmul.f32 1.0, %v5923
      %v5925 = vrcp.pop %v5909
      %v5926 = vmul.f32 %v5909, %v5925
      %v5927 = vsub.f32 1.0, %v5926
      %v5928 = vmul.f32 %v5925, %v5927
      %v5929 = vadd.f32 %v5925, %v5928
      %vm5930 = vweird.f32 %v5909
      %vm5931 = vweird.f32 %v5925
      %vm5932 = vmor %vm5930, %vm5931
      %v5933 = vsel %vm5932, %v5925, %v5929
      %v5934 = vand.u32 2147483647, %v5909
      %vm5935 = vcmp.eq.f32.partialorder %v5934, 8.507059e+37
      %v5936 = vand.u32 %v5909, 2147483648
      %v5937 = vor.u32 1.1754944e-38, %v5936
      %v5938 = vsel %vm5935, %v5937, %v5933
      %v5939 = vmul.f32 1.0, %v5938
      %5940 = vst.msk [vmem:[%s278] sm:$0xff] %vm3434, %v5924
      %5941 = vst.msk [vmem:[%s278 + $0x8] sm:$0xff] %vm3434, %v5939
      %p5942 = scmp.lt.s32.totalorder %s18, 1
      %s5943 = scalar_select %p5942, %s18, 1
      %s5944 = smul.addr %s5943, 2
      %s5945 = smul.addr %s5944, 8
      %s5946 = scalar_lea.vmem %s7, %s5945
      // Predicated region
      $region49: #{model_forward.1} parent=47 // pred_check
        %p5947 = pneg %p188
      $region50: #{model_forward.1} parent=47 // pred_check_branch
        %5949 = sbr.rel (%p5947) target = $region52
      $region51: #{model_forward.1} parent=47 // pred_region
        _
      $region52: #{model_forward.1} parent=47 // pred_fallthru
        _
    $region48: #{model_forward.1} parent=5 // pred_fallthru
      _
    %p5950 = scmp.le.s32.totalorder 2, %s13
    // Predicated region
    $region53: #{model_forward.1} parent=5 // pred_check
      %p5951 = pneg %p5950
    $region54: #{model_forward.1} parent=5 // pred_check_branch
      %5953 = sbr.rel (%p5951) target = $region56
    $region55: #{model_forward.1} parent=5 // pred_region
      %s5954 = ssub.s32 %s13, 2
      // Predicated region
      $region57: #{model_forward.1} parent=55 // pred_check
        %p5955 = pneg %p194
      $region58: #{model_forward.1} parent=55 // pred_check_branch
        %5957 = sbr.rel (%p5955) target = $region60
      $region59: #{model_forward.1} parent=55 // pred_region
        %p5958 = scmp.lt.s32.totalorder %s19, 1
        %s5959 = scalar_select %p5958, %s19, 1
        %s5960 = smul.addr %s5959, 2
        %s5961 = smul.addr %s5960, 8
        %s5962 = scalar_lea.vmem %s7, %s5961
      $region60: #{model_forward.1} parent=55 // pred_fallthru
        _
    $region56: #{model_forward.1} parent=5 // pred_fallthru
      _
  $region6: #{model_forward.1} parent=0 // loop_footer
    %s17 = sadd.s32 1, %s13
  $region7: #{model_forward.1} parent=0 // loop_footer_branch
    %12 = sbr.rel target = $region3
  $region8: #{model_forward.1} parent=0 // loop_exit
    _

</llo_original>
